<compile_context>
chip_gen: v6e
topology: v6e:2x2x1
jax: 0.10.0
libtpu: 0.0.40
codegen_flags: <defaults>
</compile_context>

<pallas_src>
import jax
import jax.numpy as jnp
import numpy as np
from jax.experimental import pallas as pl
from jax.experimental.pallas import tpu as pltpu

HIDDEN_DIM = 200          # cfg.hidden_dim
HIDDEN_PAD = 256          # padded to a lane-dense multiple of 128
IN_FEATURES = 80 * 80     # nn.Flatten over an 80x80 frame
NUM_OUTPUTS = 6           # Pong action space
HEAD_PAD = 128            # fused actor+critic head width (lane-dense)
VALUE_COL = NUM_OUTPUTS   # column 6 of the output slab holds the value
LOGP_COL = 8              # columns [8, 14) of the output slab hold log-probs


def _round_up(n, m):
    return ((n + m - 1) // m) * m


def _pick_batch_tile(B):
    if B <= 64:
        return _round_up(B, 16)      # one tile; bf16-sublane aligned
    if B <= 256:
        return 64                    # >=2 tiles -> both v7x TensorCores busy
    return 128


def _mlp_kernel(x_ref, w1_ref, b1_ref, wh_ref, bh_ref, out_ref):
    # (tb, 6400) bf16 @ (6400, 256) bf16 -> f32 accumulate on the MXU.
    # W1 is VMEM-resident (constant block index across the grid).
    feat = jnp.dot(x_ref[...], w1_ref[...],
                   preferred_element_type=jnp.float32) + b1_ref[...]

    # Fused actor+critic head: cols [0:A) logits, col A value, rest 0-pad.
    head = jnp.dot(feat.astype(jnp.bfloat16), wh_ref[...],
                   preferred_element_type=jnp.float32) + bh_ref[...]

    logits = head[:, :NUM_OUTPUTS]
    # Categorical(logits=...) normalization in f32 (cheap VPU/EUP epilogue).
    m = jnp.max(logits, axis=-1, keepdims=True)
    lse = m + jnp.log(jnp.sum(jnp.exp(logits - m), axis=-1, keepdims=True))

    # Single lane-dense (tb, 128) output slab:
    #   cols [0:6) logits, col 6 value, cols [8:14) log_probs, rest ~0.
    out_ref[...] = head
    out_ref[:, LOGP_COL:LOGP_COL + NUM_OUTPUTS] = logits - lse


def prepare_params(params):
    """Pad hidden 200->256, W1/Wh in bf16, fuse actor/critic into one head."""
    w1, b1, wa, ba, wc, bc = params
    h = w1.shape[1]
    w1p = jnp.zeros((IN_FEATURES, HIDDEN_PAD), jnp.bfloat16)
    w1p = w1p.at[:, :h].set(w1.astype(jnp.bfloat16))
    b1p = jnp.zeros((1, HIDDEN_PAD), jnp.float32).at[:, :h].set(b1)
    wh = jnp.zeros((HIDDEN_PAD, HEAD_PAD), jnp.float32)
    wh = wh.at[:h, :NUM_OUTPUTS].set(wa)
    wh = wh.at[:h, VALUE_COL:VALUE_COL + 1].set(wc)
    wh = wh.astype(jnp.bfloat16)
    bh = jnp.zeros((1, HEAD_PAD), jnp.float32)
    bh = bh.at[:, :NUM_OUTPUTS].set(ba)
    bh = bh.at[:, VALUE_COL:VALUE_COL + 1].set(bc)
    return w1p, b1p, wh, bh


def mlp_model_forward(x, prepared_params):
    """x: (B, 80, 80) float32. Returns (logits, log_probs, value)."""
    w1p, b1p, wh, bh = prepared_params
    B = x.shape[0]
    A = NUM_OUTPUTS

    # torch.nn.Flatten (row-major), fed to the MXU as bf16.
    x_flat = x.reshape(B, -1).astype(jnp.bfloat16)

    tb = _pick_batch_tile(B)
    b_pad = _round_up(B, tb)
    if b_pad != B:
        x_flat = jnp.pad(x_flat, ((0, b_pad - B), (0, 0)))
    nb = b_pad // tb

    cost = pl.CostEstimate(
        flops=2 * b_pad * IN_FEATURES * HIDDEN_PAD
              + 2 * b_pad * HIDDEN_PAD * HEAD_PAD,
        transcendentals=b_pad * (A + 1),
        bytes_accessed=x_flat.size * 2            # activations, bf16
                       + w1p.size * 2             # W1 read once (resident)
                       + wh.size * 2              # fused head, bf16
                       + (b1p.size + bh.size) * 4
                       + b_pad * HEAD_PAD * 4,    # lane-dense output slab
    )

    out = pl.pallas_call(
        _mlp_kernel,
        out_shape=jax.ShapeDtypeStruct((b_pad, HEAD_PAD), jnp.float32),
        grid_spec=pltpu.PrefetchScalarGridSpec(
            num_scalar_prefetch=0,
            grid=(nb,),                                   # batch tiles only
            in_specs=[
                pl.BlockSpec((tb, IN_FEATURES), lambda b: (b, 0)),          # x
                pl.BlockSpec((IN_FEATURES, HIDDEN_PAD), lambda b: (0, 0)),  # W1 (resident)
                pl.BlockSpec((1, HIDDEN_PAD), lambda b: (0, 0)),            # b1
                pl.BlockSpec((HIDDEN_PAD, HEAD_PAD), lambda b: (0, 0)),     # Wh
                pl.BlockSpec((1, HEAD_PAD), lambda b: (0, 0)),              # bh
            ],
            out_specs=pl.BlockSpec((tb, HEAD_PAD), lambda b: (b, 0)),
        ),
        compiler_params=pltpu.CompilerParams(
            dimension_semantics=("parallel",),
            vmem_limit_bytes=32 * 1024 * 1024),
        cost_estimate=cost,
    )(x_flat, w1p, b1p, wh, bh)

    logits = out[:B, :A]
    log_probs = out[:B, LOGP_COL:LOGP_COL + A]
    value = out[:B, VALUE_COL:VALUE_COL + 1]
    return logits, log_probs, value


def init_params(key, in_features=IN_FEATURES, hidden=HIDDEN_DIM,
                num_outputs=NUM_OUTPUTS):
    """Deterministic init mimicking torch.nn.Linear default U[-1/sqrt(fan_in), ...]."""
    k1, k2, k3, k4, k5, k6 = jax.random.split(key, 6)

    def lin(kw, kb, fan_in, fan_out):
        bound = 1.0 / jnp.sqrt(fan_in)
        w = jax.random.uniform(kw, (fan_in, fan_out), jnp.float32, -bound, bound)
        b = jax.random.uniform(kb, (1, fan_out), jnp.float32, -bound, bound)
        return w, b

    w1, b1 = lin(k1, k2, in_features, hidden)       # feature.linear
    wa, ba = lin(k3, k4, hidden, num_outputs)       # actor
    wc, bc = lin(k5, k6, hidden, 1)                 # critic
    return (w1, b1, wa, ba, wc, bc)


if __name__ == "__main__":
    key = jax.random.PRNGKey(0)
    kx, kp = jax.random.split(key)

    B = 2
    x = jax.random.normal(kx, (B, 80, 80), dtype=jnp.float32)
    params = init_params(kp)
    prepared = prepare_params(params)

    logits, log_probs, value = jax.block_until_ready(
        mlp_model_forward(x, prepared))

    # --- numpy float64 references ---
    w1, b1, wa, ba, wc, bc = [np.asarray(p, dtype=np.float64) for p in params]
    xf = np.asarray(x, dtype=np.float64).reshape(B, -1)

    def bf16(a):
        return np.asarray(jnp.asarray(a, jnp.float32).astype(jnp.bfloat16)
                          .astype(jnp.float32), np.float64)

    def normalize(lg):
        m = lg.max(axis=-1, keepdims=True)
        lse = m + np.log(np.exp(lg - m).sum(axis=-1, keepdims=True))
        return lg - lse

    # 1) tight check vs a reference applying the same bf16 roundings
    feat_m = bf16(xf) @ bf16(w1) + b1
    feat_m = bf16(feat_m)
    lg_m = feat_m @ bf16(wa) + ba
    vl_m = feat_m @ bf16(wc) + bc
    lp_m = normalize(lg_m)
    assert np.allclose(logits, lg_m, atol=5e-3, rtol=5e-3)
    assert np.allclose(log_probs, lp_m, atol=5e-3, rtol=5e-3)
    assert np.allclose(value, vl_m, atol=5e-3, rtol=5e-3)

    # 2) looser check vs the exact f32 module semantics (bf16 feed error)
    feat_f = xf @ w1 + b1
    lg_f = feat_f @ wa + ba
    vl_f = feat_f @ wc + bc
    lp_f = normalize(lg_f)
    assert np.allclose(logits, lg_f, atol=3e-2, rtol=3e-2)
    assert np.allclose(log_probs, lp_f, atol=3e-2, rtol=3e-2)
    assert np.allclose(value, vl_f, atol=3e-2, rtol=3e-2)

    print("KERNEL_OK")
</pallas_src>

<mosaic_0001>
module attributes {stable_mosaic.version = 11 : i64} {
  func.func @_mlp_kernel(%arg0: i32, %arg1: memref<16x6400xbf16, #tpu.memory_space<vmem>>, %arg2: memref<6400x256xbf16, #tpu.memory_space<vmem>>, %arg3: memref<1x256xf32, #tpu.memory_space<vmem>>, %arg4: memref<256x128xbf16, #tpu.memory_space<vmem>>, %arg5: memref<1x128xf32, #tpu.memory_space<vmem>>, %arg6: memref<16x128xf32, #tpu.memory_space<vmem>>) attributes {dimension_semantics = [#tpu.dimension_semantics<parallel>], iteration_bounds = array<i64: 1>, scalar_prefetch = 0 : i64, scratch_operands = 0 : i64, tpu.core_type = #tpu.core_type<tc>, window_params = [{transform_indices = @transform_0, window_bounds = array<i64: 16, 6400>}, {pipeline_mode = #tpu.pipeline_mode<synchronous>, transform_indices = @transform_1, window_bounds = array<i64: 6400, 256>}, {pipeline_mode = #tpu.pipeline_mode<synchronous>, transform_indices = @transform_2, window_bounds = array<i64: 1, 256>}, {pipeline_mode = #tpu.pipeline_mode<synchronous>, transform_indices = @transform_3, window_bounds = array<i64: 256, 128>}, {pipeline_mode = #tpu.pipeline_mode<synchronous>, transform_indices = @transform_4, window_bounds = array<i64: 1, 128>}, {transform_indices = @transform_5, window_bounds = array<i64: 16, 128>}]} {
    %c0 = arith.constant 0 : index
    %c0_0 = arith.constant 0 : index
    %0 = vector.load %arg1[%c0, %c0_0] : memref<16x6400xbf16, #tpu.memory_space<vmem>>, vector<16x6400xbf16>
    %c0_1 = arith.constant 0 : index
    %c0_2 = arith.constant 0 : index
    %1 = vector.load %arg2[%c0_1, %c0_2] : memref<6400x256xbf16, #tpu.memory_space<vmem>>, vector<6400x256xbf16>
    %cst = arith.constant dense<0.000000e+00> : vector<16x256xf32>
    %2 = tpu.matmul %0, %1, %cst {dimension_numbers = #tpu.dot_dimension_numbers<[1], [0], [0], [1], [0, 0, 1, 1], [], []>} : vector<16x6400xbf16>, vector<6400x256xbf16>, vector<16x256xf32> -> vector<16x256xf32>
    %c0_3 = arith.constant 0 : index
    %c0_4 = arith.constant 0 : index
    %3 = vector.load %arg3[%c0_3, %c0_4] : memref<1x256xf32, #tpu.memory_space<vmem>>, vector<1x256xf32>
    %4 = vector.broadcast %3 : vector<1x256xf32> to vector<16x256xf32>
    %5 = arith.addf %2, %4 : vector<16x256xf32>
    %6 = arith.truncf %5 : vector<16x256xf32> to vector<16x256xbf16>
    %c0_5 = arith.constant 0 : index
    %c0_6 = arith.constant 0 : index
    %7 = vector.load %arg4[%c0_5, %c0_6] : memref<256x128xbf16, #tpu.memory_space<vmem>>, vector<256x128xbf16>
    %cst_7 = arith.constant dense<0.000000e+00> : vector<16x128xf32>
    %8 = tpu.matmul %6, %7, %cst_7 {dimension_numbers = #tpu.dot_dimension_numbers<[1], [0], [0], [1], [0, 0, 1, 1], [], []>} : vector<16x256xbf16>, vector<256x128xbf16>, vector<16x128xf32> -> vector<16x128xf32>
    %c0_8 = arith.constant 0 : index
    %c0_9 = arith.constant 0 : index
    %9 = vector.load %arg5[%c0_8, %c0_9] : memref<1x128xf32, #tpu.memory_space<vmem>>, vector<1x128xf32>
    %10 = vector.broadcast %9 : vector<1x128xf32> to vector<16x128xf32>
    %11 = arith.addf %8, %10 : vector<16x128xf32>
    %12 = vector.extract_strided_slice %11 {offsets = [0, 0], sizes = [16, 6], strides = [1, 1]} : vector<16x128xf32> to vector<16x6xf32>
    %cst_10 = arith.constant dense<0xFF800000> : vector<16xf32>
    %13 = vector.multi_reduction <maximumf>, %12, %cst_10 [1] : vector<16x6xf32> to vector<16xf32>
    %14 = vector.shape_cast %13 : vector<16xf32> to vector<16x1xf32>
    %15 = vector.broadcast %14 : vector<16x1xf32> to vector<16x6xf32>
    %16 = arith.subf %12, %15 : vector<16x6xf32>
    %17 = math.exp %16 : vector<16x6xf32>
    %cst_11 = arith.constant dense<0.000000e+00> : vector<16xf32>
    %18 = vector.multi_reduction <add>, %17, %cst_11 [1] : vector<16x6xf32> to vector<16xf32>
    %19 = vector.shape_cast %18 : vector<16xf32> to vector<16x1xf32>
    %20 = math.log %19 : vector<16x1xf32>
    %21 = arith.addf %14, %20 : vector<16x1xf32>
    %c0_12 = arith.constant 0 : index
    %c0_13 = arith.constant 0 : index
    %22 = vector.load %arg6[%c0_12, %c0_13] : memref<16x128xf32, #tpu.memory_space<vmem>>, vector<16x128xf32>
    tpu.vector_store %arg6[%c0_12, %c0_13], %11 {strides = array<i32>} : memref<16x128xf32, #tpu.memory_space<vmem>>, vector<16x128xf32>,
    %23 = vector.broadcast %21 : vector<16x1xf32> to vector<16x6xf32>
    %24 = arith.subf %12, %23 : vector<16x6xf32>
    %c0_14 = arith.constant 0 : index
    %c8 = arith.constant 8 : index
    %25 = vector.load %arg6[%c0_14, %c8] : memref<16x128xf32, #tpu.memory_space<vmem>>, vector<16x6xf32>
    tpu.vector_store %arg6[%c0_14, %c8], %24 {strides = array<i32>} : memref<16x128xf32, #tpu.memory_space<vmem>>, vector<16x6xf32>,
    return
  }
  func.func @transform_0(%arg0: i32) -> (i32, i32) {
    %c0_i32 = arith.constant 0 : i32
    %c0_i32_0 = arith.constant 0 : i32
    return %arg0, %c0_i32 : i32, i32
  }
  func.func @transform_1(%arg0: i32) -> (i32, i32) {
    %c0_i32 = arith.constant 0 : i32
    %c0_i32_0 = arith.constant 0 : i32
    %c0_i32_1 = arith.constant 0 : i32
    return %c0_i32, %c0_i32_0 : i32, i32
  }
  func.func @transform_2(%arg0: i32) -> (i32, i32) {
    %c0_i32 = arith.constant 0 : i32
    %c0_i32_0 = arith.constant 0 : i32
    %c0_i32_1 = arith.constant 0 : i32
    return %c0_i32, %c0_i32_0 : i32, i32
  }
  func.func @transform_3(%arg0: i32) -> (i32, i32) {
    %c0_i32 = arith.constant 0 : i32
    %c0_i32_0 = arith.constant 0 : i32
    %c0_i32_1 = arith.constant 0 : i32
    return %c0_i32, %c0_i32_0 : i32, i32
  }
  func.func @transform_4(%arg0: i32) -> (i32, i32) {
    %c0_i32 = arith.constant 0 : i32
    %c0_i32_0 = arith.constant 0 : i32
    %c0_i32_1 = arith.constant 0 : i32
    return %c0_i32, %c0_i32_0 : i32, i32
  }
  func.func @transform_5(%arg0: i32) -> (i32, i32) {
    %c0_i32 = arith.constant 0 : i32
    %c0_i32_0 = arith.constant 0 : i32
    return %arg0, %c0_i32 : i32, i32
  }
}

</mosaic_0001>

<llo_original>
// kernel: tpu_custom_call.1
$region0: #{tpu_custom_call.1}
  #allocation0 [shape = 'u32[]', space=smem, size = 0x4, offset = 0x4, fixed_abs, tag = 'smem constant byte address 0x4 - core index']
  #allocation1 [shape = 'u32[144,128]{1,0:T(1,128)}', space=vmem, size = 0x12000, scoped, tag = 'internal scratch']
  %s0 = inlined_call_operand.hbm [shape: bf16[16,6400], index: 0, kind: input, shape index: {}]
  %s1 = inlined_call_operand.hbm [shape: bf16[6400,256], index: 1, kind: input, shape index: {}]
  %s2 = inlined_call_operand.hbm [shape: f32[1,256], index: 2, kind: input, shape index: {}]
  %s3 = inlined_call_operand.hbm [shape: bf16[256,128], index: 3, kind: input, shape index: {}]
  %s4 = inlined_call_operand.hbm [shape: f32[1,128], index: 4, kind: input, shape index: {}]
  %s5 = inlined_call_operand.hbm [shape: f32[16,128], index: 5, kind: output, shape index: {}]
  %s6 = sld [smem:[#allocation0]]
  $region50: #{tpu_custom_call.1} parent=0
    _
  %s8 = ssub.s32 1, %s6
  %s9 = scalar_select 0, %s8, %s6
  $region1: #{tpu_custom_call.1} parent=0
    #allocation2 [shape = 'u8[204800]{0}', space=vmem, size = 0x32000, scoped, tag = 'input window, operand 0, single buffered']
    #allocation3 [shape = 's32[1]{0}', space=sflag, size = 0x4, scoped, tag = 'scoped memory for tpu_custom_call.1']
    #allocation4 [shape = 's32[1]{0}', space=sflag, size = 0x4, scoped, tag = 'scoped memory for tpu_custom_call.1']
    #allocation5 [shape = 'u8[3276800]{0}', space=vmem, size = 0x320000, scoped, tag = 'input window, operand 1, single buffered']
    #allocation6 [shape = 's32[1]{0}', space=sflag, size = 0x4, scoped, tag = 'scoped memory for tpu_custom_call.1']
    #allocation7 [shape = 'u8[1024]{0}', space=vmem, size = 0x400, scoped, tag = 'input window, operand 2, single buffered']
    #allocation8 [shape = 'u8[65536]{0}', space=vmem, size = 0x10000, scoped, tag = 'input window, operand 3, single buffered']
    #allocation9 [shape = 's32[1]{0}', space=sflag, size = 0x4, scoped, tag = 'scoped memory for tpu_custom_call.1']
    #allocation10 [shape = 'u8[512]{0}', space=vmem, size = 0x400, scoped, tag = 'input window, operand 4, single buffered']
    #allocation11 [shape = 'u8[8192]{0}', space=vmem, size = 0x2000, scoped, tag = 'output window, operand 0, single buffered']
    %10 = vsyncpa [#allocation3], 0
    %11 = vsyncpa [#allocation6], 0
    %12 = vsyncpa [#allocation9], 0
    %13 = vsyncpa [#allocation4], 0
    // Predicated region
    $region2: #{tpu_custom_call.1} parent=1 // pred_check
      _
    $region3: #{tpu_custom_call.1} parent=1 // pred_check_branch
      %15 = sbr.rel (0) target = $region5
    $region4: #{tpu_custom_call.1} parent=1 // pred_region
      %s17 = ssub.s32 6400, 6400
      %18 = vsyncadd [#allocation3], %s17
      %s19 = sshll.u32 [#allocation2], 4
      %s20 = int_to_ptr.vmem [resolvable:$true] %s19
      %25 = dma.hbm_to_vmem [thread:$0]  %s0, 6400, %s20, [#allocation3], 3200, 3200, 200
    $region5: #{tpu_custom_call.1} parent=1 // pred_fallthru
      _
    // Predicated region
    $region6: #{tpu_custom_call.1} parent=1 // pred_check
      _
    $region7: #{tpu_custom_call.1} parent=1 // pred_check_branch
      %27 = sbr.rel (0) target = $region9
    $region8: #{tpu_custom_call.1} parent=1 // pred_region
      %s29 = ssub.s32 102400, 102400
      %30 = vsyncadd [#allocation6], %s29
      %s31 = sshll.u32 [#allocation5], 4
      %s32 = int_to_ptr.vmem [resolvable:$true] %s31
      %37 = dma.hbm_to_vmem [thread:$0]  %s1, 102400, %s32, [#allocation6], 128, 128, 8
    $region9: #{tpu_custom_call.1} parent=1 // pred_fallthru
      _
    // Predicated region
    $region10: #{tpu_custom_call.1} parent=1 // pred_check
      _
    $region11: #{tpu_custom_call.1} parent=1 // pred_check_branch
      %39 = sbr.rel (0) target = $region13
    $region12: #{tpu_custom_call.1} parent=1 // pred_region
      %s41 = ssub.s32 32, 32
      %42 = vsyncadd [#allocation6], %s41
      %s44 = sshll.u32 [#allocation7], 4
      %s45 = int_to_ptr.vmem [resolvable:$true] %s44
      %47 = dma.hbm_to_vmem [thread:$0]  %s2, 32, %s45, [#allocation6]
    $region13: #{tpu_custom_call.1} parent=1 // pred_fallthru
      _
    // Predicated region
    $region14: #{tpu_custom_call.1} parent=1 // pred_check
      _
    $region15: #{tpu_custom_call.1} parent=1 // pred_check_branch
      %49 = sbr.rel (0) target = $region17
    $region16: #{tpu_custom_call.1} parent=1 // pred_region
      %s51 = ssub.s32 2048, 2048
      %52 = vsyncadd [#allocation9], %s51
      %s53 = sshll.u32 [#allocation8], 4
      %s54 = int_to_ptr.vmem [resolvable:$true] %s53
      %59 = dma.hbm_to_vmem [thread:$0]  %s3, 2048, %s54, [#allocation9], 64, 64, 4
    $region17: #{tpu_custom_call.1} parent=1 // pred_fallthru
      _
    // Predicated region
    $region18: #{tpu_custom_call.1} parent=1 // pred_check
      _
    $region19: #{tpu_custom_call.1} parent=1 // pred_check_branch
      %61 = sbr.rel (0) target = $region21
    $region20: #{tpu_custom_call.1} parent=1 // pred_region
      %s63 = ssub.s32 16, 16
      %64 = vsyncadd [#allocation9], %s63
      %s66 = sshll.u32 [#allocation10], 4
      %s67 = int_to_ptr.vmem [resolvable:$true] %s66
      %69 = dma.hbm_to_vmem [thread:$0]  %s4, 16, %s67, [#allocation9]
    $region21: #{tpu_custom_call.1} parent=1 // pred_fallthru
      _
    // Predicated region
    $region22: #{tpu_custom_call.1} parent=1 // pred_check
      _
    $region23: #{tpu_custom_call.1} parent=1 // pred_check_branch
      %71 = sbr.rel (0) target = $region25
    $region24: #{tpu_custom_call.1} parent=1 // pred_region
      %72 = dma.done [#allocation3], 6400
    $region25: #{tpu_custom_call.1} parent=1 // pred_fallthru
      _
    // Predicated region
    $region26: #{tpu_custom_call.1} parent=1 // pred_check
      _
    $region27: #{tpu_custom_call.1} parent=1 // pred_check_branch
      %74 = sbr.rel (0) target = $region29
    $region28: #{tpu_custom_call.1} parent=1 // pred_region
      %75 = dma.done [#allocation6], 102400
    $region29: #{tpu_custom_call.1} parent=1 // pred_fallthru
      _
    // Predicated region
    $region30: #{tpu_custom_call.1} parent=1 // pred_check
      _
    $region31: #{tpu_custom_call.1} parent=1 // pred_check_branch
      %77 = sbr.rel (0) target = $region33
    $region32: #{tpu_custom_call.1} parent=1 // pred_region
      %78 = dma.done [#allocation6], 32
    $region33: #{tpu_custom_call.1} parent=1 // pred_fallthru
      _
    // Predicated region
    $region34: #{tpu_custom_call.1} parent=1 // pred_check
      _
    $region35: #{tpu_custom_call.1} parent=1 // pred_check_branch
      %80 = sbr.rel (0) target = $region37
    $region36: #{tpu_custom_call.1} parent=1 // pred_region
      %81 = dma.done [#allocation9], 2048
    $region37: #{tpu_custom_call.1} parent=1 // pred_fallthru
      _
    // Predicated region
    $region38: #{tpu_custom_call.1} parent=1 // pred_check
      _
    $region39: #{tpu_custom_call.1} parent=1 // pred_check_branch
      %83 = sbr.rel (0) target = $region41
    $region40: #{tpu_custom_call.1} parent=1 // pred_region
      %84 = dma.done [#allocation9], 16
    $region41: #{tpu_custom_call.1} parent=1 // pred_fallthru
      _
    %v86 = vld [vmem:[#allocation2] sm:$0xff]
    %v87 = vld [vmem:[#allocation2 + $0x8] sm:$0xff]
    %v88 = vld [vmem:[#allocation2 + $0x10] sm:$0xff]
    %v89 = vld [vmem:[#allocation2 + $0x18] sm:$0xff]
    %v90 = vld [vmem:[#allocation2 + $0x20] sm:$0xff]
    %v91 = vld [vmem:[#allocation2 + $0x28] sm:$0xff]
    %v92 = vld [vmem:[#allocation2 + $0x30] sm:$0xff]
    %v93 = vld [vmem:[#allocation2 + $0x38] sm:$0xff]
    %v94 = vld [vmem:[#allocation2 + $0x40] sm:$0xff]
    %v95 = vld [vmem:[#allocation2 + $0x48] sm:$0xff]
    %v96 = vld [vmem:[#allocation2 + $0x50] sm:$0xff]
    %v97 = vld [vmem:[#allocation2 + $0x58] sm:$0xff]
    %v98 = vld [vmem:[#allocation2 + $0x60] sm:$0xff]
    %v99 = vld [vmem:[#allocation2 + $0x68] sm:$0xff]
    %v100 = vld [vmem:[#allocation2 + $0x70] sm:$0xff]
    %v101 = vld [vmem:[#allocation2 + $0x78] sm:$0xff]
    %v102 = vld [vmem:[#allocation2 + $0x80] sm:$0xff]
    %v103 = vld [vmem:[#allocation2 + $0x88] sm:$0xff]
    %v104 = vld [vmem:[#allocation2 + $0x90] sm:$0xff]
    %v105 = vld [vmem:[#allocation2 + $0x98] sm:$0xff]
    %v106 = vld [vmem:[#allocation2 + $0xa0] sm:$0xff]
    %v107 = vld [vmem:[#allocation2 + $0xa8] sm:$0xff]
    %v108 = vld [vmem:[#allocation2 + $0xb0] sm:$0xff]
    %v109 = vld [vmem:[#allocation2 + $0xb8] sm:$0xff]
    %v110 = vld [vmem:[#allocation2 + $0xc0] sm:$0xff]
    %v111 = vld [vmem:[#allocation2 + $0xc8] sm:$0xff]
    %v112 = vld [vmem:[#allocation2 + $0xd0] sm:$0xff]
    %v113 = vld [vmem:[#allocation2 + $0xd8] sm:$0xff]
    %v114 = vld [vmem:[#allocation2 + $0xe0] sm:$0xff]
    %v115 = vld [vmem:[#allocation2 + $0xe8] sm:$0xff]
    %v116 = vld [vmem:[#allocation2 + $0xf0] sm:$0xff]
    %v117 = vld [vmem:[#allocation2 + $0xf8] sm:$0xff]
    %v118 = vld [vmem:[#allocation2 + $0x100] sm:$0xff]
    %v119 = vld [vmem:[#allocation2 + $0x108] sm:$0xff]
    %v120 = vld [vmem:[#allocation2 + $0x110] sm:$0xff]
    %v121 = vld [vmem:[#allocation2 + $0x118] sm:$0xff]
    %v122 = vld [vmem:[#allocation2 + $0x120] sm:$0xff]
    %v123 = vld [vmem:[#allocation2 + $0x128] sm:$0xff]
    %v124 = vld [vmem:[#allocation2 + $0x130] sm:$0xff]
    %v125 = vld [vmem:[#allocation2 + $0x138] sm:$0xff]
    %v126 = vld [vmem:[#allocation2 + $0x140] sm:$0xff]
    %v127 = vld [vmem:[#allocation2 + $0x148] sm:$0xff]
    %v128 = vld [vmem:[#allocation2 + $0x150] sm:$0xff]
    %v129 = vld [vmem:[#allocation2 + $0x158] sm:$0xff]
    %v130 = vld [vmem:[#allocation2 + $0x160] sm:$0xff]
    %v131 = vld [vmem:[#allocation2 + $0x168] sm:$0xff]
    %v132 = vld [vmem:[#allocation2 + $0x170] sm:$0xff]
    %v133 = vld [vmem:[#allocation2 + $0x178] sm:$0xff]
    %v134 = vld [vmem:[#allocation2 + $0x180] sm:$0xff]
    %v135 = vld [vmem:[#allocation2 + $0x188] sm:$0xff]
    %v136 = vld [vmem:[#allocation5] sm:$0xff]
    %v137 = vld [vmem:[#allocation5 + $0x8] sm:$0xff]
    %v138 = vld [vmem:[#allocation5 + $0x10] sm:$0xff]
    %v139 = vld [vmem:[#allocation5 + $0x18] sm:$0xff]
    %v140 = vld [vmem:[#allocation5 + $0x20] sm:$0xff]
    %v141 = vld [vmem:[#allocation5 + $0x28] sm:$0xff]
    %v142 = vld [vmem:[#allocation5 + $0x30] sm:$0xff]
    %v143 = vld [vmem:[#allocation5 + $0x38] sm:$0xff]
    %v144 = vld [vmem:[#allocation5 + $0x40] sm:$0xff]
    %v145 = vld [vmem:[#allocation5 + $0x48] sm:$0xff]
    %v146 = vld [vmem:[#allocation5 + $0x50] sm:$0xff]
    %v147 = vld [vmem:[#allocation5 + $0x58] sm:$0xff]
    %v148 = vld [vmem:[#allocation5 + $0x60] sm:$0xff]
    %v149 = vld [vmem:[#allocation5 + $0x68] sm:$0xff]
    %v150 = vld [vmem:[#allocation5 + $0x70] sm:$0xff]
    %v151 = vld [vmem:[#allocation5 + $0x78] sm:$0xff]
    %v152 = vld [vmem:[#allocation5 + $0x80] sm:$0xff]
    %v153 = vld [vmem:[#allocation5 + $0x88] sm:$0xff]
    %v154 = vld [vmem:[#allocation5 + $0x90] sm:$0xff]
    %v155 = vld [vmem:[#allocation5 + $0x98] sm:$0xff]
    %v156 = vld [vmem:[#allocation5 + $0xa0] sm:$0xff]
    %v157 = vld [vmem:[#allocation5 + $0xa8] sm:$0xff]
    %v158 = vld [vmem:[#allocation5 + $0xb0] sm:$0xff]
    %v159 = vld [vmem:[#allocation5 + $0xb8] sm:$0xff]
    %v160 = vld [vmem:[#allocation5 + $0xc0] sm:$0xff]
    %v161 = vld [vmem:[#allocation5 + $0xc8] sm:$0xff]
    %v162 = vld [vmem:[#allocation5 + $0xd0] sm:$0xff]
    %v163 = vld [vmem:[#allocation5 + $0xd8] sm:$0xff]
    %v164 = vld [vmem:[#allocation5 + $0xe0] sm:$0xff]
    %v165 = vld [vmem:[#allocation5 + $0xe8] sm:$0xff]
    %v166 = vld [vmem:[#allocation5 + $0xf0] sm:$0xff]
    %v167 = vld [vmem:[#allocation5 + $0xf8] sm:$0xff]
    %v168 = vld [vmem:[#allocation5 + $0x100] sm:$0xff]
    %v169 = vld [vmem:[#allocation5 + $0x108] sm:$0xff]
    %v170 = vld [vmem:[#allocation5 + $0x110] sm:$0xff]
    %v171 = vld [vmem:[#allocation5 + $0x118] sm:$0xff]
    %v172 = vld [vmem:[#allocation5 + $0x120] sm:$0xff]
    %v173 = vld [vmem:[#allocation5 + $0x128] sm:$0xff]
    %v174 = vld [vmem:[#allocation5 + $0x130] sm:$0xff]
    %v175 = vld [vmem:[#allocation5 + $0x138] sm:$0xff]
    %v176 = vld [vmem:[#allocation5 + $0x140] sm:$0xff]
    %v177 = vld [vmem:[#allocation5 + $0x148] sm:$0xff]
    %v178 = vld [vmem:[#allocation5 + $0x150] sm:$0xff]
    %v179 = vld [vmem:[#allocation5 + $0x158] sm:$0xff]
    %v180 = vld [vmem:[#allocation5 + $0x160] sm:$0xff]
    %v181 = vld [vmem:[#allocation5 + $0x168] sm:$0xff]
    %v182 = vld [vmem:[#allocation5 + $0x170] sm:$0xff]
    %v183 = vld [vmem:[#allocation5 + $0x178] sm:$0xff]
    %v184 = vld [vmem:[#allocation5 + $0x180] sm:$0xff]
    %v185 = vld [vmem:[#allocation5 + $0x188] sm:$0xff]
    %v186 = vld [vmem:[#allocation5 + $0x190] sm:$0xff]
    %v187 = vld [vmem:[#allocation5 + $0x198] sm:$0xff]
    %v188 = vld [vmem:[#allocation5 + $0x1a0] sm:$0xff]
    %v189 = vld [vmem:[#allocation5 + $0x1a8] sm:$0xff]
    %v190 = vld [vmem:[#allocation5 + $0x1b0] sm:$0xff]
    %v191 = vld [vmem:[#allocation5 + $0x1b8] sm:$0xff]
    %v192 = vld [vmem:[#allocation5 + $0x1c0] sm:$0xff]
    %v193 = vld [vmem:[#allocation5 + $0x1c8] sm:$0xff]
    %v194 = vld [vmem:[#allocation5 + $0x1d0] sm:$0xff]
    %v195 = vld [vmem:[#allocation5 + $0x1d8] sm:$0xff]
    %v196 = vld [vmem:[#allocation5 + $0x1e0] sm:$0xff]
    %v197 = vld [vmem:[#allocation5 + $0x1e8] sm:$0xff]
    %v198 = vld [vmem:[#allocation5 + $0x1f0] sm:$0xff]
    %v199 = vld [vmem:[#allocation5 + $0x1f8] sm:$0xff]
    %v200 = vld [vmem:[#allocation5 + $0x200] sm:$0xff]
    %v201 = vld [vmem:[#allocation5 + $0x208] sm:$0xff]
    %v202 = vld [vmem:[#allocation5 + $0x210] sm:$0xff]
    %v203 = vld [vmem:[#allocation5 + $0x218] sm:$0xff]
    %v204 = vld [vmem:[#allocation5 + $0x220] sm:$0xff]
    %v205 = vld [vmem:[#allocation5 + $0x228] sm:$0xff]
    %v206 = vld [vmem:[#allocation5 + $0x230] sm:$0xff]
    %v207 = vld [vmem:[#allocation5 + $0x238] sm:$0xff]
    %v208 = vld [vmem:[#allocation5 + $0x240] sm:$0xff]
    %v209 = vld [vmem:[#allocation5 + $0x248] sm:$0xff]
    %v210 = vld [vmem:[#allocation5 + $0x250] sm:$0xff]
    %v211 = vld [vmem:[#allocation5 + $0x258] sm:$0xff]
    %v212 = vld [vmem:[#allocation5 + $0x260] sm:$0xff]
    %v213 = vld [vmem:[#allocation5 + $0x268] sm:$0xff]
    %v214 = vld [vmem:[#allocation5 + $0x270] sm:$0xff]
    %v215 = vld [vmem:[#allocation5 + $0x278] sm:$0xff]
    %v216 = vld [vmem:[#allocation5 + $0x280] sm:$0xff]
    %v217 = vld [vmem:[#allocation5 + $0x288] sm:$0xff]
    %v218 = vld [vmem:[#allocation5 + $0x290] sm:$0xff]
    %v219 = vld [vmem:[#allocation5 + $0x298] sm:$0xff]
    %v220 = vld [vmem:[#allocation5 + $0x2a0] sm:$0xff]
    %v221 = vld [vmem:[#allocation5 + $0x2a8] sm:$0xff]
    %v222 = vld [vmem:[#allocation5 + $0x2b0] sm:$0xff]
    %v223 = vld [vmem:[#allocation5 + $0x2b8] sm:$0xff]
    %v224 = vld [vmem:[#allocation5 + $0x2c0] sm:$0xff]
    %v225 = vld [vmem:[#allocation5 + $0x2c8] sm:$0xff]
    %v226 = vld [vmem:[#allocation5 + $0x2d0] sm:$0xff]
    %v227 = vld [vmem:[#allocation5 + $0x2d8] sm:$0xff]
    %v228 = vld [vmem:[#allocation5 + $0x2e0] sm:$0xff]
    %v229 = vld [vmem:[#allocation5 + $0x2e8] sm:$0xff]
    %v230 = vld [vmem:[#allocation5 + $0x2f0] sm:$0xff]
    %v231 = vld [vmem:[#allocation5 + $0x2f8] sm:$0xff]
    %v232 = vld [vmem:[#allocation5 + $0x300] sm:$0xff]
    %v233 = vld [vmem:[#allocation5 + $0x308] sm:$0xff]
    %v234 = vld [vmem:[#allocation5 + $0x310] sm:$0xff]
    %v235 = vld [vmem:[#allocation5 + $0x318] sm:$0xff]
    %v236 = vld [vmem:[#allocation5 + $0x320] sm:$0xff]
    %v237 = vld [vmem:[#allocation5 + $0x328] sm:$0xff]
    %v238 = vld [vmem:[#allocation5 + $0x330] sm:$0xff]
    %v239 = vld [vmem:[#allocation5 + $0x338] sm:$0xff]
    %v240 = vld [vmem:[#allocation5 + $0x340] sm:$0xff]
    %v241 = vld [vmem:[#allocation5 + $0x348] sm:$0xff]
    %v242 = vld [vmem:[#allocation5 + $0x350] sm:$0xff]
    %v243 = vld [vmem:[#allocation5 + $0x358] sm:$0xff]
    %v244 = vld [vmem:[#allocation5 + $0x360] sm:$0xff]
    %v245 = vld [vmem:[#allocation5 + $0x368] sm:$0xff]
    %v246 = vld [vmem:[#allocation5 + $0x370] sm:$0xff]
    %v247 = vld [vmem:[#allocation5 + $0x378] sm:$0xff]
    %v248 = vld [vmem:[#allocation5 + $0x380] sm:$0xff]
    %v249 = vld [vmem:[#allocation5 + $0x388] sm:$0xff]
    %v250 = vld [vmem:[#allocation5 + $0x390] sm:$0xff]
    %v251 = vld [vmem:[#allocation5 + $0x398] sm:$0xff]
    %v252 = vld [vmem:[#allocation5 + $0x3a0] sm:$0xff]
    %v253 = vld [vmem:[#allocation5 + $0x3a8] sm:$0xff]
    %v254 = vld [vmem:[#allocation5 + $0x3b0] sm:$0xff]
    %v255 = vld [vmem:[#allocation5 + $0x3b8] sm:$0xff]
    %v256 = vld [vmem:[#allocation5 + $0x3c0] sm:$0xff]
    %v257 = vld [vmem:[#allocation5 + $0x3c8] sm:$0xff]
    %v258 = vld [vmem:[#allocation5 + $0x3d0] sm:$0xff]
    %v259 = vld [vmem:[#allocation5 + $0x3d8] sm:$0xff]
    %v260 = vld [vmem:[#allocation5 + $0x3e0] sm:$0xff]
    %v261 = vld [vmem:[#allocation5 + $0x3e8] sm:$0xff]
    %v262 = vld [vmem:[#allocation5 + $0x3f0] sm:$0xff]
    %v263 = vld [vmem:[#allocation5 + $0x3f8] sm:$0xff]
    %v264 = vld [vmem:[#allocation5 + $0x400] sm:$0xff]
    %v265 = vld [vmem:[#allocation5 + $0x408] sm:$0xff]
    %v266 = vld [vmem:[#allocation5 + $0x410] sm:$0xff]
    %v267 = vld [vmem:[#allocation5 + $0x418] sm:$0xff]
    %v268 = vld [vmem:[#allocation5 + $0x420] sm:$0xff]
    %v269 = vld [vmem:[#allocation5 + $0x428] sm:$0xff]
    %v270 = vld [vmem:[#allocation5 + $0x430] sm:$0xff]
    %v271 = vld [vmem:[#allocation5 + $0x438] sm:$0xff]
    %v272 = vld [vmem:[#allocation5 + $0x440] sm:$0xff]
    %v273 = vld [vmem:[#allocation5 + $0x448] sm:$0xff]
    %v274 = vld [vmem:[#allocation5 + $0x450] sm:$0xff]
    %v275 = vld [vmem:[#allocation5 + $0x458] sm:$0xff]
    %v276 = vld [vmem:[#allocation5 + $0x460] sm:$0xff]
    %v277 = vld [vmem:[#allocation5 + $0x468] sm:$0xff]
    %v278 = vld [vmem:[#allocation5 + $0x470] sm:$0xff]
    %v279 = vld [vmem:[#allocation5 + $0x478] sm:$0xff]
    %v280 = vld [vmem:[#allocation5 + $0x480] sm:$0xff]
    %v281 = vld [vmem:[#allocation5 + $0x488] sm:$0xff]
    %v282 = vld [vmem:[#allocation5 + $0x490] sm:$0xff]
    %v283 = vld [vmem:[#allocation5 + $0x498] sm:$0xff]
    %v284 = vld [vmem:[#allocation5 + $0x4a0] sm:$0xff]
    %v285 = vld [vmem:[#allocation5 + $0x4a8] sm:$0xff]
    %v286 = vld [vmem:[#allocation5 + $0x4b0] sm:$0xff]
    %v287 = vld [vmem:[#allocation5 + $0x4b8] sm:$0xff]
    %v288 = vld [vmem:[#allocation5 + $0x4c0] sm:$0xff]
    %v289 = vld [vmem:[#allocation5 + $0x4c8] sm:$0xff]
    %v290 = vld [vmem:[#allocation5 + $0x4d0] sm:$0xff]
    %v291 = vld [vmem:[#allocation5 + $0x4d8] sm:$0xff]
    %v292 = vld [vmem:[#allocation5 + $0x4e0] sm:$0xff]
    %v293 = vld [vmem:[#allocation5 + $0x4e8] sm:$0xff]
    %v294 = vld [vmem:[#allocation5 + $0x4f0] sm:$0xff]
    %v295 = vld [vmem:[#allocation5 + $0x4f8] sm:$0xff]
    %v296 = vld [vmem:[#allocation5 + $0x500] sm:$0xff]
    %v297 = vld [vmem:[#allocation5 + $0x508] sm:$0xff]
    %v298 = vld [vmem:[#allocation5 + $0x510] sm:$0xff]
    %v299 = vld [vmem:[#allocation5 + $0x518] sm:$0xff]
    %v300 = vld [vmem:[#allocation5 + $0x520] sm:$0xff]
    %v301 = vld [vmem:[#allocation5 + $0x528] sm:$0xff]
    %v302 = vld [vmem:[#allocation5 + $0x530] sm:$0xff]
    %v303 = vld [vmem:[#allocation5 + $0x538] sm:$0xff]
    %v304 = vld [vmem:[#allocation5 + $0x540] sm:$0xff]
    %v305 = vld [vmem:[#allocation5 + $0x548] sm:$0xff]
    %v306 = vld [vmem:[#allocation5 + $0x550] sm:$0xff]
    %v307 = vld [vmem:[#allocation5 + $0x558] sm:$0xff]
    %v308 = vld [vmem:[#allocation5 + $0x560] sm:$0xff]
    %v309 = vld [vmem:[#allocation5 + $0x568] sm:$0xff]
    %v310 = vld [vmem:[#allocation5 + $0x570] sm:$0xff]
    %v311 = vld [vmem:[#allocation5 + $0x578] sm:$0xff]
    %v312 = vld [vmem:[#allocation5 + $0x580] sm:$0xff]
    %v313 = vld [vmem:[#allocation5 + $0x588] sm:$0xff]
    %v314 = vld [vmem:[#allocation5 + $0x590] sm:$0xff]
    %v315 = vld [vmem:[#allocation5 + $0x598] sm:$0xff]
    %v316 = vld [vmem:[#allocation5 + $0x5a0] sm:$0xff]
    %v317 = vld [vmem:[#allocation5 + $0x5a8] sm:$0xff]
    %v318 = vld [vmem:[#allocation5 + $0x5b0] sm:$0xff]
    %v319 = vld [vmem:[#allocation5 + $0x5b8] sm:$0xff]
    %v320 = vld [vmem:[#allocation5 + $0x5c0] sm:$0xff]
    %v321 = vld [vmem:[#allocation5 + $0x5c8] sm:$0xff]
    %v322 = vld [vmem:[#allocation5 + $0x5d0] sm:$0xff]
    %v323 = vld [vmem:[#allocation5 + $0x5d8] sm:$0xff]
    %v324 = vld [vmem:[#allocation5 + $0x5e0] sm:$0xff]
    %v325 = vld [vmem:[#allocation5 + $0x5e8] sm:$0xff]
    %v326 = vld [vmem:[#allocation5 + $0x5f0] sm:$0xff]
    %v327 = vld [vmem:[#allocation5 + $0x5f8] sm:$0xff]
    %v328 = vld [vmem:[#allocation5 + $0x600] sm:$0xff]
    %v329 = vld [vmem:[#allocation5 + $0x608] sm:$0xff]
    %v330 = vld [vmem:[#allocation5 + $0x610] sm:$0xff]
    %v331 = vld [vmem:[#allocation5 + $0x618] sm:$0xff]
    %v332 = vld [vmem:[#allocation5 + $0x620] sm:$0xff]
    %v333 = vld [vmem:[#allocation5 + $0x628] sm:$0xff]
    %v334 = vld [vmem:[#allocation5 + $0x630] sm:$0xff]
    %v335 = vld [vmem:[#allocation5 + $0x638] sm:$0xff]
    %v336 = vld [vmem:[#allocation5 + $0x640] sm:$0xff]
    %v337 = vld [vmem:[#allocation5 + $0x648] sm:$0xff]
    %v338 = vld [vmem:[#allocation5 + $0x650] sm:$0xff]
    %v339 = vld [vmem:[#allocation5 + $0x658] sm:$0xff]
    %v340 = vld [vmem:[#allocation5 + $0x660] sm:$0xff]
    %v341 = vld [vmem:[#allocation5 + $0x668] sm:$0xff]
    %v342 = vld [vmem:[#allocation5 + $0x670] sm:$0xff]
    %v343 = vld [vmem:[#allocation5 + $0x678] sm:$0xff]
    %v344 = vld [vmem:[#allocation5 + $0x680] sm:$0xff]
    %v345 = vld [vmem:[#allocation5 + $0x688] sm:$0xff]
    %v346 = vld [vmem:[#allocation5 + $0x690] sm:$0xff]
    %v347 = vld [vmem:[#allocation5 + $0x698] sm:$0xff]
    %v348 = vld [vmem:[#allocation5 + $0x6a0] sm:$0xff]
    %v349 = vld [vmem:[#allocation5 + $0x6a8] sm:$0xff]
    %v350 = vld [vmem:[#allocation5 + $0x6b0] sm:$0xff]
    %v351 = vld [vmem:[#allocation5 + $0x6b8] sm:$0xff]
    %v352 = vld [vmem:[#allocation5 + $0x6c0] sm:$0xff]
    %v353 = vld [vmem:[#allocation5 + $0x6c8] sm:$0xff]
    %v354 = vld [vmem:[#allocation5 + $0x6d0] sm:$0xff]
    %v355 = vld [vmem:[#allocation5 + $0x6d8] sm:$0xff]
    %v356 = vld [vmem:[#allocation5 + $0x6e0] sm:$0xff]
    %v357 = vld [vmem:[#allocation5 + $0x6e8] sm:$0xff]
    %v358 = vld [vmem:[#allocation5 + $0x6f0] sm:$0xff]
    %v359 = vld [vmem:[#allocation5 + $0x6f8] sm:$0xff]
    %v360 = vld [vmem:[#allocation5 + $0x700] sm:$0xff]
    %v361 = vld [vmem:[#allocation5 + $0x708] sm:$0xff]
    %v362 = vld [vmem:[#allocation5 + $0x710] sm:$0xff]
    %v363 = vld [vmem:[#allocation5 + $0x718] sm:$0xff]
    %v364 = vld [vmem:[#allocation5 + $0x720] sm:$0xff]
    %v365 = vld [vmem:[#allocation5 + $0x728] sm:$0xff]
    %v366 = vld [vmem:[#allocation5 + $0x730] sm:$0xff]
    %v367 = vld [vmem:[#allocation5 + $0x738] sm:$0xff]
    %v368 = vld [vmem:[#allocation5 + $0x740] sm:$0xff]
    %v369 = vld [vmem:[#allocation5 + $0x748] sm:$0xff]
    %v370 = vld [vmem:[#allocation5 + $0x750] sm:$0xff]
    %v371 = vld [vmem:[#allocation5 + $0x758] sm:$0xff]
    %v372 = vld [vmem:[#allocation5 + $0x760] sm:$0xff]
    %v373 = vld [vmem:[#allocation5 + $0x768] sm:$0xff]
    %v374 = vld [vmem:[#allocation5 + $0x770] sm:$0xff]
    %v375 = vld [vmem:[#allocation5 + $0x778] sm:$0xff]
    %v376 = vld [vmem:[#allocation5 + $0x780] sm:$0xff]
    %v377 = vld [vmem:[#allocation5 + $0x788] sm:$0xff]
    %v378 = vld [vmem:[#allocation5 + $0x790] sm:$0xff]
    %v379 = vld [vmem:[#allocation5 + $0x798] sm:$0xff]
    %v380 = vld [vmem:[#allocation5 + $0x7a0] sm:$0xff]
    %v381 = vld [vmem:[#allocation5 + $0x7a8] sm:$0xff]
    %v382 = vld [vmem:[#allocation5 + $0x7b0] sm:$0xff]
    %v383 = vld [vmem:[#allocation5 + $0x7b8] sm:$0xff]
    %v384 = vld [vmem:[#allocation5 + $0x7c0] sm:$0xff]
    %v385 = vld [vmem:[#allocation5 + $0x7c8] sm:$0xff]
    %v386 = vld [vmem:[#allocation5 + $0x7d0] sm:$0xff]
    %v387 = vld [vmem:[#allocation5 + $0x7d8] sm:$0xff]
    %v388 = vld [vmem:[#allocation5 + $0x7e0] sm:$0xff]
    %v389 = vld [vmem:[#allocation5 + $0x7e8] sm:$0xff]
    %v390 = vld [vmem:[#allocation5 + $0x7f0] sm:$0xff]
    %v391 = vld [vmem:[#allocation5 + $0x7f8] sm:$0xff]
    %v392 = vld [vmem:[#allocation5 + $0x800] sm:$0xff]
    %v393 = vld [vmem:[#allocation5 + $0x808] sm:$0xff]
    %v394 = vld [vmem:[#allocation5 + $0x810] sm:$0xff]
    %v395 = vld [vmem:[#allocation5 + $0x818] sm:$0xff]
    %v396 = vld [vmem:[#allocation5 + $0x820] sm:$0xff]
    %v397 = vld [vmem:[#allocation5 + $0x828] sm:$0xff]
    %v398 = vld [vmem:[#allocation5 + $0x830] sm:$0xff]
    %v399 = vld [vmem:[#allocation5 + $0x838] sm:$0xff]
    %v400 = vld [vmem:[#allocation5 + $0x840] sm:$0xff]
    %v401 = vld [vmem:[#allocation5 + $0x848] sm:$0xff]
    %v402 = vld [vmem:[#allocation5 + $0x850] sm:$0xff]
    %v403 = vld [vmem:[#allocation5 + $0x858] sm:$0xff]
    %v404 = vld [vmem:[#allocation5 + $0x860] sm:$0xff]
    %v405 = vld [vmem:[#allocation5 + $0x868] sm:$0xff]
    %v406 = vld [vmem:[#allocation5 + $0x870] sm:$0xff]
    %v407 = vld [vmem:[#allocation5 + $0x878] sm:$0xff]
    %v408 = vld [vmem:[#allocation5 + $0x880] sm:$0xff]
    %v409 = vld [vmem:[#allocation5 + $0x888] sm:$0xff]
    %v410 = vld [vmem:[#allocation5 + $0x890] sm:$0xff]
    %v411 = vld [vmem:[#allocation5 + $0x898] sm:$0xff]
    %v412 = vld [vmem:[#allocation5 + $0x8a0] sm:$0xff]
    %v413 = vld [vmem:[#allocation5 + $0x8a8] sm:$0xff]
    %v414 = vld [vmem:[#allocation5 + $0x8b0] sm:$0xff]
    %v415 = vld [vmem:[#allocation5 + $0x8b8] sm:$0xff]
    %v416 = vld [vmem:[#allocation5 + $0x8c0] sm:$0xff]
    %v417 = vld [vmem:[#allocation5 + $0x8c8] sm:$0xff]
    %v418 = vld [vmem:[#allocation5 + $0x8d0] sm:$0xff]
    %v419 = vld [vmem:[#allocation5 + $0x8d8] sm:$0xff]
    %v420 = vld [vmem:[#allocation5 + $0x8e0] sm:$0xff]
    %v421 = vld [vmem:[#allocation5 + $0x8e8] sm:$0xff]
    %v422 = vld [vmem:[#allocation5 + $0x8f0] sm:$0xff]
    %v423 = vld [vmem:[#allocation5 + $0x8f8] sm:$0xff]
    %v424 = vld [vmem:[#allocation5 + $0x900] sm:$0xff]
    %v425 = vld [vmem:[#allocation5 + $0x908] sm:$0xff]
    %v426 = vld [vmem:[#allocation5 + $0x910] sm:$0xff]
    %v427 = vld [vmem:[#allocation5 + $0x918] sm:$0xff]
    %v428 = vld [vmem:[#allocation5 + $0x920] sm:$0xff]
    %v429 = vld [vmem:[#allocation5 + $0x928] sm:$0xff]
    %v430 = vld [vmem:[#allocation5 + $0x930] sm:$0xff]
    %v431 = vld [vmem:[#allocation5 + $0x938] sm:$0xff]
    %v432 = vld [vmem:[#allocation5 + $0x940] sm:$0xff]
    %v433 = vld [vmem:[#allocation5 + $0x948] sm:$0xff]
    %v434 = vld [vmem:[#allocation5 + $0x950] sm:$0xff]
    %v435 = vld [vmem:[#allocation5 + $0x958] sm:$0xff]
    %v436 = vld [vmem:[#allocation5 + $0x960] sm:$0xff]
    %v437 = vld [vmem:[#allocation5 + $0x968] sm:$0xff]
    %v438 = vld [vmem:[#allocation5 + $0x970] sm:$0xff]
    %v439 = vld [vmem:[#allocation5 + $0x978] sm:$0xff]
    %v440 = vld [vmem:[#allocation5 + $0x980] sm:$0xff]
    %v441 = vld [vmem:[#allocation5 + $0x988] sm:$0xff]
    %v442 = vld [vmem:[#allocation5 + $0x990] sm:$0xff]
    %v443 = vld [vmem:[#allocation5 + $0x998] sm:$0xff]
    %v444 = vld [vmem:[#allocation5 + $0x9a0] sm:$0xff]
    %v445 = vld [vmem:[#allocation5 + $0x9a8] sm:$0xff]
    %v446 = vld [vmem:[#allocation5 + $0x9b0] sm:$0xff]
    %v447 = vld [vmem:[#allocation5 + $0x9b8] sm:$0xff]
    %v448 = vld [vmem:[#allocation5 + $0x9c0] sm:$0xff]
    %v449 = vld [vmem:[#allocation5 + $0x9c8] sm:$0xff]
    %v450 = vld [vmem:[#allocation5 + $0x9d0] sm:$0xff]
    %v451 = vld [vmem:[#allocation5 + $0x9d8] sm:$0xff]
    %v452 = vld [vmem:[#allocation5 + $0x9e0] sm:$0xff]
    %v453 = vld [vmem:[#allocation5 + $0x9e8] sm:$0xff]
    %v454 = vld [vmem:[#allocation5 + $0x9f0] sm:$0xff]
    %v455 = vld [vmem:[#allocation5 + $0x9f8] sm:$0xff]
    %v456 = vld [vmem:[#allocation5 + $0xa00] sm:$0xff]
    %v457 = vld [vmem:[#allocation5 + $0xa08] sm:$0xff]
    %v458 = vld [vmem:[#allocation5 + $0xa10] sm:$0xff]
    %v459 = vld [vmem:[#allocation5 + $0xa18] sm:$0xff]
    %v460 = vld [vmem:[#allocation5 + $0xa20] sm:$0xff]
    %v461 = vld [vmem:[#allocation5 + $0xa28] sm:$0xff]
    %v462 = vld [vmem:[#allocation5 + $0xa30] sm:$0xff]
    %v463 = vld [vmem:[#allocation5 + $0xa38] sm:$0xff]
    %v464 = vld [vmem:[#allocation5 + $0xa40] sm:$0xff]
    %v465 = vld [vmem:[#allocation5 + $0xa48] sm:$0xff]
    %v466 = vld [vmem:[#allocation5 + $0xa50] sm:$0xff]
    %v467 = vld [vmem:[#allocation5 + $0xa58] sm:$0xff]
    %v468 = vld [vmem:[#allocation5 + $0xa60] sm:$0xff]
    %v469 = vld [vmem:[#allocation5 + $0xa68] sm:$0xff]
    %v470 = vld [vmem:[#allocation5 + $0xa70] sm:$0xff]
    %v471 = vld [vmem:[#allocation5 + $0xa78] sm:$0xff]
    %v472 = vld [vmem:[#allocation5 + $0xa80] sm:$0xff]
    %v473 = vld [vmem:[#allocation5 + $0xa88] sm:$0xff]
    %v474 = vld [vmem:[#allocation5 + $0xa90] sm:$0xff]
    %v475 = vld [vmem:[#allocation5 + $0xa98] sm:$0xff]
    %v476 = vld [vmem:[#allocation5 + $0xaa0] sm:$0xff]
    %v477 = vld [vmem:[#allocation5 + $0xaa8] sm:$0xff]
    %v478 = vld [vmem:[#allocation5 + $0xab0] sm:$0xff]
    %v479 = vld [vmem:[#allocation5 + $0xab8] sm:$0xff]
    %v480 = vld [vmem:[#allocation5 + $0xac0] sm:$0xff]
    %v481 = vld [vmem:[#allocation5 + $0xac8] sm:$0xff]
    %v482 = vld [vmem:[#allocation5 + $0xad0] sm:$0xff]
    %v483 = vld [vmem:[#allocation5 + $0xad8] sm:$0xff]
    %v484 = vld [vmem:[#allocation5 + $0xae0] sm:$0xff]
    %v485 = vld [vmem:[#allocation5 + $0xae8] sm:$0xff]
    %v486 = vld [vmem:[#allocation5 + $0xaf0] sm:$0xff]
    %v487 = vld [vmem:[#allocation5 + $0xaf8] sm:$0xff]
    %v488 = vld [vmem:[#allocation5 + $0xb00] sm:$0xff]
    %v489 = vld [vmem:[#allocation5 + $0xb08] sm:$0xff]
    %v490 = vld [vmem:[#allocation5 + $0xb10] sm:$0xff]
    %v491 = vld [vmem:[#allocation5 + $0xb18] sm:$0xff]
    %v492 = vld [vmem:[#allocation5 + $0xb20] sm:$0xff]
    %v493 = vld [vmem:[#allocation5 + $0xb28] sm:$0xff]
    %v494 = vld [vmem:[#allocation5 + $0xb30] sm:$0xff]
    %v495 = vld [vmem:[#allocation5 + $0xb38] sm:$0xff]
    %v496 = vld [vmem:[#allocation5 + $0xb40] sm:$0xff]
    %v497 = vld [vmem:[#allocation5 + $0xb48] sm:$0xff]
    %v498 = vld [vmem:[#allocation5 + $0xb50] sm:$0xff]
    %v499 = vld [vmem:[#allocation5 + $0xb58] sm:$0xff]
    %v500 = vld [vmem:[#allocation5 + $0xb60] sm:$0xff]
    %v501 = vld [vmem:[#allocation5 + $0xb68] sm:$0xff]
    %v502 = vld [vmem:[#allocation5 + $0xb70] sm:$0xff]
    %v503 = vld [vmem:[#allocation5 + $0xb78] sm:$0xff]
    %v504 = vld [vmem:[#allocation5 + $0xb80] sm:$0xff]
    %v505 = vld [vmem:[#allocation5 + $0xb88] sm:$0xff]
    %v506 = vld [vmem:[#allocation5 + $0xb90] sm:$0xff]
    %v507 = vld [vmem:[#allocation5 + $0xb98] sm:$0xff]
    %v508 = vld [vmem:[#allocation5 + $0xba0] sm:$0xff]
    %v509 = vld [vmem:[#allocation5 + $0xba8] sm:$0xff]
    %v510 = vld [vmem:[#allocation5 + $0xbb0] sm:$0xff]
    %v511 = vld [vmem:[#allocation5 + $0xbb8] sm:$0xff]
    %v512 = vld [vmem:[#allocation5 + $0xbc0] sm:$0xff]
    %v513 = vld [vmem:[#allocation5 + $0xbc8] sm:$0xff]
    %v514 = vld [vmem:[#allocation5 + $0xbd0] sm:$0xff]
    %v515 = vld [vmem:[#allocation5 + $0xbd8] sm:$0xff]
    %v516 = vld [vmem:[#allocation5 + $0xbe0] sm:$0xff]
    %v517 = vld [vmem:[#allocation5 + $0xbe8] sm:$0xff]
    %v518 = vld [vmem:[#allocation5 + $0xbf0] sm:$0xff]
    %v519 = vld [vmem:[#allocation5 + $0xbf8] sm:$0xff]
    %v520 = vld [vmem:[#allocation5 + $0xc00] sm:$0xff]
    %v521 = vld [vmem:[#allocation5 + $0xc08] sm:$0xff]
    %v522 = vld [vmem:[#allocation5 + $0xc10] sm:$0xff]
    %v523 = vld [vmem:[#allocation5 + $0xc18] sm:$0xff]
    %v524 = vld [vmem:[#allocation5 + $0xc20] sm:$0xff]
    %v525 = vld [vmem:[#allocation5 + $0xc28] sm:$0xff]
    %v526 = vld [vmem:[#allocation5 + $0xc30] sm:$0xff]
    %v527 = vld [vmem:[#allocation5 + $0xc38] sm:$0xff]
    %v528 = vld [vmem:[#allocation5 + $0xc40] sm:$0xff]
    %v529 = vld [vmem:[#allocation5 + $0xc48] sm:$0xff]
    %v530 = vld [vmem:[#allocation5 + $0xc50] sm:$0xff]
    %v531 = vld [vmem:[#allocation5 + $0xc58] sm:$0xff]
    %v532 = vld [vmem:[#allocation5 + $0xc60] sm:$0xff]
    %v533 = vld [vmem:[#allocation5 + $0xc68] sm:$0xff]
    %v534 = vld [vmem:[#allocation5 + $0xc70] sm:$0xff]
    %v535 = vld [vmem:[#allocation5 + $0xc78] sm:$0xff]
    %v536 = vld [vmem:[#allocation5 + $0xc80] sm:$0xff]
    %v537 = vld [vmem:[#allocation5 + $0xc88] sm:$0xff]
    %v538 = vld [vmem:[#allocation5 + $0xc90] sm:$0xff]
    %v539 = vld [vmem:[#allocation5 + $0xc98] sm:$0xff]
    %v540 = vld [vmem:[#allocation5 + $0xca0] sm:$0xff]
    %v541 = vld [vmem:[#allocation5 + $0xca8] sm:$0xff]
    %v542 = vld [vmem:[#allocation5 + $0xcb0] sm:$0xff]
    %v543 = vld [vmem:[#allocation5 + $0xcb8] sm:$0xff]
    %v544 = vld [vmem:[#allocation5 + $0xcc0] sm:$0xff]
    %v545 = vld [vmem:[#allocation5 + $0xcc8] sm:$0xff]
    %v546 = vld [vmem:[#allocation5 + $0xcd0] sm:$0xff]
    %v547 = vld [vmem:[#allocation5 + $0xcd8] sm:$0xff]
    %v548 = vld [vmem:[#allocation5 + $0xce0] sm:$0xff]
    %v549 = vld [vmem:[#allocation5 + $0xce8] sm:$0xff]
    %v550 = vld [vmem:[#allocation5 + $0xcf0] sm:$0xff]
    %v551 = vld [vmem:[#allocation5 + $0xcf8] sm:$0xff]
    %v552 = vld [vmem:[#allocation5 + $0xd00] sm:$0xff]
    %v553 = vld [vmem:[#allocation5 + $0xd08] sm:$0xff]
    %v554 = vld [vmem:[#allocation5 + $0xd10] sm:$0xff]
    %v555 = vld [vmem:[#allocation5 + $0xd18] sm:$0xff]
    %v556 = vld [vmem:[#allocation5 + $0xd20] sm:$0xff]
    %v557 = vld [vmem:[#allocation5 + $0xd28] sm:$0xff]
    %v558 = vld [vmem:[#allocation5 + $0xd30] sm:$0xff]
    %v559 = vld [vmem:[#allocation5 + $0xd38] sm:$0xff]
    %v560 = vld [vmem:[#allocation5 + $0xd40] sm:$0xff]
    %v561 = vld [vmem:[#allocation5 + $0xd48] sm:$0xff]
    %v562 = vld [vmem:[#allocation5 + $0xd50] sm:$0xff]
    %v563 = vld [vmem:[#allocation5 + $0xd58] sm:$0xff]
    %v564 = vld [vmem:[#allocation5 + $0xd60] sm:$0xff]
    %v565 = vld [vmem:[#allocation5 + $0xd68] sm:$0xff]
    %v566 = vld [vmem:[#allocation5 + $0xd70] sm:$0xff]
    %v567 = vld [vmem:[#allocation5 + $0xd78] sm:$0xff]
    %v568 = vld [vmem:[#allocation5 + $0xd80] sm:$0xff]
    %v569 = vld [vmem:[#allocation5 + $0xd88] sm:$0xff]
    %v570 = vld [vmem:[#allocation5 + $0xd90] sm:$0xff]
    %v571 = vld [vmem:[#allocation5 + $0xd98] sm:$0xff]
    %v572 = vld [vmem:[#allocation5 + $0xda0] sm:$0xff]
    %v573 = vld [vmem:[#allocation5 + $0xda8] sm:$0xff]
    %v574 = vld [vmem:[#allocation5 + $0xdb0] sm:$0xff]
    %v575 = vld [vmem:[#allocation5 + $0xdb8] sm:$0xff]
    %v576 = vld [vmem:[#allocation5 + $0xdc0] sm:$0xff]
    %v577 = vld [vmem:[#allocation5 + $0xdc8] sm:$0xff]
    %v578 = vld [vmem:[#allocation5 + $0xdd0] sm:$0xff]
    %v579 = vld [vmem:[#allocation5 + $0xdd8] sm:$0xff]
    %v580 = vld [vmem:[#allocation5 + $0xde0] sm:$0xff]
    %v581 = vld [vmem:[#allocation5 + $0xde8] sm:$0xff]
    %v582 = vld [vmem:[#allocation5 + $0xdf0] sm:$0xff]
    %v583 = vld [vmem:[#allocation5 + $0xdf8] sm:$0xff]
    %v584 = vld [vmem:[#allocation5 + $0xe00] sm:$0xff]
    %v585 = vld [vmem:[#allocation5 + $0xe08] sm:$0xff]
    %v586 = vld [vmem:[#allocation5 + $0xe10] sm:$0xff]
    %v587 = vld [vmem:[#allocation5 + $0xe18] sm:$0xff]
    %v588 = vld [vmem:[#allocation5 + $0xe20] sm:$0xff]
    %v589 = vld [vmem:[#allocation5 + $0xe28] sm:$0xff]
    %v590 = vld [vmem:[#allocation5 + $0xe30] sm:$0xff]
    %v591 = vld [vmem:[#allocation5 + $0xe38] sm:$0xff]
    %v592 = vld [vmem:[#allocation5 + $0xe40] sm:$0xff]
    %v593 = vld [vmem:[#allocation5 + $0xe48] sm:$0xff]
    %v594 = vld [vmem:[#allocation5 + $0xe50] sm:$0xff]
    %v595 = vld [vmem:[#allocation5 + $0xe58] sm:$0xff]
    %v596 = vld [vmem:[#allocation5 + $0xe60] sm:$0xff]
    %v597 = vld [vmem:[#allocation5 + $0xe68] sm:$0xff]
    %v598 = vld [vmem:[#allocation5 + $0xe70] sm:$0xff]
    %v599 = vld [vmem:[#allocation5 + $0xe78] sm:$0xff]
    %v600 = vld [vmem:[#allocation5 + $0xe80] sm:$0xff]
    %v601 = vld [vmem:[#allocation5 + $0xe88] sm:$0xff]
    %v602 = vld [vmem:[#allocation5 + $0xe90] sm:$0xff]
    %v603 = vld [vmem:[#allocation5 + $0xe98] sm:$0xff]
    %v604 = vld [vmem:[#allocation5 + $0xea0] sm:$0xff]
    %v605 = vld [vmem:[#allocation5 + $0xea8] sm:$0xff]
    %v606 = vld [vmem:[#allocation5 + $0xeb0] sm:$0xff]
    %v607 = vld [vmem:[#allocation5 + $0xeb8] sm:$0xff]
    %v608 = vld [vmem:[#allocation5 + $0xec0] sm:$0xff]
    %v609 = vld [vmem:[#allocation5 + $0xec8] sm:$0xff]
    %v610 = vld [vmem:[#allocation5 + $0xed0] sm:$0xff]
    %v611 = vld [vmem:[#allocation5 + $0xed8] sm:$0xff]
    %v612 = vld [vmem:[#allocation5 + $0xee0] sm:$0xff]
    %v613 = vld [vmem:[#allocation5 + $0xee8] sm:$0xff]
    %v614 = vld [vmem:[#allocation5 + $0xef0] sm:$0xff]
    %v615 = vld [vmem:[#allocation5 + $0xef8] sm:$0xff]
    %v616 = vld [vmem:[#allocation5 + $0xf00] sm:$0xff]
    %v617 = vld [vmem:[#allocation5 + $0xf08] sm:$0xff]
    %v618 = vld [vmem:[#allocation5 + $0xf10] sm:$0xff]
    %v619 = vld [vmem:[#allocation5 + $0xf18] sm:$0xff]
    %v620 = vld [vmem:[#allocation5 + $0xf20] sm:$0xff]
    %v621 = vld [vmem:[#allocation5 + $0xf28] sm:$0xff]
    %v622 = vld [vmem:[#allocation5 + $0xf30] sm:$0xff]
    %v623 = vld [vmem:[#allocation5 + $0xf38] sm:$0xff]
    %v624 = vld [vmem:[#allocation5 + $0xf40] sm:$0xff]
    %v625 = vld [vmem:[#allocation5 + $0xf48] sm:$0xff]
    %v626 = vld [vmem:[#allocation5 + $0xf50] sm:$0xff]
    %v627 = vld [vmem:[#allocation5 + $0xf58] sm:$0xff]
    %v628 = vld [vmem:[#allocation5 + $0xf60] sm:$0xff]
    %v629 = vld [vmem:[#allocation5 + $0xf68] sm:$0xff]
    %v630 = vld [vmem:[#allocation5 + $0xf70] sm:$0xff]
    %v631 = vld [vmem:[#allocation5 + $0xf78] sm:$0xff]
    %v632 = vld [vmem:[#allocation5 + $0xf80] sm:$0xff]
    %v633 = vld [vmem:[#allocation5 + $0xf88] sm:$0xff]
    %v634 = vld [vmem:[#allocation5 + $0xf90] sm:$0xff]
    %v635 = vld [vmem:[#allocation5 + $0xf98] sm:$0xff]
    %v636 = vld [vmem:[#allocation5 + $0xfa0] sm:$0xff]
    %v637 = vld [vmem:[#allocation5 + $0xfa8] sm:$0xff]
    %v638 = vld [vmem:[#allocation5 + $0xfb0] sm:$0xff]
    %v639 = vld [vmem:[#allocation5 + $0xfb8] sm:$0xff]
    %v640 = vld [vmem:[#allocation5 + $0xfc0] sm:$0xff]
    %v641 = vld [vmem:[#allocation5 + $0xfc8] sm:$0xff]
    %v642 = vld [vmem:[#allocation5 + $0xfd0] sm:$0xff]
    %v643 = vld [vmem:[#allocation5 + $0xfd8] sm:$0xff]
    %v644 = vld [vmem:[#allocation5 + $0xfe0] sm:$0xff]
    %v645 = vld [vmem:[#allocation5 + $0xfe8] sm:$0xff]
    %v646 = vld [vmem:[#allocation5 + $0xff0] sm:$0xff]
    %v647 = vld [vmem:[#allocation5 + $0xff8] sm:$0xff]
    %v648 = vld [vmem:[#allocation5 + $0x1000] sm:$0xff]
    %v649 = vld [vmem:[#allocation5 + $0x1008] sm:$0xff]
    %v650 = vld [vmem:[#allocation5 + $0x1010] sm:$0xff]
    %v651 = vld [vmem:[#allocation5 + $0x1018] sm:$0xff]
    %v652 = vld [vmem:[#allocation5 + $0x1020] sm:$0xff]
    %v653 = vld [vmem:[#allocation5 + $0x1028] sm:$0xff]
    %v654 = vld [vmem:[#allocation5 + $0x1030] sm:$0xff]
    %v655 = vld [vmem:[#allocation5 + $0x1038] sm:$0xff]
    %v656 = vld [vmem:[#allocation5 + $0x1040] sm:$0xff]
    %v657 = vld [vmem:[#allocation5 + $0x1048] sm:$0xff]
    %v658 = vld [vmem:[#allocation5 + $0x1050] sm:$0xff]
    %v659 = vld [vmem:[#allocation5 + $0x1058] sm:$0xff]
    %v660 = vld [vmem:[#allocation5 + $0x1060] sm:$0xff]
    %v661 = vld [vmem:[#allocation5 + $0x1068] sm:$0xff]
    %v662 = vld [vmem:[#allocation5 + $0x1070] sm:$0xff]
    %v663 = vld [vmem:[#allocation5 + $0x1078] sm:$0xff]
    %v664 = vld [vmem:[#allocation5 + $0x1080] sm:$0xff]
    %v665 = vld [vmem:[#allocation5 + $0x1088] sm:$0xff]
    %v666 = vld [vmem:[#allocation5 + $0x1090] sm:$0xff]
    %v667 = vld [vmem:[#allocation5 + $0x1098] sm:$0xff]
    %v668 = vld [vmem:[#allocation5 + $0x10a0] sm:$0xff]
    %v669 = vld [vmem:[#allocation5 + $0x10a8] sm:$0xff]
    %v670 = vld [vmem:[#allocation5 + $0x10b0] sm:$0xff]
    %v671 = vld [vmem:[#allocation5 + $0x10b8] sm:$0xff]
    %v672 = vld [vmem:[#allocation5 + $0x10c0] sm:$0xff]
    %v673 = vld [vmem:[#allocation5 + $0x10c8] sm:$0xff]
    %v674 = vld [vmem:[#allocation5 + $0x10d0] sm:$0xff]
    %v675 = vld [vmem:[#allocation5 + $0x10d8] sm:$0xff]
    %v676 = vld [vmem:[#allocation5 + $0x10e0] sm:$0xff]
    %v677 = vld [vmem:[#allocation5 + $0x10e8] sm:$0xff]
    %v678 = vld [vmem:[#allocation5 + $0x10f0] sm:$0xff]
    %v679 = vld [vmem:[#allocation5 + $0x10f8] sm:$0xff]
    %v680 = vld [vmem:[#allocation5 + $0x1100] sm:$0xff]
    %v681 = vld [vmem:[#allocation5 + $0x1108] sm:$0xff]
    %v682 = vld [vmem:[#allocation5 + $0x1110] sm:$0xff]
    %v683 = vld [vmem:[#allocation5 + $0x1118] sm:$0xff]
    %v684 = vld [vmem:[#allocation5 + $0x1120] sm:$0xff]
    %v685 = vld [vmem:[#allocation5 + $0x1128] sm:$0xff]
    %v686 = vld [vmem:[#allocation5 + $0x1130] sm:$0xff]
    %v687 = vld [vmem:[#allocation5 + $0x1138] sm:$0xff]
    %v688 = vld [vmem:[#allocation5 + $0x1140] sm:$0xff]
    %v689 = vld [vmem:[#allocation5 + $0x1148] sm:$0xff]
    %v690 = vld [vmem:[#allocation5 + $0x1150] sm:$0xff]
    %v691 = vld [vmem:[#allocation5 + $0x1158] sm:$0xff]
    %v692 = vld [vmem:[#allocation5 + $0x1160] sm:$0xff]
    %v693 = vld [vmem:[#allocation5 + $0x1168] sm:$0xff]
    %v694 = vld [vmem:[#allocation5 + $0x1170] sm:$0xff]
    %v695 = vld [vmem:[#allocation5 + $0x1178] sm:$0xff]
    %v696 = vld [vmem:[#allocation5 + $0x1180] sm:$0xff]
    %v697 = vld [vmem:[#allocation5 + $0x1188] sm:$0xff]
    %v698 = vld [vmem:[#allocation5 + $0x1190] sm:$0xff]
    %v699 = vld [vmem:[#allocation5 + $0x1198] sm:$0xff]
    %v700 = vld [vmem:[#allocation5 + $0x11a0] sm:$0xff]
    %v701 = vld [vmem:[#allocation5 + $0x11a8] sm:$0xff]
    %v702 = vld [vmem:[#allocation5 + $0x11b0] sm:$0xff]
    %v703 = vld [vmem:[#allocation5 + $0x11b8] sm:$0xff]
    %v704 = vld [vmem:[#allocation5 + $0x11c0] sm:$0xff]
    %v705 = vld [vmem:[#allocation5 + $0x11c8] sm:$0xff]
    %v706 = vld [vmem:[#allocation5 + $0x11d0] sm:$0xff]
    %v707 = vld [vmem:[#allocation5 + $0x11d8] sm:$0xff]
    %v708 = vld [vmem:[#allocation5 + $0x11e0] sm:$0xff]
    %v709 = vld [vmem:[#allocation5 + $0x11e8] sm:$0xff]
    %v710 = vld [vmem:[#allocation5 + $0x11f0] sm:$0xff]
    %v711 = vld [vmem:[#allocation5 + $0x11f8] sm:$0xff]
    %v712 = vld [vmem:[#allocation5 + $0x1200] sm:$0xff]
    %v713 = vld [vmem:[#allocation5 + $0x1208] sm:$0xff]
    %v714 = vld [vmem:[#allocation5 + $0x1210] sm:$0xff]
    %v715 = vld [vmem:[#allocation5 + $0x1218] sm:$0xff]
    %v716 = vld [vmem:[#allocation5 + $0x1220] sm:$0xff]
    %v717 = vld [vmem:[#allocation5 + $0x1228] sm:$0xff]
    %v718 = vld [vmem:[#allocation5 + $0x1230] sm:$0xff]
    %v719 = vld [vmem:[#allocation5 + $0x1238] sm:$0xff]
    %v720 = vld [vmem:[#allocation5 + $0x1240] sm:$0xff]
    %v721 = vld [vmem:[#allocation5 + $0x1248] sm:$0xff]
    %v722 = vld [vmem:[#allocation5 + $0x1250] sm:$0xff]
    %v723 = vld [vmem:[#allocation5 + $0x1258] sm:$0xff]
    %v724 = vld [vmem:[#allocation5 + $0x1260] sm:$0xff]
    %v725 = vld [vmem:[#allocation5 + $0x1268] sm:$0xff]
    %v726 = vld [vmem:[#allocation5 + $0x1270] sm:$0xff]
    %v727 = vld [vmem:[#allocation5 + $0x1278] sm:$0xff]
    %v728 = vld [vmem:[#allocation5 + $0x1280] sm:$0xff]
    %v729 = vld [vmem:[#allocation5 + $0x1288] sm:$0xff]
    %v730 = vld [vmem:[#allocation5 + $0x1290] sm:$0xff]
    %v731 = vld [vmem:[#allocation5 + $0x1298] sm:$0xff]
    %v732 = vld [vmem:[#allocation5 + $0x12a0] sm:$0xff]
    %v733 = vld [vmem:[#allocation5 + $0x12a8] sm:$0xff]
    %v734 = vld [vmem:[#allocation5 + $0x12b0] sm:$0xff]
    %v735 = vld [vmem:[#allocation5 + $0x12b8] sm:$0xff]
    %v736 = vld [vmem:[#allocation5 + $0x12c0] sm:$0xff]
    %v737 = vld [vmem:[#allocation5 + $0x12c8] sm:$0xff]
    %v738 = vld [vmem:[#allocation5 + $0x12d0] sm:$0xff]
    %v739 = vld [vmem:[#allocation5 + $0x12d8] sm:$0xff]
    %v740 = vld [vmem:[#allocation5 + $0x12e0] sm:$0xff]
    %v741 = vld [vmem:[#allocation5 + $0x12e8] sm:$0xff]
    %v742 = vld [vmem:[#allocation5 + $0x12f0] sm:$0xff]
    %v743 = vld [vmem:[#allocation5 + $0x12f8] sm:$0xff]
    %v744 = vld [vmem:[#allocation5 + $0x1300] sm:$0xff]
    %v745 = vld [vmem:[#allocation5 + $0x1308] sm:$0xff]
    %v746 = vld [vmem:[#allocation5 + $0x1310] sm:$0xff]
    %v747 = vld [vmem:[#allocation5 + $0x1318] sm:$0xff]
    %v748 = vld [vmem:[#allocation5 + $0x1320] sm:$0xff]
    %v749 = vld [vmem:[#allocation5 + $0x1328] sm:$0xff]
    %v750 = vld [vmem:[#allocation5 + $0x1330] sm:$0xff]
    %v751 = vld [vmem:[#allocation5 + $0x1338] sm:$0xff]
    %v752 = vld [vmem:[#allocation5 + $0x1340] sm:$0xff]
    %v753 = vld [vmem:[#allocation5 + $0x1348] sm:$0xff]
    %v754 = vld [vmem:[#allocation5 + $0x1350] sm:$0xff]
    %v755 = vld [vmem:[#allocation5 + $0x1358] sm:$0xff]
    %v756 = vld [vmem:[#allocation5 + $0x1360] sm:$0xff]
    %v757 = vld [vmem:[#allocation5 + $0x1368] sm:$0xff]
    %v758 = vld [vmem:[#allocation5 + $0x1370] sm:$0xff]
    %v759 = vld [vmem:[#allocation5 + $0x1378] sm:$0xff]
    %v760 = vld [vmem:[#allocation5 + $0x1380] sm:$0xff]
    %v761 = vld [vmem:[#allocation5 + $0x1388] sm:$0xff]
    %v762 = vld [vmem:[#allocation5 + $0x1390] sm:$0xff]
    %v763 = vld [vmem:[#allocation5 + $0x1398] sm:$0xff]
    %v764 = vld [vmem:[#allocation5 + $0x13a0] sm:$0xff]
    %v765 = vld [vmem:[#allocation5 + $0x13a8] sm:$0xff]
    %v766 = vld [vmem:[#allocation5 + $0x13b0] sm:$0xff]
    %v767 = vld [vmem:[#allocation5 + $0x13b8] sm:$0xff]
    %v768 = vld [vmem:[#allocation5 + $0x13c0] sm:$0xff]
    %v769 = vld [vmem:[#allocation5 + $0x13c8] sm:$0xff]
    %v770 = vld [vmem:[#allocation5 + $0x13d0] sm:$0xff]
    %v771 = vld [vmem:[#allocation5 + $0x13d8] sm:$0xff]
    %v772 = vld [vmem:[#allocation5 + $0x13e0] sm:$0xff]
    %v773 = vld [vmem:[#allocation5 + $0x13e8] sm:$0xff]
    %v774 = vld [vmem:[#allocation5 + $0x13f0] sm:$0xff]
    %v775 = vld [vmem:[#allocation5 + $0x13f8] sm:$0xff]
    %v776 = vld [vmem:[#allocation5 + $0x1400] sm:$0xff]
    %v777 = vld [vmem:[#allocation5 + $0x1408] sm:$0xff]
    %v778 = vld [vmem:[#allocation5 + $0x1410] sm:$0xff]
    %v779 = vld [vmem:[#allocation5 + $0x1418] sm:$0xff]
    %v780 = vld [vmem:[#allocation5 + $0x1420] sm:$0xff]
    %v781 = vld [vmem:[#allocation5 + $0x1428] sm:$0xff]
    %v782 = vld [vmem:[#allocation5 + $0x1430] sm:$0xff]
    %v783 = vld [vmem:[#allocation5 + $0x1438] sm:$0xff]
    %v784 = vld [vmem:[#allocation5 + $0x1440] sm:$0xff]
    %v785 = vld [vmem:[#allocation5 + $0x1448] sm:$0xff]
    %v786 = vld [vmem:[#allocation5 + $0x1450] sm:$0xff]
    %v787 = vld [vmem:[#allocation5 + $0x1458] sm:$0xff]
    %v788 = vld [vmem:[#allocation5 + $0x1460] sm:$0xff]
    %v789 = vld [vmem:[#allocation5 + $0x1468] sm:$0xff]
    %v790 = vld [vmem:[#allocation5 + $0x1470] sm:$0xff]
    %v791 = vld [vmem:[#allocation5 + $0x1478] sm:$0xff]
    %v792 = vld [vmem:[#allocation5 + $0x1480] sm:$0xff]
    %v793 = vld [vmem:[#allocation5 + $0x1488] sm:$0xff]
    %v794 = vld [vmem:[#allocation5 + $0x1490] sm:$0xff]
    %v795 = vld [vmem:[#allocation5 + $0x1498] sm:$0xff]
    %v796 = vld [vmem:[#allocation5 + $0x14a0] sm:$0xff]
    %v797 = vld [vmem:[#allocation5 + $0x14a8] sm:$0xff]
    %v798 = vld [vmem:[#allocation5 + $0x14b0] sm:$0xff]
    %v799 = vld [vmem:[#allocation5 + $0x14b8] sm:$0xff]
    %v800 = vld [vmem:[#allocation5 + $0x14c0] sm:$0xff]
    %v801 = vld [vmem:[#allocation5 + $0x14c8] sm:$0xff]
    %v802 = vld [vmem:[#allocation5 + $0x14d0] sm:$0xff]
    %v803 = vld [vmem:[#allocation5 + $0x14d8] sm:$0xff]
    %v804 = vld [vmem:[#allocation5 + $0x14e0] sm:$0xff]
    %v805 = vld [vmem:[#allocation5 + $0x14e8] sm:$0xff]
    %v806 = vld [vmem:[#allocation5 + $0x14f0] sm:$0xff]
    %v807 = vld [vmem:[#allocation5 + $0x14f8] sm:$0xff]
    %v808 = vld [vmem:[#allocation5 + $0x1500] sm:$0xff]
    %v809 = vld [vmem:[#allocation5 + $0x1508] sm:$0xff]
    %v810 = vld [vmem:[#allocation5 + $0x1510] sm:$0xff]
    %v811 = vld [vmem:[#allocation5 + $0x1518] sm:$0xff]
    %v812 = vld [vmem:[#allocation5 + $0x1520] sm:$0xff]
    %v813 = vld [vmem:[#allocation5 + $0x1528] sm:$0xff]
    %v814 = vld [vmem:[#allocation5 + $0x1530] sm:$0xff]
    %v815 = vld [vmem:[#allocation5 + $0x1538] sm:$0xff]
    %v816 = vld [vmem:[#allocation5 + $0x1540] sm:$0xff]
    %v817 = vld [vmem:[#allocation5 + $0x1548] sm:$0xff]
    %v818 = vld [vmem:[#allocation5 + $0x1550] sm:$0xff]
    %v819 = vld [vmem:[#allocation5 + $0x1558] sm:$0xff]
    %v820 = vld [vmem:[#allocation5 + $0x1560] sm:$0xff]
    %v821 = vld [vmem:[#allocation5 + $0x1568] sm:$0xff]
    %v822 = vld [vmem:[#allocation5 + $0x1570] sm:$0xff]
    %v823 = vld [vmem:[#allocation5 + $0x1578] sm:$0xff]
    %v824 = vld [vmem:[#allocation5 + $0x1580] sm:$0xff]
    %v825 = vld [vmem:[#allocation5 + $0x1588] sm:$0xff]
    %v826 = vld [vmem:[#allocation5 + $0x1590] sm:$0xff]
    %v827 = vld [vmem:[#allocation5 + $0x1598] sm:$0xff]
    %v828 = vld [vmem:[#allocation5 + $0x15a0] sm:$0xff]
    %v829 = vld [vmem:[#allocation5 + $0x15a8] sm:$0xff]
    %v830 = vld [vmem:[#allocation5 + $0x15b0] sm:$0xff]
    %v831 = vld [vmem:[#allocation5 + $0x15b8] sm:$0xff]
    %v832 = vld [vmem:[#allocation5 + $0x15c0] sm:$0xff]
    %v833 = vld [vmem:[#allocation5 + $0x15c8] sm:$0xff]
    %v834 = vld [vmem:[#allocation5 + $0x15d0] sm:$0xff]
    %v835 = vld [vmem:[#allocation5 + $0x15d8] sm:$0xff]
    %v836 = vld [vmem:[#allocation5 + $0x15e0] sm:$0xff]
    %v837 = vld [vmem:[#allocation5 + $0x15e8] sm:$0xff]
    %v838 = vld [vmem:[#allocation5 + $0x15f0] sm:$0xff]
    %v839 = vld [vmem:[#allocation5 + $0x15f8] sm:$0xff]
    %v840 = vld [vmem:[#allocation5 + $0x1600] sm:$0xff]
    %v841 = vld [vmem:[#allocation5 + $0x1608] sm:$0xff]
    %v842 = vld [vmem:[#allocation5 + $0x1610] sm:$0xff]
    %v843 = vld [vmem:[#allocation5 + $0x1618] sm:$0xff]
    %v844 = vld [vmem:[#allocation5 + $0x1620] sm:$0xff]
    %v845 = vld [vmem:[#allocation5 + $0x1628] sm:$0xff]
    %v846 = vld [vmem:[#allocation5 + $0x1630] sm:$0xff]
    %v847 = vld [vmem:[#allocation5 + $0x1638] sm:$0xff]
    %v848 = vld [vmem:[#allocation5 + $0x1640] sm:$0xff]
    %v849 = vld [vmem:[#allocation5 + $0x1648] sm:$0xff]
    %v850 = vld [vmem:[#allocation5 + $0x1650] sm:$0xff]
    %v851 = vld [vmem:[#allocation5 + $0x1658] sm:$0xff]
    %v852 = vld [vmem:[#allocation5 + $0x1660] sm:$0xff]
    %v853 = vld [vmem:[#allocation5 + $0x1668] sm:$0xff]
    %v854 = vld [vmem:[#allocation5 + $0x1670] sm:$0xff]
    %v855 = vld [vmem:[#allocation5 + $0x1678] sm:$0xff]
    %v856 = vld [vmem:[#allocation5 + $0x1680] sm:$0xff]
    %v857 = vld [vmem:[#allocation5 + $0x1688] sm:$0xff]
    %v858 = vld [vmem:[#allocation5 + $0x1690] sm:$0xff]
    %v859 = vld [vmem:[#allocation5 + $0x1698] sm:$0xff]
    %v860 = vld [vmem:[#allocation5 + $0x16a0] sm:$0xff]
    %v861 = vld [vmem:[#allocation5 + $0x16a8] sm:$0xff]
    %v862 = vld [vmem:[#allocation5 + $0x16b0] sm:$0xff]
    %v863 = vld [vmem:[#allocation5 + $0x16b8] sm:$0xff]
    %v864 = vld [vmem:[#allocation5 + $0x16c0] sm:$0xff]
    %v865 = vld [vmem:[#allocation5 + $0x16c8] sm:$0xff]
    %v866 = vld [vmem:[#allocation5 + $0x16d0] sm:$0xff]
    %v867 = vld [vmem:[#allocation5 + $0x16d8] sm:$0xff]
    %v868 = vld [vmem:[#allocation5 + $0x16e0] sm:$0xff]
    %v869 = vld [vmem:[#allocation5 + $0x16e8] sm:$0xff]
    %v870 = vld [vmem:[#allocation5 + $0x16f0] sm:$0xff]
    %v871 = vld [vmem:[#allocation5 + $0x16f8] sm:$0xff]
    %v872 = vld [vmem:[#allocation5 + $0x1700] sm:$0xff]
    %v873 = vld [vmem:[#allocation5 + $0x1708] sm:$0xff]
    %v874 = vld [vmem:[#allocation5 + $0x1710] sm:$0xff]
    %v875 = vld [vmem:[#allocation5 + $0x1718] sm:$0xff]
    %v876 = vld [vmem:[#allocation5 + $0x1720] sm:$0xff]
    %v877 = vld [vmem:[#allocation5 + $0x1728] sm:$0xff]
    %v878 = vld [vmem:[#allocation5 + $0x1730] sm:$0xff]
    %v879 = vld [vmem:[#allocation5 + $0x1738] sm:$0xff]
    %v880 = vld [vmem:[#allocation5 + $0x1740] sm:$0xff]
    %v881 = vld [vmem:[#allocation5 + $0x1748] sm:$0xff]
    %v882 = vld [vmem:[#allocation5 + $0x1750] sm:$0xff]
    %v883 = vld [vmem:[#allocation5 + $0x1758] sm:$0xff]
    %v884 = vld [vmem:[#allocation5 + $0x1760] sm:$0xff]
    %v885 = vld [vmem:[#allocation5 + $0x1768] sm:$0xff]
    %v886 = vld [vmem:[#allocation5 + $0x1770] sm:$0xff]
    %v887 = vld [vmem:[#allocation5 + $0x1778] sm:$0xff]
    %v888 = vld [vmem:[#allocation5 + $0x1780] sm:$0xff]
    %v889 = vld [vmem:[#allocation5 + $0x1788] sm:$0xff]
    %v890 = vld [vmem:[#allocation5 + $0x1790] sm:$0xff]
    %v891 = vld [vmem:[#allocation5 + $0x1798] sm:$0xff]
    %v892 = vld [vmem:[#allocation5 + $0x17a0] sm:$0xff]
    %v893 = vld [vmem:[#allocation5 + $0x17a8] sm:$0xff]
    %v894 = vld [vmem:[#allocation5 + $0x17b0] sm:$0xff]
    %v895 = vld [vmem:[#allocation5 + $0x17b8] sm:$0xff]
    %v896 = vld [vmem:[#allocation5 + $0x17c0] sm:$0xff]
    %v897 = vld [vmem:[#allocation5 + $0x17c8] sm:$0xff]
    %v898 = vld [vmem:[#allocation5 + $0x17d0] sm:$0xff]
    %v899 = vld [vmem:[#allocation5 + $0x17d8] sm:$0xff]
    %v900 = vld [vmem:[#allocation5 + $0x17e0] sm:$0xff]
    %v901 = vld [vmem:[#allocation5 + $0x17e8] sm:$0xff]
    %v902 = vld [vmem:[#allocation5 + $0x17f0] sm:$0xff]
    %v903 = vld [vmem:[#allocation5 + $0x17f8] sm:$0xff]
    %v904 = vld [vmem:[#allocation5 + $0x1800] sm:$0xff]
    %v905 = vld [vmem:[#allocation5 + $0x1808] sm:$0xff]
    %v906 = vld [vmem:[#allocation5 + $0x1810] sm:$0xff]
    %v907 = vld [vmem:[#allocation5 + $0x1818] sm:$0xff]
    %v908 = vld [vmem:[#allocation5 + $0x1820] sm:$0xff]
    %v909 = vld [vmem:[#allocation5 + $0x1828] sm:$0xff]
    %v910 = vld [vmem:[#allocation5 + $0x1830] sm:$0xff]
    %v911 = vld [vmem:[#allocation5 + $0x1838] sm:$0xff]
    %v912 = vld [vmem:[#allocation5 + $0x1840] sm:$0xff]
    %v913 = vld [vmem:[#allocation5 + $0x1848] sm:$0xff]
    %v914 = vld [vmem:[#allocation5 + $0x1850] sm:$0xff]
    %v915 = vld [vmem:[#allocation5 + $0x1858] sm:$0xff]
    %v916 = vld [vmem:[#allocation5 + $0x1860] sm:$0xff]
    %v917 = vld [vmem:[#allocation5 + $0x1868] sm:$0xff]
    %v918 = vld [vmem:[#allocation5 + $0x1870] sm:$0xff]
    %v919 = vld [vmem:[#allocation5 + $0x1878] sm:$0xff]
    %v920 = vld [vmem:[#allocation5 + $0x1880] sm:$0xff]
    %v921 = vld [vmem:[#allocation5 + $0x1888] sm:$0xff]
    %v922 = vld [vmem:[#allocation5 + $0x1890] sm:$0xff]
    %v923 = vld [vmem:[#allocation5 + $0x1898] sm:$0xff]
    %v924 = vld [vmem:[#allocation5 + $0x18a0] sm:$0xff]
    %v925 = vld [vmem:[#allocation5 + $0x18a8] sm:$0xff]
    %v926 = vld [vmem:[#allocation5 + $0x18b0] sm:$0xff]
    %v927 = vld [vmem:[#allocation5 + $0x18b8] sm:$0xff]
    %v928 = vld [vmem:[#allocation5 + $0x18c0] sm:$0xff]
    %v929 = vld [vmem:[#allocation5 + $0x18c8] sm:$0xff]
    %v930 = vld [vmem:[#allocation5 + $0x18d0] sm:$0xff]
    %v931 = vld [vmem:[#allocation5 + $0x18d8] sm:$0xff]
    %v932 = vld [vmem:[#allocation5 + $0x18e0] sm:$0xff]
    %v933 = vld [vmem:[#allocation5 + $0x18e8] sm:$0xff]
    %v934 = vld [vmem:[#allocation5 + $0x18f0] sm:$0xff]
    %v935 = vld [vmem:[#allocation5 + $0x18f8] sm:$0xff]
    %v936 = vld [vmem:[#allocation7] sm:$0x3]
    %v938 = vlaneseq
    %v939 = vshrl.u32 %v938, 7
    %v940 = vsub.s32 0, %v939
    %v941 = vrot.slane %v936, %v940
    %v942 = vlaneseq
    %v943 = vshrl.u32 %v942, 7
    %v944 = vsub.s32 1, %v943
    %v945 = vrot.slane %v936, %v944
    %v998 = vunpack.c.l.b16 %v86
    %v999 = vunpack.c.h.b16 %v86
    %v1000 = vunpack.c.l.b16 %v87
    %v1001 = vunpack.c.h.b16 %v87
    %v1002 = vunpack.c.l.b16 %v88
    %v1003 = vunpack.c.h.b16 %v88
    %v1004 = vunpack.c.l.b16 %v89
    %v1005 = vunpack.c.h.b16 %v89
    %v1006 = vunpack.c.l.b16 %v90
    %v1007 = vunpack.c.h.b16 %v90
    %v1008 = vunpack.c.l.b16 %v91
    %v1009 = vunpack.c.h.b16 %v91
    %v1010 = vunpack.c.l.b16 %v92
    %v1011 = vunpack.c.h.b16 %v92
    %v1012 = vunpack.c.l.b16 %v93
    %v1013 = vunpack.c.h.b16 %v93
    %v1014 = vunpack.c.l.b16 %v94
    %v1015 = vunpack.c.h.b16 %v94
    %v1016 = vunpack.c.l.b16 %v95
    %v1017 = vunpack.c.h.b16 %v95
    %v1018 = vunpack.c.l.b16 %v96
    %v1019 = vunpack.c.h.b16 %v96
    %v1020 = vunpack.c.l.b16 %v97
    %v1021 = vunpack.c.h.b16 %v97
    %v1022 = vunpack.c.l.b16 %v98
    %v1023 = vunpack.c.h.b16 %v98
    %v1024 = vunpack.c.l.b16 %v99
    %v1025 = vunpack.c.h.b16 %v99
    %v1026 = vunpack.c.l.b16 %v100
    %v1027 = vunpack.c.h.b16 %v100
    %v1028 = vunpack.c.l.b16 %v101
    %v1029 = vunpack.c.h.b16 %v101
    %v1030 = vunpack.c.l.b16 %v102
    %v1031 = vunpack.c.h.b16 %v102
    %v1032 = vunpack.c.l.b16 %v103
    %v1033 = vunpack.c.h.b16 %v103
    %v1034 = vunpack.c.l.b16 %v104
    %v1035 = vunpack.c.h.b16 %v104
    %v1036 = vunpack.c.l.b16 %v105
    %v1037 = vunpack.c.h.b16 %v105
    %v1038 = vunpack.c.l.b16 %v106
    %v1039 = vunpack.c.h.b16 %v106
    %v1040 = vunpack.c.l.b16 %v107
    %v1041 = vunpack.c.h.b16 %v107
    %v1042 = vunpack.c.l.b16 %v108
    %v1043 = vunpack.c.h.b16 %v108
    %v1044 = vunpack.c.l.b16 %v109
    %v1045 = vunpack.c.h.b16 %v109
    %v1046 = vunpack.c.l.b16 %v110
    %v1047 = vunpack.c.h.b16 %v110
    %v1048 = vunpack.c.l.b16 %v111
    %v1049 = vunpack.c.h.b16 %v111
    %v1050 = vunpack.c.l.b16 %v112
    %v1051 = vunpack.c.h.b16 %v112
    %v1052 = vunpack.c.l.b16 %v113
    %v1053 = vunpack.c.h.b16 %v113
    %v1054 = vunpack.c.l.b16 %v114
    %v1055 = vunpack.c.h.b16 %v114
    %v1056 = vunpack.c.l.b16 %v115
    %v1057 = vunpack.c.h.b16 %v115
    %v1058 = vunpack.c.l.b16 %v116
    %v1059 = vunpack.c.h.b16 %v116
    %v1060 = vunpack.c.l.b16 %v117
    %v1061 = vunpack.c.h.b16 %v117
    %v1062 = vunpack.c.l.b16 %v118
    %v1063 = vunpack.c.h.b16 %v118
    %v1064 = vunpack.c.l.b16 %v119
    %v1065 = vunpack.c.h.b16 %v119
    %v1066 = vunpack.c.l.b16 %v120
    %v1067 = vunpack.c.h.b16 %v120
    %v1068 = vunpack.c.l.b16 %v121
    %v1069 = vunpack.c.h.b16 %v121
    %v1070 = vunpack.c.l.b16 %v122
    %v1071 = vunpack.c.h.b16 %v122
    %v1072 = vunpack.c.l.b16 %v123
    %v1073 = vunpack.c.h.b16 %v123
    %v1074 = vunpack.c.l.b16 %v124
    %v1075 = vunpack.c.h.b16 %v124
    %v1076 = vunpack.c.l.b16 %v125
    %v1077 = vunpack.c.h.b16 %v125
    %v1078 = vunpack.c.l.b16 %v126
    %v1079 = vunpack.c.h.b16 %v126
    %v1080 = vunpack.c.l.b16 %v127
    %v1081 = vunpack.c.h.b16 %v127
    %v1082 = vunpack.c.l.b16 %v128
    %v1083 = vunpack.c.h.b16 %v128
    %v1084 = vunpack.c.l.b16 %v129
    %v1085 = vunpack.c.h.b16 %v129
    %v1086 = vunpack.c.l.b16 %v130
    %v1087 = vunpack.c.h.b16 %v130
    %v1088 = vunpack.c.l.b16 %v131
    %v1089 = vunpack.c.h.b16 %v131
    %v1090 = vunpack.c.l.b16 %v132
    %v1091 = vunpack.c.h.b16 %v132
    %v1092 = vunpack.c.l.b16 %v133
    %v1093 = vunpack.c.h.b16 %v133
    %v1094 = vunpack.c.l.b16 %v134
    %v1095 = vunpack.c.h.b16 %v134
    %v1096 = vunpack.c.l.b16 %v135
    %v1097 = vunpack.c.h.b16 %v135
    %v1098 = vpack.c.b16 %v1048, %v998
    %v1099 = vpack.c.b16 %v1049, %v999
    %v1100 = vpack.c.b16 %v1050, %v1000
    %v1101 = vpack.c.b16 %v1051, %v1001
    %v1102 = vpack.c.b16 %v1052, %v1002
    %v1103 = vpack.c.b16 %v1053, %v1003
    %v1104 = vpack.c.b16 %v1054, %v1004
    %v1105 = vpack.c.b16 %v1055, %v1005
    %v1106 = vpack.c.b16 %v1056, %v1006
    %v1107 = vpack.c.b16 %v1057, %v1007
    %v1108 = vpack.c.b16 %v1058, %v1008
    %v1109 = vpack.c.b16 %v1059, %v1009
    %v1110 = vpack.c.b16 %v1060, %v1010
    %v1111 = vpack.c.b16 %v1061, %v1011
    %v1112 = vpack.c.b16 %v1062, %v1012
    %v1113 = vpack.c.b16 %v1063, %v1013
    %v1114 = vpack.c.b16 %v1064, %v1014
    %v1115 = vpack.c.b16 %v1065, %v1015
    %v1116 = vpack.c.b16 %v1066, %v1016
    %v1117 = vpack.c.b16 %v1067, %v1017
    %v1118 = vpack.c.b16 %v1068, %v1018
    %v1119 = vpack.c.b16 %v1069, %v1019
    %v1120 = vpack.c.b16 %v1070, %v1020
    %v1121 = vpack.c.b16 %v1071, %v1021
    %v1122 = vpack.c.b16 %v1072, %v1022
    %v1123 = vpack.c.b16 %v1073, %v1023
    %v1124 = vpack.c.b16 %v1074, %v1024
    %v1125 = vpack.c.b16 %v1075, %v1025
    %v1126 = vpack.c.b16 %v1076, %v1026
    %v1127 = vpack.c.b16 %v1077, %v1027
    %v1128 = vpack.c.b16 %v1078, %v1028
    %v1129 = vpack.c.b16 %v1079, %v1029
    %v1130 = vpack.c.b16 %v1080, %v1030
    %v1131 = vpack.c.b16 %v1081, %v1031
    %v1132 = vpack.c.b16 %v1082, %v1032
    %v1133 = vpack.c.b16 %v1083, %v1033
    %v1134 = vpack.c.b16 %v1084, %v1034
    %v1135 = vpack.c.b16 %v1085, %v1035
    %v1136 = vpack.c.b16 %v1086, %v1036
    %v1137 = vpack.c.b16 %v1087, %v1037
    %v1138 = vpack.c.b16 %v1088, %v1038
    %v1139 = vpack.c.b16 %v1089, %v1039
    %v1140 = vpack.c.b16 %v1090, %v1040
    %v1141 = vpack.c.b16 %v1091, %v1041
    %v1142 = vpack.c.b16 %v1092, %v1042
    %v1143 = vpack.c.b16 %v1093, %v1043
    %v1144 = vpack.c.b16 %v1094, %v1044
    %v1145 = vpack.c.b16 %v1095, %v1045
    %v1146 = vpack.c.b16 %v1096, %v1046
    %v1147 = vpack.c.b16 %v1097, %v1047
    %v1998 = vunpack.c.l.b16 %v136
    %v1999 = vunpack.c.h.b16 %v136
    %v2000 = vunpack.c.l.b16 %v137
    %v2001 = vunpack.c.h.b16 %v137
    %v2002 = vunpack.c.l.b16 %v138
    %v2003 = vunpack.c.h.b16 %v138
    %v2004 = vunpack.c.l.b16 %v139
    %v2005 = vunpack.c.h.b16 %v139
    %v2006 = vunpack.c.l.b16 %v140
    %v2007 = vunpack.c.h.b16 %v140
    %v2008 = vunpack.c.l.b16 %v141
    %v2009 = vunpack.c.h.b16 %v141
    %v2010 = vunpack.c.l.b16 %v142
    %v2011 = vunpack.c.h.b16 %v142
    %v2012 = vunpack.c.l.b16 %v143
    %v2013 = vunpack.c.h.b16 %v143
    %v2014 = vunpack.c.l.b16 %v144
    %v2015 = vunpack.c.h.b16 %v144
    %v2016 = vunpack.c.l.b16 %v145
    %v2017 = vunpack.c.h.b16 %v145
    %v2018 = vunpack.c.l.b16 %v146
    %v2019 = vunpack.c.h.b16 %v146
    %v2020 = vunpack.c.l.b16 %v147
    %v2021 = vunpack.c.h.b16 %v147
    %v2022 = vunpack.c.l.b16 %v148
    %v2023 = vunpack.c.h.b16 %v148
    %v2024 = vunpack.c.l.b16 %v149
    %v2025 = vunpack.c.h.b16 %v149
    %v2026 = vunpack.c.l.b16 %v150
    %v2027 = vunpack.c.h.b16 %v150
    %v2028 = vunpack.c.l.b16 %v151
    %v2029 = vunpack.c.h.b16 %v151
    %v2030 = vunpack.c.l.b16 %v152
    %v2031 = vunpack.c.h.b16 %v152
    %v2032 = vunpack.c.l.b16 %v153
    %v2033 = vunpack.c.h.b16 %v153
    %v2034 = vunpack.c.l.b16 %v154
    %v2035 = vunpack.c.h.b16 %v154
    %v2036 = vunpack.c.l.b16 %v155
    %v2037 = vunpack.c.h.b16 %v155
    %v2038 = vunpack.c.l.b16 %v156
    %v2039 = vunpack.c.h.b16 %v156
    %v2040 = vunpack.c.l.b16 %v157
    %v2041 = vunpack.c.h.b16 %v157
    %v2042 = vunpack.c.l.b16 %v158
    %v2043 = vunpack.c.h.b16 %v158
    %v2044 = vunpack.c.l.b16 %v159
    %v2045 = vunpack.c.h.b16 %v159
    %v2046 = vunpack.c.l.b16 %v160
    %v2047 = vunpack.c.h.b16 %v160
    %v2048 = vunpack.c.l.b16 %v161
    %v2049 = vunpack.c.h.b16 %v161
    %v2050 = vunpack.c.l.b16 %v162
    %v2051 = vunpack.c.h.b16 %v162
    %v2052 = vunpack.c.l.b16 %v163
    %v2053 = vunpack.c.h.b16 %v163
    %v2054 = vunpack.c.l.b16 %v164
    %v2055 = vunpack.c.h.b16 %v164
    %v2056 = vunpack.c.l.b16 %v165
    %v2057 = vunpack.c.h.b16 %v165
    %v2058 = vunpack.c.l.b16 %v166
    %v2059 = vunpack.c.h.b16 %v166
    %v2060 = vunpack.c.l.b16 %v167
    %v2061 = vunpack.c.h.b16 %v167
    %v2062 = vunpack.c.l.b16 %v168
    %v2063 = vunpack.c.h.b16 %v168
    %v2064 = vunpack.c.l.b16 %v169
    %v2065 = vunpack.c.h.b16 %v169
    %v2066 = vunpack.c.l.b16 %v170
    %v2067 = vunpack.c.h.b16 %v170
    %v2068 = vunpack.c.l.b16 %v171
    %v2069 = vunpack.c.h.b16 %v171
    %v2070 = vunpack.c.l.b16 %v172
    %v2071 = vunpack.c.h.b16 %v172
    %v2072 = vunpack.c.l.b16 %v173
    %v2073 = vunpack.c.h.b16 %v173
    %v2074 = vunpack.c.l.b16 %v174
    %v2075 = vunpack.c.h.b16 %v174
    %v2076 = vunpack.c.l.b16 %v175
    %v2077 = vunpack.c.h.b16 %v175
    %v2078 = vunpack.c.l.b16 %v176
    %v2079 = vunpack.c.h.b16 %v176
    %v2080 = vunpack.c.l.b16 %v177
    %v2081 = vunpack.c.h.b16 %v177
    %v2082 = vunpack.c.l.b16 %v178
    %v2083 = vunpack.c.h.b16 %v178
    %v2084 = vunpack.c.l.b16 %v179
    %v2085 = vunpack.c.h.b16 %v179
    %v2086 = vunpack.c.l.b16 %v180
    %v2087 = vunpack.c.h.b16 %v180
    %v2088 = vunpack.c.l.b16 %v181
    %v2089 = vunpack.c.h.b16 %v181
    %v2090 = vunpack.c.l.b16 %v182
    %v2091 = vunpack.c.h.b16 %v182
    %v2092 = vunpack.c.l.b16 %v183
    %v2093 = vunpack.c.h.b16 %v183
    %v2094 = vunpack.c.l.b16 %v184
    %v2095 = vunpack.c.h.b16 %v184
    %v2096 = vunpack.c.l.b16 %v185
    %v2097 = vunpack.c.h.b16 %v185
    %v2098 = vunpack.c.l.b16 %v186
    %v2099 = vunpack.c.h.b16 %v186
    %v2100 = vunpack.c.l.b16 %v187
    %v2101 = vunpack.c.h.b16 %v187
    %v2102 = vunpack.c.l.b16 %v188
    %v2103 = vunpack.c.h.b16 %v188
    %v2104 = vunpack.c.l.b16 %v189
    %v2105 = vunpack.c.h.b16 %v189
    %v2106 = vunpack.c.l.b16 %v190
    %v2107 = vunpack.c.h.b16 %v190
    %v2108 = vunpack.c.l.b16 %v191
    %v2109 = vunpack.c.h.b16 %v191
    %v2110 = vunpack.c.l.b16 %v192
    %v2111 = vunpack.c.h.b16 %v192
    %v2112 = vunpack.c.l.b16 %v193
    %v2113 = vunpack.c.h.b16 %v193
    %v2114 = vunpack.c.l.b16 %v194
    %v2115 = vunpack.c.h.b16 %v194
    %v2116 = vunpack.c.l.b16 %v195
    %v2117 = vunpack.c.h.b16 %v195
    %v2118 = vunpack.c.l.b16 %v196
    %v2119 = vunpack.c.h.b16 %v196
    %v2120 = vunpack.c.l.b16 %v197
    %v2121 = vunpack.c.h.b16 %v197
    %v2122 = vunpack.c.l.b16 %v198
    %v2123 = vunpack.c.h.b16 %v198
    %v2124 = vunpack.c.l.b16 %v199
    %v2125 = vunpack.c.h.b16 %v199
    %v2126 = vunpack.c.l.b16 %v200
    %v2127 = vunpack.c.h.b16 %v200
    %v2128 = vunpack.c.l.b16 %v201
    %v2129 = vunpack.c.h.b16 %v201
    %v2130 = vunpack.c.l.b16 %v202
    %v2131 = vunpack.c.h.b16 %v202
    %v2132 = vunpack.c.l.b16 %v203
    %v2133 = vunpack.c.h.b16 %v203
    %v2134 = vunpack.c.l.b16 %v204
    %v2135 = vunpack.c.h.b16 %v204
    %v2136 = vunpack.c.l.b16 %v205
    %v2137 = vunpack.c.h.b16 %v205
    %v2138 = vunpack.c.l.b16 %v206
    %v2139 = vunpack.c.h.b16 %v206
    %v2140 = vunpack.c.l.b16 %v207
    %v2141 = vunpack.c.h.b16 %v207
    %v2142 = vunpack.c.l.b16 %v208
    %v2143 = vunpack.c.h.b16 %v208
    %v2144 = vunpack.c.l.b16 %v209
    %v2145 = vunpack.c.h.b16 %v209
    %v2146 = vunpack.c.l.b16 %v210
    %v2147 = vunpack.c.h.b16 %v210
    %v2148 = vunpack.c.l.b16 %v211
    %v2149 = vunpack.c.h.b16 %v211
    %v2150 = vunpack.c.l.b16 %v212
    %v2151 = vunpack.c.h.b16 %v212
    %v2152 = vunpack.c.l.b16 %v213
    %v2153 = vunpack.c.h.b16 %v213
    %v2154 = vunpack.c.l.b16 %v214
    %v2155 = vunpack.c.h.b16 %v214
    %v2156 = vunpack.c.l.b16 %v215
    %v2157 = vunpack.c.h.b16 %v215
    %v2158 = vunpack.c.l.b16 %v216
    %v2159 = vunpack.c.h.b16 %v216
    %v2160 = vunpack.c.l.b16 %v217
    %v2161 = vunpack.c.h.b16 %v217
    %v2162 = vunpack.c.l.b16 %v218
    %v2163 = vunpack.c.h.b16 %v218
    %v2164 = vunpack.c.l.b16 %v219
    %v2165 = vunpack.c.h.b16 %v219
    %v2166 = vunpack.c.l.b16 %v220
    %v2167 = vunpack.c.h.b16 %v220
    %v2168 = vunpack.c.l.b16 %v221
    %v2169 = vunpack.c.h.b16 %v221
    %v2170 = vunpack.c.l.b16 %v222
    %v2171 = vunpack.c.h.b16 %v222
    %v2172 = vunpack.c.l.b16 %v223
    %v2173 = vunpack.c.h.b16 %v223
    %v2174 = vunpack.c.l.b16 %v224
    %v2175 = vunpack.c.h.b16 %v224
    %v2176 = vunpack.c.l.b16 %v225
    %v2177 = vunpack.c.h.b16 %v225
    %v2178 = vunpack.c.l.b16 %v226
    %v2179 = vunpack.c.h.b16 %v226
    %v2180 = vunpack.c.l.b16 %v227
    %v2181 = vunpack.c.h.b16 %v227
    %v2182 = vunpack.c.l.b16 %v228
    %v2183 = vunpack.c.h.b16 %v228
    %v2184 = vunpack.c.l.b16 %v229
    %v2185 = vunpack.c.h.b16 %v229
    %v2186 = vunpack.c.l.b16 %v230
    %v2187 = vunpack.c.h.b16 %v230
    %v2188 = vunpack.c.l.b16 %v231
    %v2189 = vunpack.c.h.b16 %v231
    %v2190 = vunpack.c.l.b16 %v232
    %v2191 = vunpack.c.h.b16 %v232
    %v2192 = vunpack.c.l.b16 %v233
    %v2193 = vunpack.c.h.b16 %v233
    %v2194 = vunpack.c.l.b16 %v234
    %v2195 = vunpack.c.h.b16 %v234
    %v2196 = vunpack.c.l.b16 %v235
    %v2197 = vunpack.c.h.b16 %v235
    %v2198 = vunpack.c.l.b16 %v236
    %v2199 = vunpack.c.h.b16 %v236
    %v2200 = vunpack.c.l.b16 %v237
    %v2201 = vunpack.c.h.b16 %v237
    %v2202 = vunpack.c.l.b16 %v238
    %v2203 = vunpack.c.h.b16 %v238
    %v2204 = vunpack.c.l.b16 %v239
    %v2205 = vunpack.c.h.b16 %v239
    %v2206 = vunpack.c.l.b16 %v240
    %v2207 = vunpack.c.h.b16 %v240
    %v2208 = vunpack.c.l.b16 %v241
    %v2209 = vunpack.c.h.b16 %v241
    %v2210 = vunpack.c.l.b16 %v242
    %v2211 = vunpack.c.h.b16 %v242
    %v2212 = vunpack.c.l.b16 %v243
    %v2213 = vunpack.c.h.b16 %v243
    %v2214 = vunpack.c.l.b16 %v244
    %v2215 = vunpack.c.h.b16 %v244
    %v2216 = vunpack.c.l.b16 %v245
    %v2217 = vunpack.c.h.b16 %v245
    %v2218 = vunpack.c.l.b16 %v246
    %v2219 = vunpack.c.h.b16 %v246
    %v2220 = vunpack.c.l.b16 %v247
    %v2221 = vunpack.c.h.b16 %v247
    %v2222 = vunpack.c.l.b16 %v248
    %v2223 = vunpack.c.h.b16 %v248
    %v2224 = vunpack.c.l.b16 %v249
    %v2225 = vunpack.c.h.b16 %v249
    %v2226 = vunpack.c.l.b16 %v250
    %v2227 = vunpack.c.h.b16 %v250
    %v2228 = vunpack.c.l.b16 %v251
    %v2229 = vunpack.c.h.b16 %v251
    %v2230 = vunpack.c.l.b16 %v252
    %v2231 = vunpack.c.h.b16 %v252
    %v2232 = vunpack.c.l.b16 %v253
    %v2233 = vunpack.c.h.b16 %v253
    %v2234 = vunpack.c.l.b16 %v254
    %v2235 = vunpack.c.h.b16 %v254
    %v2236 = vunpack.c.l.b16 %v255
    %v2237 = vunpack.c.h.b16 %v255
    %v2238 = vunpack.c.l.b16 %v256
    %v2239 = vunpack.c.h.b16 %v256
    %v2240 = vunpack.c.l.b16 %v257
    %v2241 = vunpack.c.h.b16 %v257
    %v2242 = vunpack.c.l.b16 %v258
    %v2243 = vunpack.c.h.b16 %v258
    %v2244 = vunpack.c.l.b16 %v259
    %v2245 = vunpack.c.h.b16 %v259
    %v2246 = vunpack.c.l.b16 %v260
    %v2247 = vunpack.c.h.b16 %v260
    %v2248 = vunpack.c.l.b16 %v261
    %v2249 = vunpack.c.h.b16 %v261
    %v2250 = vunpack.c.l.b16 %v262
    %v2251 = vunpack.c.h.b16 %v262
    %v2252 = vunpack.c.l.b16 %v263
    %v2253 = vunpack.c.h.b16 %v263
    %v2254 = vunpack.c.l.b16 %v264
    %v2255 = vunpack.c.h.b16 %v264
    %v2256 = vunpack.c.l.b16 %v265
    %v2257 = vunpack.c.h.b16 %v265
    %v2258 = vunpack.c.l.b16 %v266
    %v2259 = vunpack.c.h.b16 %v266
    %v2260 = vunpack.c.l.b16 %v267
    %v2261 = vunpack.c.h.b16 %v267
    %v2262 = vunpack.c.l.b16 %v268
    %v2263 = vunpack.c.h.b16 %v268
    %v2264 = vunpack.c.l.b16 %v269
    %v2265 = vunpack.c.h.b16 %v269
    %v2266 = vunpack.c.l.b16 %v270
    %v2267 = vunpack.c.h.b16 %v270
    %v2268 = vunpack.c.l.b16 %v271
    %v2269 = vunpack.c.h.b16 %v271
    %v2270 = vunpack.c.l.b16 %v272
    %v2271 = vunpack.c.h.b16 %v272
    %v2272 = vunpack.c.l.b16 %v273
    %v2273 = vunpack.c.h.b16 %v273
    %v2274 = vunpack.c.l.b16 %v274
    %v2275 = vunpack.c.h.b16 %v274
    %v2276 = vunpack.c.l.b16 %v275
    %v2277 = vunpack.c.h.b16 %v275
    %v2278 = vunpack.c.l.b16 %v276
    %v2279 = vunpack.c.h.b16 %v276
    %v2280 = vunpack.c.l.b16 %v277
    %v2281 = vunpack.c.h.b16 %v277
    %v2282 = vunpack.c.l.b16 %v278
    %v2283 = vunpack.c.h.b16 %v278
    %v2284 = vunpack.c.l.b16 %v279
    %v2285 = vunpack.c.h.b16 %v279
    %v2286 = vunpack.c.l.b16 %v280
    %v2287 = vunpack.c.h.b16 %v280
    %v2288 = vunpack.c.l.b16 %v281
    %v2289 = vunpack.c.h.b16 %v281
    %v2290 = vunpack.c.l.b16 %v282
    %v2291 = vunpack.c.h.b16 %v282
    %v2292 = vunpack.c.l.b16 %v283
    %v2293 = vunpack.c.h.b16 %v283
    %v2294 = vunpack.c.l.b16 %v284
    %v2295 = vunpack.c.h.b16 %v284
    %v2296 = vunpack.c.l.b16 %v285
    %v2297 = vunpack.c.h.b16 %v285
    %v2298 = vunpack.c.l.b16 %v286
    %v2299 = vunpack.c.h.b16 %v286
    %v2300 = vunpack.c.l.b16 %v287
    %v2301 = vunpack.c.h.b16 %v287
    %v2302 = vunpack.c.l.b16 %v288
    %v2303 = vunpack.c.h.b16 %v288
    %v2304 = vunpack.c.l.b16 %v289
    %v2305 = vunpack.c.h.b16 %v289
    %v2306 = vunpack.c.l.b16 %v290
    %v2307 = vunpack.c.h.b16 %v290
    %v2308 = vunpack.c.l.b16 %v291
    %v2309 = vunpack.c.h.b16 %v291
    %v2310 = vunpack.c.l.b16 %v292
    %v2311 = vunpack.c.h.b16 %v292
    %v2312 = vunpack.c.l.b16 %v293
    %v2313 = vunpack.c.h.b16 %v293
    %v2314 = vunpack.c.l.b16 %v294
    %v2315 = vunpack.c.h.b16 %v294
    %v2316 = vunpack.c.l.b16 %v295
    %v2317 = vunpack.c.h.b16 %v295
    %v2318 = vunpack.c.l.b16 %v296
    %v2319 = vunpack.c.h.b16 %v296
    %v2320 = vunpack.c.l.b16 %v297
    %v2321 = vunpack.c.h.b16 %v297
    %v2322 = vunpack.c.l.b16 %v298
    %v2323 = vunpack.c.h.b16 %v298
    %v2324 = vunpack.c.l.b16 %v299
    %v2325 = vunpack.c.h.b16 %v299
    %v2326 = vunpack.c.l.b16 %v300
    %v2327 = vunpack.c.h.b16 %v300
    %v2328 = vunpack.c.l.b16 %v301
    %v2329 = vunpack.c.h.b16 %v301
    %v2330 = vunpack.c.l.b16 %v302
    %v2331 = vunpack.c.h.b16 %v302
    %v2332 = vunpack.c.l.b16 %v303
    %v2333 = vunpack.c.h.b16 %v303
    %v2334 = vunpack.c.l.b16 %v304
    %v2335 = vunpack.c.h.b16 %v304
    %v2336 = vunpack.c.l.b16 %v305
    %v2337 = vunpack.c.h.b16 %v305
    %v2338 = vunpack.c.l.b16 %v306
    %v2339 = vunpack.c.h.b16 %v306
    %v2340 = vunpack.c.l.b16 %v307
    %v2341 = vunpack.c.h.b16 %v307
    %v2342 = vunpack.c.l.b16 %v308
    %v2343 = vunpack.c.h.b16 %v308
    %v2344 = vunpack.c.l.b16 %v309
    %v2345 = vunpack.c.h.b16 %v309
    %v2346 = vunpack.c.l.b16 %v310
    %v2347 = vunpack.c.h.b16 %v310
    %v2348 = vunpack.c.l.b16 %v311
    %v2349 = vunpack.c.h.b16 %v311
    %v2350 = vunpack.c.l.b16 %v312
    %v2351 = vunpack.c.h.b16 %v312
    %v2352 = vunpack.c.l.b16 %v313
    %v2353 = vunpack.c.h.b16 %v313
    %v2354 = vunpack.c.l.b16 %v314
    %v2355 = vunpack.c.h.b16 %v314
    %v2356 = vunpack.c.l.b16 %v315
    %v2357 = vunpack.c.h.b16 %v315
    %v2358 = vunpack.c.l.b16 %v316
    %v2359 = vunpack.c.h.b16 %v316
    %v2360 = vunpack.c.l.b16 %v317
    %v2361 = vunpack.c.h.b16 %v317
    %v2362 = vunpack.c.l.b16 %v318
    %v2363 = vunpack.c.h.b16 %v318
    %v2364 = vunpack.c.l.b16 %v319
    %v2365 = vunpack.c.h.b16 %v319
    %v2366 = vunpack.c.l.b16 %v320
    %v2367 = vunpack.c.h.b16 %v320
    %v2368 = vunpack.c.l.b16 %v321
    %v2369 = vunpack.c.h.b16 %v321
    %v2370 = vunpack.c.l.b16 %v322
    %v2371 = vunpack.c.h.b16 %v322
    %v2372 = vunpack.c.l.b16 %v323
    %v2373 = vunpack.c.h.b16 %v323
    %v2374 = vunpack.c.l.b16 %v324
    %v2375 = vunpack.c.h.b16 %v324
    %v2376 = vunpack.c.l.b16 %v325
    %v2377 = vunpack.c.h.b16 %v325
    %v2378 = vunpack.c.l.b16 %v326
    %v2379 = vunpack.c.h.b16 %v326
    %v2380 = vunpack.c.l.b16 %v327
    %v2381 = vunpack.c.h.b16 %v327
    %v2382 = vunpack.c.l.b16 %v328
    %v2383 = vunpack.c.h.b16 %v328
    %v2384 = vunpack.c.l.b16 %v329
    %v2385 = vunpack.c.h.b16 %v329
    %v2386 = vunpack.c.l.b16 %v330
    %v2387 = vunpack.c.h.b16 %v330
    %v2388 = vunpack.c.l.b16 %v331
    %v2389 = vunpack.c.h.b16 %v331
    %v2390 = vunpack.c.l.b16 %v332
    %v2391 = vunpack.c.h.b16 %v332
    %v2392 = vunpack.c.l.b16 %v333
    %v2393 = vunpack.c.h.b16 %v333
    %v2394 = vunpack.c.l.b16 %v334
    %v2395 = vunpack.c.h.b16 %v334
    %v2396 = vunpack.c.l.b16 %v335
    %v2397 = vunpack.c.h.b16 %v335
    %v2398 = vunpack.c.l.b16 %v336
    %v2399 = vunpack.c.h.b16 %v336
    %v2400 = vunpack.c.l.b16 %v337
    %v2401 = vunpack.c.h.b16 %v337
    %v2402 = vunpack.c.l.b16 %v338
    %v2403 = vunpack.c.h.b16 %v338
    %v2404 = vunpack.c.l.b16 %v339
    %v2405 = vunpack.c.h.b16 %v339
    %v2406 = vunpack.c.l.b16 %v340
    %v2407 = vunpack.c.h.b16 %v340
    %v2408 = vunpack.c.l.b16 %v341
    %v2409 = vunpack.c.h.b16 %v341
    %v2410 = vunpack.c.l.b16 %v342
    %v2411 = vunpack.c.h.b16 %v342
    %v2412 = vunpack.c.l.b16 %v343
    %v2413 = vunpack.c.h.b16 %v343
    %v2414 = vunpack.c.l.b16 %v344
    %v2415 = vunpack.c.h.b16 %v344
    %v2416 = vunpack.c.l.b16 %v345
    %v2417 = vunpack.c.h.b16 %v345
    %v2418 = vunpack.c.l.b16 %v346
    %v2419 = vunpack.c.h.b16 %v346
    %v2420 = vunpack.c.l.b16 %v347
    %v2421 = vunpack.c.h.b16 %v347
    %v2422 = vunpack.c.l.b16 %v348
    %v2423 = vunpack.c.h.b16 %v348
    %v2424 = vunpack.c.l.b16 %v349
    %v2425 = vunpack.c.h.b16 %v349
    %v2426 = vunpack.c.l.b16 %v350
    %v2427 = vunpack.c.h.b16 %v350
    %v2428 = vunpack.c.l.b16 %v351
    %v2429 = vunpack.c.h.b16 %v351
    %v2430 = vunpack.c.l.b16 %v352
    %v2431 = vunpack.c.h.b16 %v352
    %v2432 = vunpack.c.l.b16 %v353
    %v2433 = vunpack.c.h.b16 %v353
    %v2434 = vunpack.c.l.b16 %v354
    %v2435 = vunpack.c.h.b16 %v354
    %v2436 = vunpack.c.l.b16 %v355
    %v2437 = vunpack.c.h.b16 %v355
    %v2438 = vunpack.c.l.b16 %v356
    %v2439 = vunpack.c.h.b16 %v356
    %v2440 = vunpack.c.l.b16 %v357
    %v2441 = vunpack.c.h.b16 %v357
    %v2442 = vunpack.c.l.b16 %v358
    %v2443 = vunpack.c.h.b16 %v358
    %v2444 = vunpack.c.l.b16 %v359
    %v2445 = vunpack.c.h.b16 %v359
    %v2446 = vunpack.c.l.b16 %v360
    %v2447 = vunpack.c.h.b16 %v360
    %v2448 = vunpack.c.l.b16 %v361
    %v2449 = vunpack.c.h.b16 %v361
    %v2450 = vunpack.c.l.b16 %v362
    %v2451 = vunpack.c.h.b16 %v362
    %v2452 = vunpack.c.l.b16 %v363
    %v2453 = vunpack.c.h.b16 %v363
    %v2454 = vunpack.c.l.b16 %v364
    %v2455 = vunpack.c.h.b16 %v364
    %v2456 = vunpack.c.l.b16 %v365
    %v2457 = vunpack.c.h.b16 %v365
    %v2458 = vunpack.c.l.b16 %v366
    %v2459 = vunpack.c.h.b16 %v366
    %v2460 = vunpack.c.l.b16 %v367
    %v2461 = vunpack.c.h.b16 %v367
    %v2462 = vunpack.c.l.b16 %v368
    %v2463 = vunpack.c.h.b16 %v368
    %v2464 = vunpack.c.l.b16 %v369
    %v2465 = vunpack.c.h.b16 %v369
    %v2466 = vunpack.c.l.b16 %v370
    %v2467 = vunpack.c.h.b16 %v370
    %v2468 = vunpack.c.l.b16 %v371
    %v2469 = vunpack.c.h.b16 %v371
    %v2470 = vunpack.c.l.b16 %v372
    %v2471 = vunpack.c.h.b16 %v372
    %v2472 = vunpack.c.l.b16 %v373
    %v2473 = vunpack.c.h.b16 %v373
    %v2474 = vunpack.c.l.b16 %v374
    %v2475 = vunpack.c.h.b16 %v374
    %v2476 = vunpack.c.l.b16 %v375
    %v2477 = vunpack.c.h.b16 %v375
    %v2478 = vunpack.c.l.b16 %v376
    %v2479 = vunpack.c.h.b16 %v376
    %v2480 = vunpack.c.l.b16 %v377
    %v2481 = vunpack.c.h.b16 %v377
    %v2482 = vunpack.c.l.b16 %v378
    %v2483 = vunpack.c.h.b16 %v378
    %v2484 = vunpack.c.l.b16 %v379
    %v2485 = vunpack.c.h.b16 %v379
    %v2486 = vunpack.c.l.b16 %v380
    %v2487 = vunpack.c.h.b16 %v380
    %v2488 = vunpack.c.l.b16 %v381
    %v2489 = vunpack.c.h.b16 %v381
    %v2490 = vunpack.c.l.b16 %v382
    %v2491 = vunpack.c.h.b16 %v382
    %v2492 = vunpack.c.l.b16 %v383
    %v2493 = vunpack.c.h.b16 %v383
    %v2494 = vunpack.c.l.b16 %v384
    %v2495 = vunpack.c.h.b16 %v384
    %v2496 = vunpack.c.l.b16 %v385
    %v2497 = vunpack.c.h.b16 %v385
    %v2498 = vunpack.c.l.b16 %v386
    %v2499 = vunpack.c.h.b16 %v386
    %v2500 = vunpack.c.l.b16 %v387
    %v2501 = vunpack.c.h.b16 %v387
    %v2502 = vunpack.c.l.b16 %v388
    %v2503 = vunpack.c.h.b16 %v388
    %v2504 = vunpack.c.l.b16 %v389
    %v2505 = vunpack.c.h.b16 %v389
    %v2506 = vunpack.c.l.b16 %v390
    %v2507 = vunpack.c.h.b16 %v390
    %v2508 = vunpack.c.l.b16 %v391
    %v2509 = vunpack.c.h.b16 %v391
    %v2510 = vunpack.c.l.b16 %v392
    %v2511 = vunpack.c.h.b16 %v392
    %v2512 = vunpack.c.l.b16 %v393
    %v2513 = vunpack.c.h.b16 %v393
    %v2514 = vunpack.c.l.b16 %v394
    %v2515 = vunpack.c.h.b16 %v394
    %v2516 = vunpack.c.l.b16 %v395
    %v2517 = vunpack.c.h.b16 %v395
    %v2518 = vunpack.c.l.b16 %v396
    %v2519 = vunpack.c.h.b16 %v396
    %v2520 = vunpack.c.l.b16 %v397
    %v2521 = vunpack.c.h.b16 %v397
    %v2522 = vunpack.c.l.b16 %v398
    %v2523 = vunpack.c.h.b16 %v398
    %v2524 = vunpack.c.l.b16 %v399
    %v2525 = vunpack.c.h.b16 %v399
    %v2526 = vunpack.c.l.b16 %v400
    %v2527 = vunpack.c.h.b16 %v400
    %v2528 = vunpack.c.l.b16 %v401
    %v2529 = vunpack.c.h.b16 %v401
    %v2530 = vunpack.c.l.b16 %v402
    %v2531 = vunpack.c.h.b16 %v402
    %v2532 = vunpack.c.l.b16 %v403
    %v2533 = vunpack.c.h.b16 %v403
    %v2534 = vunpack.c.l.b16 %v404
    %v2535 = vunpack.c.h.b16 %v404
    %v2536 = vunpack.c.l.b16 %v405
    %v2537 = vunpack.c.h.b16 %v405
    %v2538 = vunpack.c.l.b16 %v406
    %v2539 = vunpack.c.h.b16 %v406
    %v2540 = vunpack.c.l.b16 %v407
    %v2541 = vunpack.c.h.b16 %v407
    %v2542 = vunpack.c.l.b16 %v408
    %v2543 = vunpack.c.h.b16 %v408
    %v2544 = vunpack.c.l.b16 %v409
    %v2545 = vunpack.c.h.b16 %v409
    %v2546 = vunpack.c.l.b16 %v410
    %v2547 = vunpack.c.h.b16 %v410
    %v2548 = vunpack.c.l.b16 %v411
    %v2549 = vunpack.c.h.b16 %v411
    %v2550 = vunpack.c.l.b16 %v412
    %v2551 = vunpack.c.h.b16 %v412
    %v2552 = vunpack.c.l.b16 %v413
    %v2553 = vunpack.c.h.b16 %v413
    %v2554 = vunpack.c.l.b16 %v414
    %v2555 = vunpack.c.h.b16 %v414
    %v2556 = vunpack.c.l.b16 %v415
    %v2557 = vunpack.c.h.b16 %v415
    %v2558 = vunpack.c.l.b16 %v416
    %v2559 = vunpack.c.h.b16 %v416
    %v2560 = vunpack.c.l.b16 %v417
    %v2561 = vunpack.c.h.b16 %v417
    %v2562 = vunpack.c.l.b16 %v418
    %v2563 = vunpack.c.h.b16 %v418
    %v2564 = vunpack.c.l.b16 %v419
    %v2565 = vunpack.c.h.b16 %v419
    %v2566 = vunpack.c.l.b16 %v420
    %v2567 = vunpack.c.h.b16 %v420
    %v2568 = vunpack.c.l.b16 %v421
    %v2569 = vunpack.c.h.b16 %v421
    %v2570 = vunpack.c.l.b16 %v422
    %v2571 = vunpack.c.h.b16 %v422
    %v2572 = vunpack.c.l.b16 %v423
    %v2573 = vunpack.c.h.b16 %v423
    %v2574 = vunpack.c.l.b16 %v424
    %v2575 = vunpack.c.h.b16 %v424
    %v2576 = vunpack.c.l.b16 %v425
    %v2577 = vunpack.c.h.b16 %v425
    %v2578 = vunpack.c.l.b16 %v426
    %v2579 = vunpack.c.h.b16 %v426
    %v2580 = vunpack.c.l.b16 %v427
    %v2581 = vunpack.c.h.b16 %v427
    %v2582 = vunpack.c.l.b16 %v428
    %v2583 = vunpack.c.h.b16 %v428
    %v2584 = vunpack.c.l.b16 %v429
    %v2585 = vunpack.c.h.b16 %v429
    %v2586 = vunpack.c.l.b16 %v430
    %v2587 = vunpack.c.h.b16 %v430
    %v2588 = vunpack.c.l.b16 %v431
    %v2589 = vunpack.c.h.b16 %v431
    %v2590 = vunpack.c.l.b16 %v432
    %v2591 = vunpack.c.h.b16 %v432
    %v2592 = vunpack.c.l.b16 %v433
    %v2593 = vunpack.c.h.b16 %v433
    %v2594 = vunpack.c.l.b16 %v434
    %v2595 = vunpack.c.h.b16 %v434
    %v2596 = vunpack.c.l.b16 %v435
    %v2597 = vunpack.c.h.b16 %v435
    %v2598 = vunpack.c.l.b16 %v436
    %v2599 = vunpack.c.h.b16 %v436
    %v2600 = vunpack.c.l.b16 %v437
    %v2601 = vunpack.c.h.b16 %v437
    %v2602 = vunpack.c.l.b16 %v438
    %v2603 = vunpack.c.h.b16 %v438
    %v2604 = vunpack.c.l.b16 %v439
    %v2605 = vunpack.c.h.b16 %v439
    %v2606 = vunpack.c.l.b16 %v440
    %v2607 = vunpack.c.h.b16 %v440
    %v2608 = vunpack.c.l.b16 %v441
    %v2609 = vunpack.c.h.b16 %v441
    %v2610 = vunpack.c.l.b16 %v442
    %v2611 = vunpack.c.h.b16 %v442
    %v2612 = vunpack.c.l.b16 %v443
    %v2613 = vunpack.c.h.b16 %v443
    %v2614 = vunpack.c.l.b16 %v444
    %v2615 = vunpack.c.h.b16 %v444
    %v2616 = vunpack.c.l.b16 %v445
    %v2617 = vunpack.c.h.b16 %v445
    %v2618 = vunpack.c.l.b16 %v446
    %v2619 = vunpack.c.h.b16 %v446
    %v2620 = vunpack.c.l.b16 %v447
    %v2621 = vunpack.c.h.b16 %v447
    %v2622 = vunpack.c.l.b16 %v448
    %v2623 = vunpack.c.h.b16 %v448
    %v2624 = vunpack.c.l.b16 %v449
    %v2625 = vunpack.c.h.b16 %v449
    %v2626 = vunpack.c.l.b16 %v450
    %v2627 = vunpack.c.h.b16 %v450
    %v2628 = vunpack.c.l.b16 %v451
    %v2629 = vunpack.c.h.b16 %v451
    %v2630 = vunpack.c.l.b16 %v452
    %v2631 = vunpack.c.h.b16 %v452
    %v2632 = vunpack.c.l.b16 %v453
    %v2633 = vunpack.c.h.b16 %v453
    %v2634 = vunpack.c.l.b16 %v454
    %v2635 = vunpack.c.h.b16 %v454
    %v2636 = vunpack.c.l.b16 %v455
    %v2637 = vunpack.c.h.b16 %v455
    %v2638 = vunpack.c.l.b16 %v456
    %v2639 = vunpack.c.h.b16 %v456
    %v2640 = vunpack.c.l.b16 %v457
    %v2641 = vunpack.c.h.b16 %v457
    %v2642 = vunpack.c.l.b16 %v458
    %v2643 = vunpack.c.h.b16 %v458
    %v2644 = vunpack.c.l.b16 %v459
    %v2645 = vunpack.c.h.b16 %v459
    %v2646 = vunpack.c.l.b16 %v460
    %v2647 = vunpack.c.h.b16 %v460
    %v2648 = vunpack.c.l.b16 %v461
    %v2649 = vunpack.c.h.b16 %v461
    %v2650 = vunpack.c.l.b16 %v462
    %v2651 = vunpack.c.h.b16 %v462
    %v2652 = vunpack.c.l.b16 %v463
    %v2653 = vunpack.c.h.b16 %v463
    %v2654 = vunpack.c.l.b16 %v464
    %v2655 = vunpack.c.h.b16 %v464
    %v2656 = vunpack.c.l.b16 %v465
    %v2657 = vunpack.c.h.b16 %v465
    %v2658 = vunpack.c.l.b16 %v466
    %v2659 = vunpack.c.h.b16 %v466
    %v2660 = vunpack.c.l.b16 %v467
    %v2661 = vunpack.c.h.b16 %v467
    %v2662 = vunpack.c.l.b16 %v468
    %v2663 = vunpack.c.h.b16 %v468
    %v2664 = vunpack.c.l.b16 %v469
    %v2665 = vunpack.c.h.b16 %v469
    %v2666 = vunpack.c.l.b16 %v470
    %v2667 = vunpack.c.h.b16 %v470
    %v2668 = vunpack.c.l.b16 %v471
    %v2669 = vunpack.c.h.b16 %v471
    %v2670 = vunpack.c.l.b16 %v472
    %v2671 = vunpack.c.h.b16 %v472
    %v2672 = vunpack.c.l.b16 %v473
    %v2673 = vunpack.c.h.b16 %v473
    %v2674 = vunpack.c.l.b16 %v474
    %v2675 = vunpack.c.h.b16 %v474
    %v2676 = vunpack.c.l.b16 %v475
    %v2677 = vunpack.c.h.b16 %v475
    %v2678 = vunpack.c.l.b16 %v476
    %v2679 = vunpack.c.h.b16 %v476
    %v2680 = vunpack.c.l.b16 %v477
    %v2681 = vunpack.c.h.b16 %v477
    %v2682 = vunpack.c.l.b16 %v478
    %v2683 = vunpack.c.h.b16 %v478
    %v2684 = vunpack.c.l.b16 %v479
    %v2685 = vunpack.c.h.b16 %v479
    %v2686 = vunpack.c.l.b16 %v480
    %v2687 = vunpack.c.h.b16 %v480
    %v2688 = vunpack.c.l.b16 %v481
    %v2689 = vunpack.c.h.b16 %v481
    %v2690 = vunpack.c.l.b16 %v482
    %v2691 = vunpack.c.h.b16 %v482
    %v2692 = vunpack.c.l.b16 %v483
    %v2693 = vunpack.c.h.b16 %v483
    %v2694 = vunpack.c.l.b16 %v484
    %v2695 = vunpack.c.h.b16 %v484
    %v2696 = vunpack.c.l.b16 %v485
    %v2697 = vunpack.c.h.b16 %v485
    %v2698 = vunpack.c.l.b16 %v486
    %v2699 = vunpack.c.h.b16 %v486
    %v2700 = vunpack.c.l.b16 %v487
    %v2701 = vunpack.c.h.b16 %v487
    %v2702 = vunpack.c.l.b16 %v488
    %v2703 = vunpack.c.h.b16 %v488
    %v2704 = vunpack.c.l.b16 %v489
    %v2705 = vunpack.c.h.b16 %v489
    %v2706 = vunpack.c.l.b16 %v490
    %v2707 = vunpack.c.h.b16 %v490
    %v2708 = vunpack.c.l.b16 %v491
    %v2709 = vunpack.c.h.b16 %v491
    %v2710 = vunpack.c.l.b16 %v492
    %v2711 = vunpack.c.h.b16 %v492
    %v2712 = vunpack.c.l.b16 %v493
    %v2713 = vunpack.c.h.b16 %v493
    %v2714 = vunpack.c.l.b16 %v494
    %v2715 = vunpack.c.h.b16 %v494
    %v2716 = vunpack.c.l.b16 %v495
    %v2717 = vunpack.c.h.b16 %v495
    %v2718 = vunpack.c.l.b16 %v496
    %v2719 = vunpack.c.h.b16 %v496
    %v2720 = vunpack.c.l.b16 %v497
    %v2721 = vunpack.c.h.b16 %v497
    %v2722 = vunpack.c.l.b16 %v498
    %v2723 = vunpack.c.h.b16 %v498
    %v2724 = vunpack.c.l.b16 %v499
    %v2725 = vunpack.c.h.b16 %v499
    %v2726 = vunpack.c.l.b16 %v500
    %v2727 = vunpack.c.h.b16 %v500
    %v2728 = vunpack.c.l.b16 %v501
    %v2729 = vunpack.c.h.b16 %v501
    %v2730 = vunpack.c.l.b16 %v502
    %v2731 = vunpack.c.h.b16 %v502
    %v2732 = vunpack.c.l.b16 %v503
    %v2733 = vunpack.c.h.b16 %v503
    %v2734 = vunpack.c.l.b16 %v504
    %v2735 = vunpack.c.h.b16 %v504
    %v2736 = vunpack.c.l.b16 %v505
    %v2737 = vunpack.c.h.b16 %v505
    %v2738 = vunpack.c.l.b16 %v506
    %v2739 = vunpack.c.h.b16 %v506
    %v2740 = vunpack.c.l.b16 %v507
    %v2741 = vunpack.c.h.b16 %v507
    %v2742 = vunpack.c.l.b16 %v508
    %v2743 = vunpack.c.h.b16 %v508
    %v2744 = vunpack.c.l.b16 %v509
    %v2745 = vunpack.c.h.b16 %v509
    %v2746 = vunpack.c.l.b16 %v510
    %v2747 = vunpack.c.h.b16 %v510
    %v2748 = vunpack.c.l.b16 %v511
    %v2749 = vunpack.c.h.b16 %v511
    %v2750 = vunpack.c.l.b16 %v512
    %v2751 = vunpack.c.h.b16 %v512
    %v2752 = vunpack.c.l.b16 %v513
    %v2753 = vunpack.c.h.b16 %v513
    %v2754 = vunpack.c.l.b16 %v514
    %v2755 = vunpack.c.h.b16 %v514
    %v2756 = vunpack.c.l.b16 %v515
    %v2757 = vunpack.c.h.b16 %v515
    %v2758 = vunpack.c.l.b16 %v516
    %v2759 = vunpack.c.h.b16 %v516
    %v2760 = vunpack.c.l.b16 %v517
    %v2761 = vunpack.c.h.b16 %v517
    %v2762 = vunpack.c.l.b16 %v518
    %v2763 = vunpack.c.h.b16 %v518
    %v2764 = vunpack.c.l.b16 %v519
    %v2765 = vunpack.c.h.b16 %v519
    %v2766 = vunpack.c.l.b16 %v520
    %v2767 = vunpack.c.h.b16 %v520
    %v2768 = vunpack.c.l.b16 %v521
    %v2769 = vunpack.c.h.b16 %v521
    %v2770 = vunpack.c.l.b16 %v522
    %v2771 = vunpack.c.h.b16 %v522
    %v2772 = vunpack.c.l.b16 %v523
    %v2773 = vunpack.c.h.b16 %v523
    %v2774 = vunpack.c.l.b16 %v524
    %v2775 = vunpack.c.h.b16 %v524
    %v2776 = vunpack.c.l.b16 %v525
    %v2777 = vunpack.c.h.b16 %v525
    %v2778 = vunpack.c.l.b16 %v526
    %v2779 = vunpack.c.h.b16 %v526
    %v2780 = vunpack.c.l.b16 %v527
    %v2781 = vunpack.c.h.b16 %v527
    %v2782 = vunpack.c.l.b16 %v528
    %v2783 = vunpack.c.h.b16 %v528
    %v2784 = vunpack.c.l.b16 %v529
    %v2785 = vunpack.c.h.b16 %v529
    %v2786 = vunpack.c.l.b16 %v530
    %v2787 = vunpack.c.h.b16 %v530
    %v2788 = vunpack.c.l.b16 %v531
    %v2789 = vunpack.c.h.b16 %v531
    %v2790 = vunpack.c.l.b16 %v532
    %v2791 = vunpack.c.h.b16 %v532
    %v2792 = vunpack.c.l.b16 %v533
    %v2793 = vunpack.c.h.b16 %v533
    %v2794 = vunpack.c.l.b16 %v534
    %v2795 = vunpack.c.h.b16 %v534
    %v2796 = vunpack.c.l.b16 %v535
    %v2797 = vunpack.c.h.b16 %v535
    %v2798 = vunpack.c.l.b16 %v536
    %v2799 = vunpack.c.h.b16 %v536
    %v2800 = vunpack.c.l.b16 %v537
    %v2801 = vunpack.c.h.b16 %v537
    %v2802 = vunpack.c.l.b16 %v538
    %v2803 = vunpack.c.h.b16 %v538
    %v2804 = vunpack.c.l.b16 %v539
    %v2805 = vunpack.c.h.b16 %v539
    %v2806 = vunpack.c.l.b16 %v540
    %v2807 = vunpack.c.h.b16 %v540
    %v2808 = vunpack.c.l.b16 %v541
    %v2809 = vunpack.c.h.b16 %v541
    %v2810 = vunpack.c.l.b16 %v542
    %v2811 = vunpack.c.h.b16 %v542
    %v2812 = vunpack.c.l.b16 %v543
    %v2813 = vunpack.c.h.b16 %v543
    %v2814 = vunpack.c.l.b16 %v544
    %v2815 = vunpack.c.h.b16 %v544
    %v2816 = vunpack.c.l.b16 %v545
    %v2817 = vunpack.c.h.b16 %v545
    %v2818 = vunpack.c.l.b16 %v546
    %v2819 = vunpack.c.h.b16 %v546
    %v2820 = vunpack.c.l.b16 %v547
    %v2821 = vunpack.c.h.b16 %v547
    %v2822 = vunpack.c.l.b16 %v548
    %v2823 = vunpack.c.h.b16 %v548
    %v2824 = vunpack.c.l.b16 %v549
    %v2825 = vunpack.c.h.b16 %v549
    %v2826 = vunpack.c.l.b16 %v550
    %v2827 = vunpack.c.h.b16 %v550
    %v2828 = vunpack.c.l.b16 %v551
    %v2829 = vunpack.c.h.b16 %v551
    %v2830 = vunpack.c.l.b16 %v552
    %v2831 = vunpack.c.h.b16 %v552
    %v2832 = vunpack.c.l.b16 %v553
    %v2833 = vunpack.c.h.b16 %v553
    %v2834 = vunpack.c.l.b16 %v554
    %v2835 = vunpack.c.h.b16 %v554
    %v2836 = vunpack.c.l.b16 %v555
    %v2837 = vunpack.c.h.b16 %v555
    %v2838 = vunpack.c.l.b16 %v556
    %v2839 = vunpack.c.h.b16 %v556
    %v2840 = vunpack.c.l.b16 %v557
    %v2841 = vunpack.c.h.b16 %v557
    %v2842 = vunpack.c.l.b16 %v558
    %v2843 = vunpack.c.h.b16 %v558
    %v2844 = vunpack.c.l.b16 %v559
    %v2845 = vunpack.c.h.b16 %v559
    %v2846 = vunpack.c.l.b16 %v560
    %v2847 = vunpack.c.h.b16 %v560
    %v2848 = vunpack.c.l.b16 %v561
    %v2849 = vunpack.c.h.b16 %v561
    %v2850 = vunpack.c.l.b16 %v562
    %v2851 = vunpack.c.h.b16 %v562
    %v2852 = vunpack.c.l.b16 %v563
    %v2853 = vunpack.c.h.b16 %v563
    %v2854 = vunpack.c.l.b16 %v564
    %v2855 = vunpack.c.h.b16 %v564
    %v2856 = vunpack.c.l.b16 %v565
    %v2857 = vunpack.c.h.b16 %v565
    %v2858 = vunpack.c.l.b16 %v566
    %v2859 = vunpack.c.h.b16 %v566
    %v2860 = vunpack.c.l.b16 %v567
    %v2861 = vunpack.c.h.b16 %v567
    %v2862 = vunpack.c.l.b16 %v568
    %v2863 = vunpack.c.h.b16 %v568
    %v2864 = vunpack.c.l.b16 %v569
    %v2865 = vunpack.c.h.b16 %v569
    %v2866 = vunpack.c.l.b16 %v570
    %v2867 = vunpack.c.h.b16 %v570
    %v2868 = vunpack.c.l.b16 %v571
    %v2869 = vunpack.c.h.b16 %v571
    %v2870 = vunpack.c.l.b16 %v572
    %v2871 = vunpack.c.h.b16 %v572
    %v2872 = vunpack.c.l.b16 %v573
    %v2873 = vunpack.c.h.b16 %v573
    %v2874 = vunpack.c.l.b16 %v574
    %v2875 = vunpack.c.h.b16 %v574
    %v2876 = vunpack.c.l.b16 %v575
    %v2877 = vunpack.c.h.b16 %v575
    %v2878 = vunpack.c.l.b16 %v576
    %v2879 = vunpack.c.h.b16 %v576
    %v2880 = vunpack.c.l.b16 %v577
    %v2881 = vunpack.c.h.b16 %v577
    %v2882 = vunpack.c.l.b16 %v578
    %v2883 = vunpack.c.h.b16 %v578
    %v2884 = vunpack.c.l.b16 %v579
    %v2885 = vunpack.c.h.b16 %v579
    %v2886 = vunpack.c.l.b16 %v580
    %v2887 = vunpack.c.h.b16 %v580
    %v2888 = vunpack.c.l.b16 %v581
    %v2889 = vunpack.c.h.b16 %v581
    %v2890 = vunpack.c.l.b16 %v582
    %v2891 = vunpack.c.h.b16 %v582
    %v2892 = vunpack.c.l.b16 %v583
    %v2893 = vunpack.c.h.b16 %v583
    %v2894 = vunpack.c.l.b16 %v584
    %v2895 = vunpack.c.h.b16 %v584
    %v2896 = vunpack.c.l.b16 %v585
    %v2897 = vunpack.c.h.b16 %v585
    %v2898 = vunpack.c.l.b16 %v586
    %v2899 = vunpack.c.h.b16 %v586
    %v2900 = vunpack.c.l.b16 %v587
    %v2901 = vunpack.c.h.b16 %v587
    %v2902 = vunpack.c.l.b16 %v588
    %v2903 = vunpack.c.h.b16 %v588
    %v2904 = vunpack.c.l.b16 %v589
    %v2905 = vunpack.c.h.b16 %v589
    %v2906 = vunpack.c.l.b16 %v590
    %v2907 = vunpack.c.h.b16 %v590
    %v2908 = vunpack.c.l.b16 %v591
    %v2909 = vunpack.c.h.b16 %v591
    %v2910 = vunpack.c.l.b16 %v592
    %v2911 = vunpack.c.h.b16 %v592
    %v2912 = vunpack.c.l.b16 %v593
    %v2913 = vunpack.c.h.b16 %v593
    %v2914 = vunpack.c.l.b16 %v594
    %v2915 = vunpack.c.h.b16 %v594
    %v2916 = vunpack.c.l.b16 %v595
    %v2917 = vunpack.c.h.b16 %v595
    %v2918 = vunpack.c.l.b16 %v596
    %v2919 = vunpack.c.h.b16 %v596
    %v2920 = vunpack.c.l.b16 %v597
    %v2921 = vunpack.c.h.b16 %v597
    %v2922 = vunpack.c.l.b16 %v598
    %v2923 = vunpack.c.h.b16 %v598
    %v2924 = vunpack.c.l.b16 %v599
    %v2925 = vunpack.c.h.b16 %v599
    %v2926 = vunpack.c.l.b16 %v600
    %v2927 = vunpack.c.h.b16 %v600
    %v2928 = vunpack.c.l.b16 %v601
    %v2929 = vunpack.c.h.b16 %v601
    %v2930 = vunpack.c.l.b16 %v602
    %v2931 = vunpack.c.h.b16 %v602
    %v2932 = vunpack.c.l.b16 %v603
    %v2933 = vunpack.c.h.b16 %v603
    %v2934 = vunpack.c.l.b16 %v604
    %v2935 = vunpack.c.h.b16 %v604
    %v2936 = vunpack.c.l.b16 %v605
    %v2937 = vunpack.c.h.b16 %v605
    %v2938 = vunpack.c.l.b16 %v606
    %v2939 = vunpack.c.h.b16 %v606
    %v2940 = vunpack.c.l.b16 %v607
    %v2941 = vunpack.c.h.b16 %v607
    %v2942 = vunpack.c.l.b16 %v608
    %v2943 = vunpack.c.h.b16 %v608
    %v2944 = vunpack.c.l.b16 %v609
    %v2945 = vunpack.c.h.b16 %v609
    %v2946 = vunpack.c.l.b16 %v610
    %v2947 = vunpack.c.h.b16 %v610
    %v2948 = vunpack.c.l.b16 %v611
    %v2949 = vunpack.c.h.b16 %v611
    %v2950 = vunpack.c.l.b16 %v612
    %v2951 = vunpack.c.h.b16 %v612
    %v2952 = vunpack.c.l.b16 %v613
    %v2953 = vunpack.c.h.b16 %v613
    %v2954 = vunpack.c.l.b16 %v614
    %v2955 = vunpack.c.h.b16 %v614
    %v2956 = vunpack.c.l.b16 %v615
    %v2957 = vunpack.c.h.b16 %v615
    %v2958 = vunpack.c.l.b16 %v616
    %v2959 = vunpack.c.h.b16 %v616
    %v2960 = vunpack.c.l.b16 %v617
    %v2961 = vunpack.c.h.b16 %v617
    %v2962 = vunpack.c.l.b16 %v618
    %v2963 = vunpack.c.h.b16 %v618
    %v2964 = vunpack.c.l.b16 %v619
    %v2965 = vunpack.c.h.b16 %v619
    %v2966 = vunpack.c.l.b16 %v620
    %v2967 = vunpack.c.h.b16 %v620
    %v2968 = vunpack.c.l.b16 %v621
    %v2969 = vunpack.c.h.b16 %v621
    %v2970 = vunpack.c.l.b16 %v622
    %v2971 = vunpack.c.h.b16 %v622
    %v2972 = vunpack.c.l.b16 %v623
    %v2973 = vunpack.c.h.b16 %v623
    %v2974 = vunpack.c.l.b16 %v624
    %v2975 = vunpack.c.h.b16 %v624
    %v2976 = vunpack.c.l.b16 %v625
    %v2977 = vunpack.c.h.b16 %v625
    %v2978 = vunpack.c.l.b16 %v626
    %v2979 = vunpack.c.h.b16 %v626
    %v2980 = vunpack.c.l.b16 %v627
    %v2981 = vunpack.c.h.b16 %v627
    %v2982 = vunpack.c.l.b16 %v628
    %v2983 = vunpack.c.h.b16 %v628
    %v2984 = vunpack.c.l.b16 %v629
    %v2985 = vunpack.c.h.b16 %v629
    %v2986 = vunpack.c.l.b16 %v630
    %v2987 = vunpack.c.h.b16 %v630
    %v2988 = vunpack.c.l.b16 %v631
    %v2989 = vunpack.c.h.b16 %v631
    %v2990 = vunpack.c.l.b16 %v632
    %v2991 = vunpack.c.h.b16 %v632
    %v2992 = vunpack.c.l.b16 %v633
    %v2993 = vunpack.c.h.b16 %v633
    %v2994 = vunpack.c.l.b16 %v634
    %v2995 = vunpack.c.h.b16 %v634
    %v2996 = vunpack.c.l.b16 %v635
    %v2997 = vunpack.c.h.b16 %v635
    %v2998 = vunpack.c.l.b16 %v636
    %v2999 = vunpack.c.h.b16 %v636
    %v3000 = vunpack.c.l.b16 %v637
    %v3001 = vunpack.c.h.b16 %v637
    %v3002 = vunpack.c.l.b16 %v638
    %v3003 = vunpack.c.h.b16 %v638
    %v3004 = vunpack.c.l.b16 %v639
    %v3005 = vunpack.c.h.b16 %v639
    %v3006 = vunpack.c.l.b16 %v640
    %v3007 = vunpack.c.h.b16 %v640
    %v3008 = vunpack.c.l.b16 %v641
    %v3009 = vunpack.c.h.b16 %v641
    %v3010 = vunpack.c.l.b16 %v642
    %v3011 = vunpack.c.h.b16 %v642
    %v3012 = vunpack.c.l.b16 %v643
    %v3013 = vunpack.c.h.b16 %v643
    %v3014 = vunpack.c.l.b16 %v644
    %v3015 = vunpack.c.h.b16 %v644
    %v3016 = vunpack.c.l.b16 %v645
    %v3017 = vunpack.c.h.b16 %v645
    %v3018 = vunpack.c.l.b16 %v646
    %v3019 = vunpack.c.h.b16 %v646
    %v3020 = vunpack.c.l.b16 %v647
    %v3021 = vunpack.c.h.b16 %v647
    %v3022 = vunpack.c.l.b16 %v648
    %v3023 = vunpack.c.h.b16 %v648
    %v3024 = vunpack.c.l.b16 %v649
    %v3025 = vunpack.c.h.b16 %v649
    %v3026 = vunpack.c.l.b16 %v650
    %v3027 = vunpack.c.h.b16 %v650
    %v3028 = vunpack.c.l.b16 %v651
    %v3029 = vunpack.c.h.b16 %v651
    %v3030 = vunpack.c.l.b16 %v652
    %v3031 = vunpack.c.h.b16 %v652
    %v3032 = vunpack.c.l.b16 %v653
    %v3033 = vunpack.c.h.b16 %v653
    %v3034 = vunpack.c.l.b16 %v654
    %v3035 = vunpack.c.h.b16 %v654
    %v3036 = vunpack.c.l.b16 %v655
    %v3037 = vunpack.c.h.b16 %v655
    %v3038 = vunpack.c.l.b16 %v656
    %v3039 = vunpack.c.h.b16 %v656
    %v3040 = vunpack.c.l.b16 %v657
    %v3041 = vunpack.c.h.b16 %v657
    %v3042 = vunpack.c.l.b16 %v658
    %v3043 = vunpack.c.h.b16 %v658
    %v3044 = vunpack.c.l.b16 %v659
    %v3045 = vunpack.c.h.b16 %v659
    %v3046 = vunpack.c.l.b16 %v660
    %v3047 = vunpack.c.h.b16 %v660
    %v3048 = vunpack.c.l.b16 %v661
    %v3049 = vunpack.c.h.b16 %v661
    %v3050 = vunpack.c.l.b16 %v662
    %v3051 = vunpack.c.h.b16 %v662
    %v3052 = vunpack.c.l.b16 %v663
    %v3053 = vunpack.c.h.b16 %v663
    %v3054 = vunpack.c.l.b16 %v664
    %v3055 = vunpack.c.h.b16 %v664
    %v3056 = vunpack.c.l.b16 %v665
    %v3057 = vunpack.c.h.b16 %v665
    %v3058 = vunpack.c.l.b16 %v666
    %v3059 = vunpack.c.h.b16 %v666
    %v3060 = vunpack.c.l.b16 %v667
    %v3061 = vunpack.c.h.b16 %v667
    %v3062 = vunpack.c.l.b16 %v668
    %v3063 = vunpack.c.h.b16 %v668
    %v3064 = vunpack.c.l.b16 %v669
    %v3065 = vunpack.c.h.b16 %v669
    %v3066 = vunpack.c.l.b16 %v670
    %v3067 = vunpack.c.h.b16 %v670
    %v3068 = vunpack.c.l.b16 %v671
    %v3069 = vunpack.c.h.b16 %v671
    %v3070 = vunpack.c.l.b16 %v672
    %v3071 = vunpack.c.h.b16 %v672
    %v3072 = vunpack.c.l.b16 %v673
    %v3073 = vunpack.c.h.b16 %v673
    %v3074 = vunpack.c.l.b16 %v674
    %v3075 = vunpack.c.h.b16 %v674
    %v3076 = vunpack.c.l.b16 %v675
    %v3077 = vunpack.c.h.b16 %v675
    %v3078 = vunpack.c.l.b16 %v676
    %v3079 = vunpack.c.h.b16 %v676
    %v3080 = vunpack.c.l.b16 %v677
    %v3081 = vunpack.c.h.b16 %v677
    %v3082 = vunpack.c.l.b16 %v678
    %v3083 = vunpack.c.h.b16 %v678
    %v3084 = vunpack.c.l.b16 %v679
    %v3085 = vunpack.c.h.b16 %v679
    %v3086 = vunpack.c.l.b16 %v680
    %v3087 = vunpack.c.h.b16 %v680
    %v3088 = vunpack.c.l.b16 %v681
    %v3089 = vunpack.c.h.b16 %v681
    %v3090 = vunpack.c.l.b16 %v682
    %v3091 = vunpack.c.h.b16 %v682
    %v3092 = vunpack.c.l.b16 %v683
    %v3093 = vunpack.c.h.b16 %v683
    %v3094 = vunpack.c.l.b16 %v684
    %v3095 = vunpack.c.h.b16 %v684
    %v3096 = vunpack.c.l.b16 %v685
    %v3097 = vunpack.c.h.b16 %v685
    %v3098 = vunpack.c.l.b16 %v686
    %v3099 = vunpack.c.h.b16 %v686
    %v3100 = vunpack.c.l.b16 %v687
    %v3101 = vunpack.c.h.b16 %v687
    %v3102 = vunpack.c.l.b16 %v688
    %v3103 = vunpack.c.h.b16 %v688
    %v3104 = vunpack.c.l.b16 %v689
    %v3105 = vunpack.c.h.b16 %v689
    %v3106 = vunpack.c.l.b16 %v690
    %v3107 = vunpack.c.h.b16 %v690
    %v3108 = vunpack.c.l.b16 %v691
    %v3109 = vunpack.c.h.b16 %v691
    %v3110 = vunpack.c.l.b16 %v692
    %v3111 = vunpack.c.h.b16 %v692
    %v3112 = vunpack.c.l.b16 %v693
    %v3113 = vunpack.c.h.b16 %v693
    %v3114 = vunpack.c.l.b16 %v694
    %v3115 = vunpack.c.h.b16 %v694
    %v3116 = vunpack.c.l.b16 %v695
    %v3117 = vunpack.c.h.b16 %v695
    %v3118 = vunpack.c.l.b16 %v696
    %v3119 = vunpack.c.h.b16 %v696
    %v3120 = vunpack.c.l.b16 %v697
    %v3121 = vunpack.c.h.b16 %v697
    %v3122 = vunpack.c.l.b16 %v698
    %v3123 = vunpack.c.h.b16 %v698
    %v3124 = vunpack.c.l.b16 %v699
    %v3125 = vunpack.c.h.b16 %v699
    %v3126 = vunpack.c.l.b16 %v700
    %v3127 = vunpack.c.h.b16 %v700
    %v3128 = vunpack.c.l.b16 %v701
    %v3129 = vunpack.c.h.b16 %v701
    %v3130 = vunpack.c.l.b16 %v702
    %v3131 = vunpack.c.h.b16 %v702
    %v3132 = vunpack.c.l.b16 %v703
    %v3133 = vunpack.c.h.b16 %v703
    %v3134 = vunpack.c.l.b16 %v704
    %v3135 = vunpack.c.h.b16 %v704
    %v3136 = vunpack.c.l.b16 %v705
    %v3137 = vunpack.c.h.b16 %v705
    %v3138 = vunpack.c.l.b16 %v706
    %v3139 = vunpack.c.h.b16 %v706
    %v3140 = vunpack.c.l.b16 %v707
    %v3141 = vunpack.c.h.b16 %v707
    %v3142 = vunpack.c.l.b16 %v708
    %v3143 = vunpack.c.h.b16 %v708
    %v3144 = vunpack.c.l.b16 %v709
    %v3145 = vunpack.c.h.b16 %v709
    %v3146 = vunpack.c.l.b16 %v710
    %v3147 = vunpack.c.h.b16 %v710
    %v3148 = vunpack.c.l.b16 %v711
    %v3149 = vunpack.c.h.b16 %v711
    %v3150 = vunpack.c.l.b16 %v712
    %v3151 = vunpack.c.h.b16 %v712
    %v3152 = vunpack.c.l.b16 %v713
    %v3153 = vunpack.c.h.b16 %v713
    %v3154 = vunpack.c.l.b16 %v714
    %v3155 = vunpack.c.h.b16 %v714
    %v3156 = vunpack.c.l.b16 %v715
    %v3157 = vunpack.c.h.b16 %v715
    %v3158 = vunpack.c.l.b16 %v716
    %v3159 = vunpack.c.h.b16 %v716
    %v3160 = vunpack.c.l.b16 %v717
    %v3161 = vunpack.c.h.b16 %v717
    %v3162 = vunpack.c.l.b16 %v718
    %v3163 = vunpack.c.h.b16 %v718
    %v3164 = vunpack.c.l.b16 %v719
    %v3165 = vunpack.c.h.b16 %v719
    %v3166 = vunpack.c.l.b16 %v720
    %v3167 = vunpack.c.h.b16 %v720
    %v3168 = vunpack.c.l.b16 %v721
    %v3169 = vunpack.c.h.b16 %v721
    %v3170 = vunpack.c.l.b16 %v722
    %v3171 = vunpack.c.h.b16 %v722
    %v3172 = vunpack.c.l.b16 %v723
    %v3173 = vunpack.c.h.b16 %v723
    %v3174 = vunpack.c.l.b16 %v724
    %v3175 = vunpack.c.h.b16 %v724
    %v3176 = vunpack.c.l.b16 %v725
    %v3177 = vunpack.c.h.b16 %v725
    %v3178 = vunpack.c.l.b16 %v726
    %v3179 = vunpack.c.h.b16 %v726
    %v3180 = vunpack.c.l.b16 %v727
    %v3181 = vunpack.c.h.b16 %v727
    %v3182 = vunpack.c.l.b16 %v728
    %v3183 = vunpack.c.h.b16 %v728
    %v3184 = vunpack.c.l.b16 %v729
    %v3185 = vunpack.c.h.b16 %v729
    %v3186 = vunpack.c.l.b16 %v730
    %v3187 = vunpack.c.h.b16 %v730
    %v3188 = vunpack.c.l.b16 %v731
    %v3189 = vunpack.c.h.b16 %v731
    %v3190 = vunpack.c.l.b16 %v732
    %v3191 = vunpack.c.h.b16 %v732
    %v3192 = vunpack.c.l.b16 %v733
    %v3193 = vunpack.c.h.b16 %v733
    %v3194 = vunpack.c.l.b16 %v734
    %v3195 = vunpack.c.h.b16 %v734
    %v3196 = vunpack.c.l.b16 %v735
    %v3197 = vunpack.c.h.b16 %v735
    %v3198 = vunpack.c.l.b16 %v736
    %v3199 = vunpack.c.h.b16 %v736
    %v3200 = vunpack.c.l.b16 %v737
    %v3201 = vunpack.c.h.b16 %v737
    %v3202 = vunpack.c.l.b16 %v738
    %v3203 = vunpack.c.h.b16 %v738
    %v3204 = vunpack.c.l.b16 %v739
    %v3205 = vunpack.c.h.b16 %v739
    %v3206 = vunpack.c.l.b16 %v740
    %v3207 = vunpack.c.h.b16 %v740
    %v3208 = vunpack.c.l.b16 %v741
    %v3209 = vunpack.c.h.b16 %v741
    %v3210 = vunpack.c.l.b16 %v742
    %v3211 = vunpack.c.h.b16 %v742
    %v3212 = vunpack.c.l.b16 %v743
    %v3213 = vunpack.c.h.b16 %v743
    %v3214 = vunpack.c.l.b16 %v744
    %v3215 = vunpack.c.h.b16 %v744
    %v3216 = vunpack.c.l.b16 %v745
    %v3217 = vunpack.c.h.b16 %v745
    %v3218 = vunpack.c.l.b16 %v746
    %v3219 = vunpack.c.h.b16 %v746
    %v3220 = vunpack.c.l.b16 %v747
    %v3221 = vunpack.c.h.b16 %v747
    %v3222 = vunpack.c.l.b16 %v748
    %v3223 = vunpack.c.h.b16 %v748
    %v3224 = vunpack.c.l.b16 %v749
    %v3225 = vunpack.c.h.b16 %v749
    %v3226 = vunpack.c.l.b16 %v750
    %v3227 = vunpack.c.h.b16 %v750
    %v3228 = vunpack.c.l.b16 %v751
    %v3229 = vunpack.c.h.b16 %v751
    %v3230 = vunpack.c.l.b16 %v752
    %v3231 = vunpack.c.h.b16 %v752
    %v3232 = vunpack.c.l.b16 %v753
    %v3233 = vunpack.c.h.b16 %v753
    %v3234 = vunpack.c.l.b16 %v754
    %v3235 = vunpack.c.h.b16 %v754
    %v3236 = vunpack.c.l.b16 %v755
    %v3237 = vunpack.c.h.b16 %v755
    %v3238 = vunpack.c.l.b16 %v756
    %v3239 = vunpack.c.h.b16 %v756
    %v3240 = vunpack.c.l.b16 %v757
    %v3241 = vunpack.c.h.b16 %v757
    %v3242 = vunpack.c.l.b16 %v758
    %v3243 = vunpack.c.h.b16 %v758
    %v3244 = vunpack.c.l.b16 %v759
    %v3245 = vunpack.c.h.b16 %v759
    %v3246 = vunpack.c.l.b16 %v760
    %v3247 = vunpack.c.h.b16 %v760
    %v3248 = vunpack.c.l.b16 %v761
    %v3249 = vunpack.c.h.b16 %v761
    %v3250 = vunpack.c.l.b16 %v762
    %v3251 = vunpack.c.h.b16 %v762
    %v3252 = vunpack.c.l.b16 %v763
    %v3253 = vunpack.c.h.b16 %v763
    %v3254 = vunpack.c.l.b16 %v764
    %v3255 = vunpack.c.h.b16 %v764
    %v3256 = vunpack.c.l.b16 %v765
    %v3257 = vunpack.c.h.b16 %v765
    %v3258 = vunpack.c.l.b16 %v766
    %v3259 = vunpack.c.h.b16 %v766
    %v3260 = vunpack.c.l.b16 %v767
    %v3261 = vunpack.c.h.b16 %v767
    %v3262 = vunpack.c.l.b16 %v768
    %v3263 = vunpack.c.h.b16 %v768
    %v3264 = vunpack.c.l.b16 %v769
    %v3265 = vunpack.c.h.b16 %v769
    %v3266 = vunpack.c.l.b16 %v770
    %v3267 = vunpack.c.h.b16 %v770
    %v3268 = vunpack.c.l.b16 %v771
    %v3269 = vunpack.c.h.b16 %v771
    %v3270 = vunpack.c.l.b16 %v772
    %v3271 = vunpack.c.h.b16 %v772
    %v3272 = vunpack.c.l.b16 %v773
    %v3273 = vunpack.c.h.b16 %v773
    %v3274 = vunpack.c.l.b16 %v774
    %v3275 = vunpack.c.h.b16 %v774
    %v3276 = vunpack.c.l.b16 %v775
    %v3277 = vunpack.c.h.b16 %v775
    %v3278 = vunpack.c.l.b16 %v776
    %v3279 = vunpack.c.h.b16 %v776
    %v3280 = vunpack.c.l.b16 %v777
    %v3281 = vunpack.c.h.b16 %v777
    %v3282 = vunpack.c.l.b16 %v778
    %v3283 = vunpack.c.h.b16 %v778
    %v3284 = vunpack.c.l.b16 %v779
    %v3285 = vunpack.c.h.b16 %v779
    %v3286 = vunpack.c.l.b16 %v780
    %v3287 = vunpack.c.h.b16 %v780
    %v3288 = vunpack.c.l.b16 %v781
    %v3289 = vunpack.c.h.b16 %v781
    %v3290 = vunpack.c.l.b16 %v782
    %v3291 = vunpack.c.h.b16 %v782
    %v3292 = vunpack.c.l.b16 %v783
    %v3293 = vunpack.c.h.b16 %v783
    %v3294 = vunpack.c.l.b16 %v784
    %v3295 = vunpack.c.h.b16 %v784
    %v3296 = vunpack.c.l.b16 %v785
    %v3297 = vunpack.c.h.b16 %v785
    %v3298 = vunpack.c.l.b16 %v786
    %v3299 = vunpack.c.h.b16 %v786
    %v3300 = vunpack.c.l.b16 %v787
    %v3301 = vunpack.c.h.b16 %v787
    %v3302 = vunpack.c.l.b16 %v788
    %v3303 = vunpack.c.h.b16 %v788
    %v3304 = vunpack.c.l.b16 %v789
    %v3305 = vunpack.c.h.b16 %v789
    %v3306 = vunpack.c.l.b16 %v790
    %v3307 = vunpack.c.h.b16 %v790
    %v3308 = vunpack.c.l.b16 %v791
    %v3309 = vunpack.c.h.b16 %v791
    %v3310 = vunpack.c.l.b16 %v792
    %v3311 = vunpack.c.h.b16 %v792
    %v3312 = vunpack.c.l.b16 %v793
    %v3313 = vunpack.c.h.b16 %v793
    %v3314 = vunpack.c.l.b16 %v794
    %v3315 = vunpack.c.h.b16 %v794
    %v3316 = vunpack.c.l.b16 %v795
    %v3317 = vunpack.c.h.b16 %v795
    %v3318 = vunpack.c.l.b16 %v796
    %v3319 = vunpack.c.h.b16 %v796
    %v3320 = vunpack.c.l.b16 %v797
    %v3321 = vunpack.c.h.b16 %v797
    %v3322 = vunpack.c.l.b16 %v798
    %v3323 = vunpack.c.h.b16 %v798
    %v3324 = vunpack.c.l.b16 %v799
    %v3325 = vunpack.c.h.b16 %v799
    %v3326 = vunpack.c.l.b16 %v800
    %v3327 = vunpack.c.h.b16 %v800
    %v3328 = vunpack.c.l.b16 %v801
    %v3329 = vunpack.c.h.b16 %v801
    %v3330 = vunpack.c.l.b16 %v802
    %v3331 = vunpack.c.h.b16 %v802
    %v3332 = vunpack.c.l.b16 %v803
    %v3333 = vunpack.c.h.b16 %v803
    %v3334 = vunpack.c.l.b16 %v804
    %v3335 = vunpack.c.h.b16 %v804
    %v3336 = vunpack.c.l.b16 %v805
    %v3337 = vunpack.c.h.b16 %v805
    %v3338 = vunpack.c.l.b16 %v806
    %v3339 = vunpack.c.h.b16 %v806
    %v3340 = vunpack.c.l.b16 %v807
    %v3341 = vunpack.c.h.b16 %v807
    %v3342 = vunpack.c.l.b16 %v808
    %v3343 = vunpack.c.h.b16 %v808
    %v3344 = vunpack.c.l.b16 %v809
    %v3345 = vunpack.c.h.b16 %v809
    %v3346 = vunpack.c.l.b16 %v810
    %v3347 = vunpack.c.h.b16 %v810
    %v3348 = vunpack.c.l.b16 %v811
    %v3349 = vunpack.c.h.b16 %v811
    %v3350 = vunpack.c.l.b16 %v812
    %v3351 = vunpack.c.h.b16 %v812
    %v3352 = vunpack.c.l.b16 %v813
    %v3353 = vunpack.c.h.b16 %v813
    %v3354 = vunpack.c.l.b16 %v814
    %v3355 = vunpack.c.h.b16 %v814
    %v3356 = vunpack.c.l.b16 %v815
    %v3357 = vunpack.c.h.b16 %v815
    %v3358 = vunpack.c.l.b16 %v816
    %v3359 = vunpack.c.h.b16 %v816
    %v3360 = vunpack.c.l.b16 %v817
    %v3361 = vunpack.c.h.b16 %v817
    %v3362 = vunpack.c.l.b16 %v818
    %v3363 = vunpack.c.h.b16 %v818
    %v3364 = vunpack.c.l.b16 %v819
    %v3365 = vunpack.c.h.b16 %v819
    %v3366 = vunpack.c.l.b16 %v820
    %v3367 = vunpack.c.h.b16 %v820
    %v3368 = vunpack.c.l.b16 %v821
    %v3369 = vunpack.c.h.b16 %v821
    %v3370 = vunpack.c.l.b16 %v822
    %v3371 = vunpack.c.h.b16 %v822
    %v3372 = vunpack.c.l.b16 %v823
    %v3373 = vunpack.c.h.b16 %v823
    %v3374 = vunpack.c.l.b16 %v824
    %v3375 = vunpack.c.h.b16 %v824
    %v3376 = vunpack.c.l.b16 %v825
    %v3377 = vunpack.c.h.b16 %v825
    %v3378 = vunpack.c.l.b16 %v826
    %v3379 = vunpack.c.h.b16 %v826
    %v3380 = vunpack.c.l.b16 %v827
    %v3381 = vunpack.c.h.b16 %v827
    %v3382 = vunpack.c.l.b16 %v828
    %v3383 = vunpack.c.h.b16 %v828
    %v3384 = vunpack.c.l.b16 %v829
    %v3385 = vunpack.c.h.b16 %v829
    %v3386 = vunpack.c.l.b16 %v830
    %v3387 = vunpack.c.h.b16 %v830
    %v3388 = vunpack.c.l.b16 %v831
    %v3389 = vunpack.c.h.b16 %v831
    %v3390 = vunpack.c.l.b16 %v832
    %v3391 = vunpack.c.h.b16 %v832
    %v3392 = vunpack.c.l.b16 %v833
    %v3393 = vunpack.c.h.b16 %v833
    %v3394 = vunpack.c.l.b16 %v834
    %v3395 = vunpack.c.h.b16 %v834
    %v3396 = vunpack.c.l.b16 %v835
    %v3397 = vunpack.c.h.b16 %v835
    %v3398 = vunpack.c.l.b16 %v836
    %v3399 = vunpack.c.h.b16 %v836
    %v3400 = vunpack.c.l.b16 %v837
    %v3401 = vunpack.c.h.b16 %v837
    %v3402 = vunpack.c.l.b16 %v838
    %v3403 = vunpack.c.h.b16 %v838
    %v3404 = vunpack.c.l.b16 %v839
    %v3405 = vunpack.c.h.b16 %v839
    %v3406 = vunpack.c.l.b16 %v840
    %v3407 = vunpack.c.h.b16 %v840
    %v3408 = vunpack.c.l.b16 %v841
    %v3409 = vunpack.c.h.b16 %v841
    %v3410 = vunpack.c.l.b16 %v842
    %v3411 = vunpack.c.h.b16 %v842
    %v3412 = vunpack.c.l.b16 %v843
    %v3413 = vunpack.c.h.b16 %v843
    %v3414 = vunpack.c.l.b16 %v844
    %v3415 = vunpack.c.h.b16 %v844
    %v3416 = vunpack.c.l.b16 %v845
    %v3417 = vunpack.c.h.b16 %v845
    %v3418 = vunpack.c.l.b16 %v846
    %v3419 = vunpack.c.h.b16 %v846
    %v3420 = vunpack.c.l.b16 %v847
    %v3421 = vunpack.c.h.b16 %v847
    %v3422 = vunpack.c.l.b16 %v848
    %v3423 = vunpack.c.h.b16 %v848
    %v3424 = vunpack.c.l.b16 %v849
    %v3425 = vunpack.c.h.b16 %v849
    %v3426 = vunpack.c.l.b16 %v850
    %v3427 = vunpack.c.h.b16 %v850
    %v3428 = vunpack.c.l.b16 %v851
    %v3429 = vunpack.c.h.b16 %v851
    %v3430 = vunpack.c.l.b16 %v852
    %v3431 = vunpack.c.h.b16 %v852
    %v3432 = vunpack.c.l.b16 %v853
    %v3433 = vunpack.c.h.b16 %v853
    %v3434 = vunpack.c.l.b16 %v854
    %v3435 = vunpack.c.h.b16 %v854
    %v3436 = vunpack.c.l.b16 %v855
    %v3437 = vunpack.c.h.b16 %v855
    %v3438 = vunpack.c.l.b16 %v856
    %v3439 = vunpack.c.h.b16 %v856
    %v3440 = vunpack.c.l.b16 %v857
    %v3441 = vunpack.c.h.b16 %v857
    %v3442 = vunpack.c.l.b16 %v858
    %v3443 = vunpack.c.h.b16 %v858
    %v3444 = vunpack.c.l.b16 %v859
    %v3445 = vunpack.c.h.b16 %v859
    %v3446 = vunpack.c.l.b16 %v860
    %v3447 = vunpack.c.h.b16 %v860
    %v3448 = vunpack.c.l.b16 %v861
    %v3449 = vunpack.c.h.b16 %v861
    %v3450 = vunpack.c.l.b16 %v862
    %v3451 = vunpack.c.h.b16 %v862
    %v3452 = vunpack.c.l.b16 %v863
    %v3453 = vunpack.c.h.b16 %v863
    %v3454 = vunpack.c.l.b16 %v864
    %v3455 = vunpack.c.h.b16 %v864
    %v3456 = vunpack.c.l.b16 %v865
    %v3457 = vunpack.c.h.b16 %v865
    %v3458 = vunpack.c.l.b16 %v866
    %v3459 = vunpack.c.h.b16 %v866
    %v3460 = vunpack.c.l.b16 %v867
    %v3461 = vunpack.c.h.b16 %v867
    %v3462 = vunpack.c.l.b16 %v868
    %v3463 = vunpack.c.h.b16 %v868
    %v3464 = vunpack.c.l.b16 %v869
    %v3465 = vunpack.c.h.b16 %v869
    %v3466 = vunpack.c.l.b16 %v870
    %v3467 = vunpack.c.h.b16 %v870
    %v3468 = vunpack.c.l.b16 %v871
    %v3469 = vunpack.c.h.b16 %v871
    %v3470 = vunpack.c.l.b16 %v872
    %v3471 = vunpack.c.h.b16 %v872
    %v3472 = vunpack.c.l.b16 %v873
    %v3473 = vunpack.c.h.b16 %v873
    %v3474 = vunpack.c.l.b16 %v874
    %v3475 = vunpack.c.h.b16 %v874
    %v3476 = vunpack.c.l.b16 %v875
    %v3477 = vunpack.c.h.b16 %v875
    %v3478 = vunpack.c.l.b16 %v876
    %v3479 = vunpack.c.h.b16 %v876
    %v3480 = vunpack.c.l.b16 %v877
    %v3481 = vunpack.c.h.b16 %v877
    %v3482 = vunpack.c.l.b16 %v878
    %v3483 = vunpack.c.h.b16 %v878
    %v3484 = vunpack.c.l.b16 %v879
    %v3485 = vunpack.c.h.b16 %v879
    %v3486 = vunpack.c.l.b16 %v880
    %v3487 = vunpack.c.h.b16 %v880
    %v3488 = vunpack.c.l.b16 %v881
    %v3489 = vunpack.c.h.b16 %v881
    %v3490 = vunpack.c.l.b16 %v882
    %v3491 = vunpack.c.h.b16 %v882
    %v3492 = vunpack.c.l.b16 %v883
    %v3493 = vunpack.c.h.b16 %v883
    %v3494 = vunpack.c.l.b16 %v884
    %v3495 = vunpack.c.h.b16 %v884
    %v3496 = vunpack.c.l.b16 %v885
    %v3497 = vunpack.c.h.b16 %v885
    %v3498 = vunpack.c.l.b16 %v886
    %v3499 = vunpack.c.h.b16 %v886
    %v3500 = vunpack.c.l.b16 %v887
    %v3501 = vunpack.c.h.b16 %v887
    %v3502 = vunpack.c.l.b16 %v888
    %v3503 = vunpack.c.h.b16 %v888
    %v3504 = vunpack.c.l.b16 %v889
    %v3505 = vunpack.c.h.b16 %v889
    %v3506 = vunpack.c.l.b16 %v890
    %v3507 = vunpack.c.h.b16 %v890
    %v3508 = vunpack.c.l.b16 %v891
    %v3509 = vunpack.c.h.b16 %v891
    %v3510 = vunpack.c.l.b16 %v892
    %v3511 = vunpack.c.h.b16 %v892
    %v3512 = vunpack.c.l.b16 %v893
    %v3513 = vunpack.c.h.b16 %v893
    %v3514 = vunpack.c.l.b16 %v894
    %v3515 = vunpack.c.h.b16 %v894
    %v3516 = vunpack.c.l.b16 %v895
    %v3517 = vunpack.c.h.b16 %v895
    %v3518 = vunpack.c.l.b16 %v896
    %v3519 = vunpack.c.h.b16 %v896
    %v3520 = vunpack.c.l.b16 %v897
    %v3521 = vunpack.c.h.b16 %v897
    %v3522 = vunpack.c.l.b16 %v898
    %v3523 = vunpack.c.h.b16 %v898
    %v3524 = vunpack.c.l.b16 %v899
    %v3525 = vunpack.c.h.b16 %v899
    %v3526 = vunpack.c.l.b16 %v900
    %v3527 = vunpack.c.h.b16 %v900
    %v3528 = vunpack.c.l.b16 %v901
    %v3529 = vunpack.c.h.b16 %v901
    %v3530 = vunpack.c.l.b16 %v902
    %v3531 = vunpack.c.h.b16 %v902
    %v3532 = vunpack.c.l.b16 %v903
    %v3533 = vunpack.c.h.b16 %v903
    %v3534 = vunpack.c.l.b16 %v904
    %v3535 = vunpack.c.h.b16 %v904
    %v3536 = vunpack.c.l.b16 %v905
    %v3537 = vunpack.c.h.b16 %v905
    %v3538 = vunpack.c.l.b16 %v906
    %v3539 = vunpack.c.h.b16 %v906
    %v3540 = vunpack.c.l.b16 %v907
    %v3541 = vunpack.c.h.b16 %v907
    %v3542 = vunpack.c.l.b16 %v908
    %v3543 = vunpack.c.h.b16 %v908
    %v3544 = vunpack.c.l.b16 %v909
    %v3545 = vunpack.c.h.b16 %v909
    %v3546 = vunpack.c.l.b16 %v910
    %v3547 = vunpack.c.h.b16 %v910
    %v3548 = vunpack.c.l.b16 %v911
    %v3549 = vunpack.c.h.b16 %v911
    %v3550 = vunpack.c.l.b16 %v912
    %v3551 = vunpack.c.h.b16 %v912
    %v3552 = vunpack.c.l.b16 %v913
    %v3553 = vunpack.c.h.b16 %v913
    %v3554 = vunpack.c.l.b16 %v914
    %v3555 = vunpack.c.h.b16 %v914
    %v3556 = vunpack.c.l.b16 %v915
    %v3557 = vunpack.c.h.b16 %v915
    %v3558 = vunpack.c.l.b16 %v916
    %v3559 = vunpack.c.h.b16 %v916
    %v3560 = vunpack.c.l.b16 %v917
    %v3561 = vunpack.c.h.b16 %v917
    %v3562 = vunpack.c.l.b16 %v918
    %v3563 = vunpack.c.h.b16 %v918
    %v3564 = vunpack.c.l.b16 %v919
    %v3565 = vunpack.c.h.b16 %v919
    %v3566 = vunpack.c.l.b16 %v920
    %v3567 = vunpack.c.h.b16 %v920
    %v3568 = vunpack.c.l.b16 %v921
    %v3569 = vunpack.c.h.b16 %v921
    %v3570 = vunpack.c.l.b16 %v922
    %v3571 = vunpack.c.h.b16 %v922
    %v3572 = vunpack.c.l.b16 %v923
    %v3573 = vunpack.c.h.b16 %v923
    %v3574 = vunpack.c.l.b16 %v924
    %v3575 = vunpack.c.h.b16 %v924
    %v3576 = vunpack.c.l.b16 %v925
    %v3577 = vunpack.c.h.b16 %v925
    %v3578 = vunpack.c.l.b16 %v926
    %v3579 = vunpack.c.h.b16 %v926
    %v3580 = vunpack.c.l.b16 %v927
    %v3581 = vunpack.c.h.b16 %v927
    %v3582 = vunpack.c.l.b16 %v928
    %v3583 = vunpack.c.h.b16 %v928
    %v3584 = vunpack.c.l.b16 %v929
    %v3585 = vunpack.c.h.b16 %v929
    %v3586 = vunpack.c.l.b16 %v930
    %v3587 = vunpack.c.h.b16 %v930
    %v3588 = vunpack.c.l.b16 %v931
    %v3589 = vunpack.c.h.b16 %v931
    %v3590 = vunpack.c.l.b16 %v932
    %v3591 = vunpack.c.h.b16 %v932
    %v3592 = vunpack.c.l.b16 %v933
    %v3593 = vunpack.c.h.b16 %v933
    %v3594 = vunpack.c.l.b16 %v934
    %v3595 = vunpack.c.h.b16 %v934
    %v3596 = vunpack.c.l.b16 %v935
    %v3597 = vunpack.c.h.b16 %v935
    %v3598 = vpack.c.b16 %v2000, %v1998
    %v3599 = vpack.c.b16 %v2001, %v1999
    %v3600 = vpack.c.b16 %v2004, %v2002
    %v3601 = vpack.c.b16 %v2005, %v2003
    %v3602 = vpack.c.b16 %v2008, %v2006
    %v3603 = vpack.c.b16 %v2009, %v2007
    %v3604 = vpack.c.b16 %v2012, %v2010
    %v3605 = vpack.c.b16 %v2013, %v2011
    %v3606 = vpack.c.b16 %v2016, %v2014
    %v3607 = vpack.c.b16 %v2017, %v2015
    %v3608 = vpack.c.b16 %v2020, %v2018
    %v3609 = vpack.c.b16 %v2021, %v2019
    %v3610 = vpack.c.b16 %v2024, %v2022
    %v3611 = vpack.c.b16 %v2025, %v2023
    %v3612 = vpack.c.b16 %v2028, %v2026
    %v3613 = vpack.c.b16 %v2029, %v2027
    %v3614 = vpack.c.b16 %v2032, %v2030
    %v3615 = vpack.c.b16 %v2033, %v2031
    %v3616 = vpack.c.b16 %v2036, %v2034
    %v3617 = vpack.c.b16 %v2037, %v2035
    %v3618 = vpack.c.b16 %v2040, %v2038
    %v3619 = vpack.c.b16 %v2041, %v2039
    %v3620 = vpack.c.b16 %v2044, %v2042
    %v3621 = vpack.c.b16 %v2045, %v2043
    %v3622 = vpack.c.b16 %v2048, %v2046
    %v3623 = vpack.c.b16 %v2049, %v2047
    %v3624 = vpack.c.b16 %v2052, %v2050
    %v3625 = vpack.c.b16 %v2053, %v2051
    %v3626 = vpack.c.b16 %v2056, %v2054
    %v3627 = vpack.c.b16 %v2057, %v2055
    %v3628 = vpack.c.b16 %v2060, %v2058
    %v3629 = vpack.c.b16 %v2061, %v2059
    %v3630 = vpack.c.b16 %v2064, %v2062
    %v3631 = vpack.c.b16 %v2065, %v2063
    %v3632 = vpack.c.b16 %v2068, %v2066
    %v3633 = vpack.c.b16 %v2069, %v2067
    %v3634 = vpack.c.b16 %v2072, %v2070
    %v3635 = vpack.c.b16 %v2073, %v2071
    %v3636 = vpack.c.b16 %v2076, %v2074
    %v3637 = vpack.c.b16 %v2077, %v2075
    %v3638 = vpack.c.b16 %v2080, %v2078
    %v3639 = vpack.c.b16 %v2081, %v2079
    %v3640 = vpack.c.b16 %v2084, %v2082
    %v3641 = vpack.c.b16 %v2085, %v2083
    %v3642 = vpack.c.b16 %v2088, %v2086
    %v3643 = vpack.c.b16 %v2089, %v2087
    %v3644 = vpack.c.b16 %v2092, %v2090
    %v3645 = vpack.c.b16 %v2093, %v2091
    %v3646 = vpack.c.b16 %v2096, %v2094
    %v3647 = vpack.c.b16 %v2097, %v2095
    %v3648 = vpack.c.b16 %v2100, %v2098
    %v3649 = vpack.c.b16 %v2101, %v2099
    %v3650 = vpack.c.b16 %v2104, %v2102
    %v3651 = vpack.c.b16 %v2105, %v2103
    %v3652 = vpack.c.b16 %v2108, %v2106
    %v3653 = vpack.c.b16 %v2109, %v2107
    %v3654 = vpack.c.b16 %v2112, %v2110
    %v3655 = vpack.c.b16 %v2113, %v2111
    %v3656 = vpack.c.b16 %v2116, %v2114
    %v3657 = vpack.c.b16 %v2117, %v2115
    %v3658 = vpack.c.b16 %v2120, %v2118
    %v3659 = vpack.c.b16 %v2121, %v2119
    %v3660 = vpack.c.b16 %v2124, %v2122
    %v3661 = vpack.c.b16 %v2125, %v2123
    %v3662 = vpack.c.b16 %v2128, %v2126
    %v3663 = vpack.c.b16 %v2129, %v2127
    %v3664 = vpack.c.b16 %v2132, %v2130
    %v3665 = vpack.c.b16 %v2133, %v2131
    %v3666 = vpack.c.b16 %v2136, %v2134
    %v3667 = vpack.c.b16 %v2137, %v2135
    %v3668 = vpack.c.b16 %v2140, %v2138
    %v3669 = vpack.c.b16 %v2141, %v2139
    %v3670 = vpack.c.b16 %v2144, %v2142
    %v3671 = vpack.c.b16 %v2145, %v2143
    %v3672 = vpack.c.b16 %v2148, %v2146
    %v3673 = vpack.c.b16 %v2149, %v2147
    %v3674 = vpack.c.b16 %v2152, %v2150
    %v3675 = vpack.c.b16 %v2153, %v2151
    %v3676 = vpack.c.b16 %v2156, %v2154
    %v3677 = vpack.c.b16 %v2157, %v2155
    %v3678 = vpack.c.b16 %v2160, %v2158
    %v3679 = vpack.c.b16 %v2161, %v2159
    %v3680 = vpack.c.b16 %v2164, %v2162
    %v3681 = vpack.c.b16 %v2165, %v2163
    %v3682 = vpack.c.b16 %v2168, %v2166
    %v3683 = vpack.c.b16 %v2169, %v2167
    %v3684 = vpack.c.b16 %v2172, %v2170
    %v3685 = vpack.c.b16 %v2173, %v2171
    %v3686 = vpack.c.b16 %v2176, %v2174
    %v3687 = vpack.c.b16 %v2177, %v2175
    %v3688 = vpack.c.b16 %v2180, %v2178
    %v3689 = vpack.c.b16 %v2181, %v2179
    %v3690 = vpack.c.b16 %v2184, %v2182
    %v3691 = vpack.c.b16 %v2185, %v2183
    %v3692 = vpack.c.b16 %v2188, %v2186
    %v3693 = vpack.c.b16 %v2189, %v2187
    %v3694 = vpack.c.b16 %v2192, %v2190
    %v3695 = vpack.c.b16 %v2193, %v2191
    %v3696 = vpack.c.b16 %v2196, %v2194
    %v3697 = vpack.c.b16 %v2197, %v2195
    %v3698 = vpack.c.b16 %v2200, %v2198
    %v3699 = vpack.c.b16 %v2201, %v2199
    %v3700 = vpack.c.b16 %v2204, %v2202
    %v3701 = vpack.c.b16 %v2205, %v2203
    %v3702 = vpack.c.b16 %v2208, %v2206
    %v3703 = vpack.c.b16 %v2209, %v2207
    %v3704 = vpack.c.b16 %v2212, %v2210
    %v3705 = vpack.c.b16 %v2213, %v2211
    %v3706 = vpack.c.b16 %v2216, %v2214
    %v3707 = vpack.c.b16 %v2217, %v2215
    %v3708 = vpack.c.b16 %v2220, %v2218
    %v3709 = vpack.c.b16 %v2221, %v2219
    %v3710 = vpack.c.b16 %v2224, %v2222
    %v3711 = vpack.c.b16 %v2225, %v2223
    %v3712 = vpack.c.b16 %v2228, %v2226
    %v3713 = vpack.c.b16 %v2229, %v2227
    %v3714 = vpack.c.b16 %v2232, %v2230
    %v3715 = vpack.c.b16 %v2233, %v2231
    %v3716 = vpack.c.b16 %v2236, %v2234
    %v3717 = vpack.c.b16 %v2237, %v2235
    %v3718 = vpack.c.b16 %v2240, %v2238
    %v3719 = vpack.c.b16 %v2241, %v2239
    %v3720 = vpack.c.b16 %v2244, %v2242
    %v3721 = vpack.c.b16 %v2245, %v2243
    %v3722 = vpack.c.b16 %v2248, %v2246
    %v3723 = vpack.c.b16 %v2249, %v2247
    %v3724 = vpack.c.b16 %v2252, %v2250
    %v3725 = vpack.c.b16 %v2253, %v2251
    %v3726 = vpack.c.b16 %v2256, %v2254
    %v3727 = vpack.c.b16 %v2257, %v2255
    %v3728 = vpack.c.b16 %v2260, %v2258
    %v3729 = vpack.c.b16 %v2261, %v2259
    %v3730 = vpack.c.b16 %v2264, %v2262
    %v3731 = vpack.c.b16 %v2265, %v2263
    %v3732 = vpack.c.b16 %v2268, %v2266
    %v3733 = vpack.c.b16 %v2269, %v2267
    %v3734 = vpack.c.b16 %v2272, %v2270
    %v3735 = vpack.c.b16 %v2273, %v2271
    %v3736 = vpack.c.b16 %v2276, %v2274
    %v3737 = vpack.c.b16 %v2277, %v2275
    %v3738 = vpack.c.b16 %v2280, %v2278
    %v3739 = vpack.c.b16 %v2281, %v2279
    %v3740 = vpack.c.b16 %v2284, %v2282
    %v3741 = vpack.c.b16 %v2285, %v2283
    %v3742 = vpack.c.b16 %v2288, %v2286
    %v3743 = vpack.c.b16 %v2289, %v2287
    %v3744 = vpack.c.b16 %v2292, %v2290
    %v3745 = vpack.c.b16 %v2293, %v2291
    %v3746 = vpack.c.b16 %v2296, %v2294
    %v3747 = vpack.c.b16 %v2297, %v2295
    %v3748 = vpack.c.b16 %v2300, %v2298
    %v3749 = vpack.c.b16 %v2301, %v2299
    %v3750 = vpack.c.b16 %v2304, %v2302
    %v3751 = vpack.c.b16 %v2305, %v2303
    %v3752 = vpack.c.b16 %v2308, %v2306
    %v3753 = vpack.c.b16 %v2309, %v2307
    %v3754 = vpack.c.b16 %v2312, %v2310
    %v3755 = vpack.c.b16 %v2313, %v2311
    %v3756 = vpack.c.b16 %v2316, %v2314
    %v3757 = vpack.c.b16 %v2317, %v2315
    %v3758 = vpack.c.b16 %v2320, %v2318
    %v3759 = vpack.c.b16 %v2321, %v2319
    %v3760 = vpack.c.b16 %v2324, %v2322
    %v3761 = vpack.c.b16 %v2325, %v2323
    %v3762 = vpack.c.b16 %v2328, %v2326
    %v3763 = vpack.c.b16 %v2329, %v2327
    %v3764 = vpack.c.b16 %v2332, %v2330
    %v3765 = vpack.c.b16 %v2333, %v2331
    %v3766 = vpack.c.b16 %v2336, %v2334
    %v3767 = vpack.c.b16 %v2337, %v2335
    %v3768 = vpack.c.b16 %v2340, %v2338
    %v3769 = vpack.c.b16 %v2341, %v2339
    %v3770 = vpack.c.b16 %v2344, %v2342
    %v3771 = vpack.c.b16 %v2345, %v2343
    %v3772 = vpack.c.b16 %v2348, %v2346
    %v3773 = vpack.c.b16 %v2349, %v2347
    %v3774 = vpack.c.b16 %v2352, %v2350
    %v3775 = vpack.c.b16 %v2353, %v2351
    %v3776 = vpack.c.b16 %v2356, %v2354
    %v3777 = vpack.c.b16 %v2357, %v2355
    %v3778 = vpack.c.b16 %v2360, %v2358
    %v3779 = vpack.c.b16 %v2361, %v2359
    %v3780 = vpack.c.b16 %v2364, %v2362
    %v3781 = vpack.c.b16 %v2365, %v2363
    %v3782 = vpack.c.b16 %v2368, %v2366
    %v3783 = vpack.c.b16 %v2369, %v2367
    %v3784 = vpack.c.b16 %v2372, %v2370
    %v3785 = vpack.c.b16 %v2373, %v2371
    %v3786 = vpack.c.b16 %v2376, %v2374
    %v3787 = vpack.c.b16 %v2377, %v2375
    %v3788 = vpack.c.b16 %v2380, %v2378
    %v3789 = vpack.c.b16 %v2381, %v2379
    %v3790 = vpack.c.b16 %v2384, %v2382
    %v3791 = vpack.c.b16 %v2385, %v2383
    %v3792 = vpack.c.b16 %v2388, %v2386
    %v3793 = vpack.c.b16 %v2389, %v2387
    %v3794 = vpack.c.b16 %v2392, %v2390
    %v3795 = vpack.c.b16 %v2393, %v2391
    %v3796 = vpack.c.b16 %v2396, %v2394
    %v3797 = vpack.c.b16 %v2397, %v2395
    %v3798 = vpack.c.b16 %v2400, %v2398
    %v3799 = vpack.c.b16 %v2401, %v2399
    %v3800 = vpack.c.b16 %v2404, %v2402
    %v3801 = vpack.c.b16 %v2405, %v2403
    %v3802 = vpack.c.b16 %v2408, %v2406
    %v3803 = vpack.c.b16 %v2409, %v2407
    %v3804 = vpack.c.b16 %v2412, %v2410
    %v3805 = vpack.c.b16 %v2413, %v2411
    %v3806 = vpack.c.b16 %v2416, %v2414
    %v3807 = vpack.c.b16 %v2417, %v2415
    %v3808 = vpack.c.b16 %v2420, %v2418
    %v3809 = vpack.c.b16 %v2421, %v2419
    %v3810 = vpack.c.b16 %v2424, %v2422
    %v3811 = vpack.c.b16 %v2425, %v2423
    %v3812 = vpack.c.b16 %v2428, %v2426
    %v3813 = vpack.c.b16 %v2429, %v2427
    %v3814 = vpack.c.b16 %v2432, %v2430
    %v3815 = vpack.c.b16 %v2433, %v2431
    %v3816 = vpack.c.b16 %v2436, %v2434
    %v3817 = vpack.c.b16 %v2437, %v2435
    %v3818 = vpack.c.b16 %v2440, %v2438
    %v3819 = vpack.c.b16 %v2441, %v2439
    %v3820 = vpack.c.b16 %v2444, %v2442
    %v3821 = vpack.c.b16 %v2445, %v2443
    %v3822 = vpack.c.b16 %v2448, %v2446
    %v3823 = vpack.c.b16 %v2449, %v2447
    %v3824 = vpack.c.b16 %v2452, %v2450
    %v3825 = vpack.c.b16 %v2453, %v2451
    %v3826 = vpack.c.b16 %v2456, %v2454
    %v3827 = vpack.c.b16 %v2457, %v2455
    %v3828 = vpack.c.b16 %v2460, %v2458
    %v3829 = vpack.c.b16 %v2461, %v2459
    %v3830 = vpack.c.b16 %v2464, %v2462
    %v3831 = vpack.c.b16 %v2465, %v2463
    %v3832 = vpack.c.b16 %v2468, %v2466
    %v3833 = vpack.c.b16 %v2469, %v2467
    %v3834 = vpack.c.b16 %v2472, %v2470
    %v3835 = vpack.c.b16 %v2473, %v2471
    %v3836 = vpack.c.b16 %v2476, %v2474
    %v3837 = vpack.c.b16 %v2477, %v2475
    %v3838 = vpack.c.b16 %v2480, %v2478
    %v3839 = vpack.c.b16 %v2481, %v2479
    %v3840 = vpack.c.b16 %v2484, %v2482
    %v3841 = vpack.c.b16 %v2485, %v2483
    %v3842 = vpack.c.b16 %v2488, %v2486
    %v3843 = vpack.c.b16 %v2489, %v2487
    %v3844 = vpack.c.b16 %v2492, %v2490
    %v3845 = vpack.c.b16 %v2493, %v2491
    %v3846 = vpack.c.b16 %v2496, %v2494
    %v3847 = vpack.c.b16 %v2497, %v2495
    %v3848 = vpack.c.b16 %v2500, %v2498
    %v3849 = vpack.c.b16 %v2501, %v2499
    %v3850 = vpack.c.b16 %v2504, %v2502
    %v3851 = vpack.c.b16 %v2505, %v2503
    %v3852 = vpack.c.b16 %v2508, %v2506
    %v3853 = vpack.c.b16 %v2509, %v2507
    %v3854 = vpack.c.b16 %v2512, %v2510
    %v3855 = vpack.c.b16 %v2513, %v2511
    %v3856 = vpack.c.b16 %v2516, %v2514
    %v3857 = vpack.c.b16 %v2517, %v2515
    %v3858 = vpack.c.b16 %v2520, %v2518
    %v3859 = vpack.c.b16 %v2521, %v2519
    %v3860 = vpack.c.b16 %v2524, %v2522
    %v3861 = vpack.c.b16 %v2525, %v2523
    %v3862 = vpack.c.b16 %v2528, %v2526
    %v3863 = vpack.c.b16 %v2529, %v2527
    %v3864 = vpack.c.b16 %v2532, %v2530
    %v3865 = vpack.c.b16 %v2533, %v2531
    %v3866 = vpack.c.b16 %v2536, %v2534
    %v3867 = vpack.c.b16 %v2537, %v2535
    %v3868 = vpack.c.b16 %v2540, %v2538
    %v3869 = vpack.c.b16 %v2541, %v2539
    %v3870 = vpack.c.b16 %v2544, %v2542
    %v3871 = vpack.c.b16 %v2545, %v2543
    %v3872 = vpack.c.b16 %v2548, %v2546
    %v3873 = vpack.c.b16 %v2549, %v2547
    %v3874 = vpack.c.b16 %v2552, %v2550
    %v3875 = vpack.c.b16 %v2553, %v2551
    %v3876 = vpack.c.b16 %v2556, %v2554
    %v3877 = vpack.c.b16 %v2557, %v2555
    %v3878 = vpack.c.b16 %v2560, %v2558
    %v3879 = vpack.c.b16 %v2561, %v2559
    %v3880 = vpack.c.b16 %v2564, %v2562
    %v3881 = vpack.c.b16 %v2565, %v2563
    %v3882 = vpack.c.b16 %v2568, %v2566
    %v3883 = vpack.c.b16 %v2569, %v2567
    %v3884 = vpack.c.b16 %v2572, %v2570
    %v3885 = vpack.c.b16 %v2573, %v2571
    %v3886 = vpack.c.b16 %v2576, %v2574
    %v3887 = vpack.c.b16 %v2577, %v2575
    %v3888 = vpack.c.b16 %v2580, %v2578
    %v3889 = vpack.c.b16 %v2581, %v2579
    %v3890 = vpack.c.b16 %v2584, %v2582
    %v3891 = vpack.c.b16 %v2585, %v2583
    %v3892 = vpack.c.b16 %v2588, %v2586
    %v3893 = vpack.c.b16 %v2589, %v2587
    %v3894 = vpack.c.b16 %v2592, %v2590
    %v3895 = vpack.c.b16 %v2593, %v2591
    %v3896 = vpack.c.b16 %v2596, %v2594
    %v3897 = vpack.c.b16 %v2597, %v2595
    %v3898 = vpack.c.b16 %v2600, %v2598
    %v3899 = vpack.c.b16 %v2601, %v2599
    %v3900 = vpack.c.b16 %v2604, %v2602
    %v3901 = vpack.c.b16 %v2605, %v2603
    %v3902 = vpack.c.b16 %v2608, %v2606
    %v3903 = vpack.c.b16 %v2609, %v2607
    %v3904 = vpack.c.b16 %v2612, %v2610
    %v3905 = vpack.c.b16 %v2613, %v2611
    %v3906 = vpack.c.b16 %v2616, %v2614
    %v3907 = vpack.c.b16 %v2617, %v2615
    %v3908 = vpack.c.b16 %v2620, %v2618
    %v3909 = vpack.c.b16 %v2621, %v2619
    %v3910 = vpack.c.b16 %v2624, %v2622
    %v3911 = vpack.c.b16 %v2625, %v2623
    %v3912 = vpack.c.b16 %v2628, %v2626
    %v3913 = vpack.c.b16 %v2629, %v2627
    %v3914 = vpack.c.b16 %v2632, %v2630
    %v3915 = vpack.c.b16 %v2633, %v2631
    %v3916 = vpack.c.b16 %v2636, %v2634
    %v3917 = vpack.c.b16 %v2637, %v2635
    %v3918 = vpack.c.b16 %v2640, %v2638
    %v3919 = vpack.c.b16 %v2641, %v2639
    %v3920 = vpack.c.b16 %v2644, %v2642
    %v3921 = vpack.c.b16 %v2645, %v2643
    %v3922 = vpack.c.b16 %v2648, %v2646
    %v3923 = vpack.c.b16 %v2649, %v2647
    %v3924 = vpack.c.b16 %v2652, %v2650
    %v3925 = vpack.c.b16 %v2653, %v2651
    %v3926 = vpack.c.b16 %v2656, %v2654
    %v3927 = vpack.c.b16 %v2657, %v2655
    %v3928 = vpack.c.b16 %v2660, %v2658
    %v3929 = vpack.c.b16 %v2661, %v2659
    %v3930 = vpack.c.b16 %v2664, %v2662
    %v3931 = vpack.c.b16 %v2665, %v2663
    %v3932 = vpack.c.b16 %v2668, %v2666
    %v3933 = vpack.c.b16 %v2669, %v2667
    %v3934 = vpack.c.b16 %v2672, %v2670
    %v3935 = vpack.c.b16 %v2673, %v2671
    %v3936 = vpack.c.b16 %v2676, %v2674
    %v3937 = vpack.c.b16 %v2677, %v2675
    %v3938 = vpack.c.b16 %v2680, %v2678
    %v3939 = vpack.c.b16 %v2681, %v2679
    %v3940 = vpack.c.b16 %v2684, %v2682
    %v3941 = vpack.c.b16 %v2685, %v2683
    %v3942 = vpack.c.b16 %v2688, %v2686
    %v3943 = vpack.c.b16 %v2689, %v2687
    %v3944 = vpack.c.b16 %v2692, %v2690
    %v3945 = vpack.c.b16 %v2693, %v2691
    %v3946 = vpack.c.b16 %v2696, %v2694
    %v3947 = vpack.c.b16 %v2697, %v2695
    %v3948 = vpack.c.b16 %v2700, %v2698
    %v3949 = vpack.c.b16 %v2701, %v2699
    %v3950 = vpack.c.b16 %v2704, %v2702
    %v3951 = vpack.c.b16 %v2705, %v2703
    %v3952 = vpack.c.b16 %v2708, %v2706
    %v3953 = vpack.c.b16 %v2709, %v2707
    %v3954 = vpack.c.b16 %v2712, %v2710
    %v3955 = vpack.c.b16 %v2713, %v2711
    %v3956 = vpack.c.b16 %v2716, %v2714
    %v3957 = vpack.c.b16 %v2717, %v2715
    %v3958 = vpack.c.b16 %v2720, %v2718
    %v3959 = vpack.c.b16 %v2721, %v2719
    %v3960 = vpack.c.b16 %v2724, %v2722
    %v3961 = vpack.c.b16 %v2725, %v2723
    %v3962 = vpack.c.b16 %v2728, %v2726
    %v3963 = vpack.c.b16 %v2729, %v2727
    %v3964 = vpack.c.b16 %v2732, %v2730
    %v3965 = vpack.c.b16 %v2733, %v2731
    %v3966 = vpack.c.b16 %v2736, %v2734
    %v3967 = vpack.c.b16 %v2737, %v2735
    %v3968 = vpack.c.b16 %v2740, %v2738
    %v3969 = vpack.c.b16 %v2741, %v2739
    %v3970 = vpack.c.b16 %v2744, %v2742
    %v3971 = vpack.c.b16 %v2745, %v2743
    %v3972 = vpack.c.b16 %v2748, %v2746
    %v3973 = vpack.c.b16 %v2749, %v2747
    %v3974 = vpack.c.b16 %v2752, %v2750
    %v3975 = vpack.c.b16 %v2753, %v2751
    %v3976 = vpack.c.b16 %v2756, %v2754
    %v3977 = vpack.c.b16 %v2757, %v2755
    %v3978 = vpack.c.b16 %v2760, %v2758
    %v3979 = vpack.c.b16 %v2761, %v2759
    %v3980 = vpack.c.b16 %v2764, %v2762
    %v3981 = vpack.c.b16 %v2765, %v2763
    %v3982 = vpack.c.b16 %v2768, %v2766
    %v3983 = vpack.c.b16 %v2769, %v2767
    %v3984 = vpack.c.b16 %v2772, %v2770
    %v3985 = vpack.c.b16 %v2773, %v2771
    %v3986 = vpack.c.b16 %v2776, %v2774
    %v3987 = vpack.c.b16 %v2777, %v2775
    %v3988 = vpack.c.b16 %v2780, %v2778
    %v3989 = vpack.c.b16 %v2781, %v2779
    %v3990 = vpack.c.b16 %v2784, %v2782
    %v3991 = vpack.c.b16 %v2785, %v2783
    %v3992 = vpack.c.b16 %v2788, %v2786
    %v3993 = vpack.c.b16 %v2789, %v2787
    %v3994 = vpack.c.b16 %v2792, %v2790
    %v3995 = vpack.c.b16 %v2793, %v2791
    %v3996 = vpack.c.b16 %v2796, %v2794
    %v3997 = vpack.c.b16 %v2797, %v2795
    %v3998 = vpack.c.b16 %v2800, %v2798
    %v3999 = vpack.c.b16 %v2801, %v2799
    %v4000 = vpack.c.b16 %v2804, %v2802
    %v4001 = vpack.c.b16 %v2805, %v2803
    %v4002 = vpack.c.b16 %v2808, %v2806
    %v4003 = vpack.c.b16 %v2809, %v2807
    %v4004 = vpack.c.b16 %v2812, %v2810
    %v4005 = vpack.c.b16 %v2813, %v2811
    %v4006 = vpack.c.b16 %v2816, %v2814
    %v4007 = vpack.c.b16 %v2817, %v2815
    %v4008 = vpack.c.b16 %v2820, %v2818
    %v4009 = vpack.c.b16 %v2821, %v2819
    %v4010 = vpack.c.b16 %v2824, %v2822
    %v4011 = vpack.c.b16 %v2825, %v2823
    %v4012 = vpack.c.b16 %v2828, %v2826
    %v4013 = vpack.c.b16 %v2829, %v2827
    %v4014 = vpack.c.b16 %v2832, %v2830
    %v4015 = vpack.c.b16 %v2833, %v2831
    %v4016 = vpack.c.b16 %v2836, %v2834
    %v4017 = vpack.c.b16 %v2837, %v2835
    %v4018 = vpack.c.b16 %v2840, %v2838
    %v4019 = vpack.c.b16 %v2841, %v2839
    %v4020 = vpack.c.b16 %v2844, %v2842
    %v4021 = vpack.c.b16 %v2845, %v2843
    %v4022 = vpack.c.b16 %v2848, %v2846
    %v4023 = vpack.c.b16 %v2849, %v2847
    %v4024 = vpack.c.b16 %v2852, %v2850
    %v4025 = vpack.c.b16 %v2853, %v2851
    %v4026 = vpack.c.b16 %v2856, %v2854
    %v4027 = vpack.c.b16 %v2857, %v2855
    %v4028 = vpack.c.b16 %v2860, %v2858
    %v4029 = vpack.c.b16 %v2861, %v2859
    %v4030 = vpack.c.b16 %v2864, %v2862
    %v4031 = vpack.c.b16 %v2865, %v2863
    %v4032 = vpack.c.b16 %v2868, %v2866
    %v4033 = vpack.c.b16 %v2869, %v2867
    %v4034 = vpack.c.b16 %v2872, %v2870
    %v4035 = vpack.c.b16 %v2873, %v2871
    %v4036 = vpack.c.b16 %v2876, %v2874
    %v4037 = vpack.c.b16 %v2877, %v2875
    %v4038 = vpack.c.b16 %v2880, %v2878
    %v4039 = vpack.c.b16 %v2881, %v2879
    %v4040 = vpack.c.b16 %v2884, %v2882
    %v4041 = vpack.c.b16 %v2885, %v2883
    %v4042 = vpack.c.b16 %v2888, %v2886
    %v4043 = vpack.c.b16 %v2889, %v2887
    %v4044 = vpack.c.b16 %v2892, %v2890
    %v4045 = vpack.c.b16 %v2893, %v2891
    %v4046 = vpack.c.b16 %v2896, %v2894
    %v4047 = vpack.c.b16 %v2897, %v2895
    %v4048 = vpack.c.b16 %v2900, %v2898
    %v4049 = vpack.c.b16 %v2901, %v2899
    %v4050 = vpack.c.b16 %v2904, %v2902
    %v4051 = vpack.c.b16 %v2905, %v2903
    %v4052 = vpack.c.b16 %v2908, %v2906
    %v4053 = vpack.c.b16 %v2909, %v2907
    %v4054 = vpack.c.b16 %v2912, %v2910
    %v4055 = vpack.c.b16 %v2913, %v2911
    %v4056 = vpack.c.b16 %v2916, %v2914
    %v4057 = vpack.c.b16 %v2917, %v2915
    %v4058 = vpack.c.b16 %v2920, %v2918
    %v4059 = vpack.c.b16 %v2921, %v2919
    %v4060 = vpack.c.b16 %v2924, %v2922
    %v4061 = vpack.c.b16 %v2925, %v2923
    %v4062 = vpack.c.b16 %v2928, %v2926
    %v4063 = vpack.c.b16 %v2929, %v2927
    %v4064 = vpack.c.b16 %v2932, %v2930
    %v4065 = vpack.c.b16 %v2933, %v2931
    %v4066 = vpack.c.b16 %v2936, %v2934
    %v4067 = vpack.c.b16 %v2937, %v2935
    %v4068 = vpack.c.b16 %v2940, %v2938
    %v4069 = vpack.c.b16 %v2941, %v2939
    %v4070 = vpack.c.b16 %v2944, %v2942
    %v4071 = vpack.c.b16 %v2945, %v2943
    %v4072 = vpack.c.b16 %v2948, %v2946
    %v4073 = vpack.c.b16 %v2949, %v2947
    %v4074 = vpack.c.b16 %v2952, %v2950
    %v4075 = vpack.c.b16 %v2953, %v2951
    %v4076 = vpack.c.b16 %v2956, %v2954
    %v4077 = vpack.c.b16 %v2957, %v2955
    %v4078 = vpack.c.b16 %v2960, %v2958
    %v4079 = vpack.c.b16 %v2961, %v2959
    %v4080 = vpack.c.b16 %v2964, %v2962
    %v4081 = vpack.c.b16 %v2965, %v2963
    %v4082 = vpack.c.b16 %v2968, %v2966
    %v4083 = vpack.c.b16 %v2969, %v2967
    %v4084 = vpack.c.b16 %v2972, %v2970
    %v4085 = vpack.c.b16 %v2973, %v2971
    %v4086 = vpack.c.b16 %v2976, %v2974
    %v4087 = vpack.c.b16 %v2977, %v2975
    %v4088 = vpack.c.b16 %v2980, %v2978
    %v4089 = vpack.c.b16 %v2981, %v2979
    %v4090 = vpack.c.b16 %v2984, %v2982
    %v4091 = vpack.c.b16 %v2985, %v2983
    %v4092 = vpack.c.b16 %v2988, %v2986
    %v4093 = vpack.c.b16 %v2989, %v2987
    %v4094 = vpack.c.b16 %v2992, %v2990
    %v4095 = vpack.c.b16 %v2993, %v2991
    %v4096 = vpack.c.b16 %v2996, %v2994
    %v4097 = vpack.c.b16 %v2997, %v2995
    %v4098 = vpack.c.b16 %v3000, %v2998
    %v4099 = vpack.c.b16 %v3001, %v2999
    %v4100 = vpack.c.b16 %v3004, %v3002
    %v4101 = vpack.c.b16 %v3005, %v3003
    %v4102 = vpack.c.b16 %v3008, %v3006
    %v4103 = vpack.c.b16 %v3009, %v3007
    %v4104 = vpack.c.b16 %v3012, %v3010
    %v4105 = vpack.c.b16 %v3013, %v3011
    %v4106 = vpack.c.b16 %v3016, %v3014
    %v4107 = vpack.c.b16 %v3017, %v3015
    %v4108 = vpack.c.b16 %v3020, %v3018
    %v4109 = vpack.c.b16 %v3021, %v3019
    %v4110 = vpack.c.b16 %v3024, %v3022
    %v4111 = vpack.c.b16 %v3025, %v3023
    %v4112 = vpack.c.b16 %v3028, %v3026
    %v4113 = vpack.c.b16 %v3029, %v3027
    %v4114 = vpack.c.b16 %v3032, %v3030
    %v4115 = vpack.c.b16 %v3033, %v3031
    %v4116 = vpack.c.b16 %v3036, %v3034
    %v4117 = vpack.c.b16 %v3037, %v3035
    %v4118 = vpack.c.b16 %v3040, %v3038
    %v4119 = vpack.c.b16 %v3041, %v3039
    %v4120 = vpack.c.b16 %v3044, %v3042
    %v4121 = vpack.c.b16 %v3045, %v3043
    %v4122 = vpack.c.b16 %v3048, %v3046
    %v4123 = vpack.c.b16 %v3049, %v3047
    %v4124 = vpack.c.b16 %v3052, %v3050
    %v4125 = vpack.c.b16 %v3053, %v3051
    %v4126 = vpack.c.b16 %v3056, %v3054
    %v4127 = vpack.c.b16 %v3057, %v3055
    %v4128 = vpack.c.b16 %v3060, %v3058
    %v4129 = vpack.c.b16 %v3061, %v3059
    %v4130 = vpack.c.b16 %v3064, %v3062
    %v4131 = vpack.c.b16 %v3065, %v3063
    %v4132 = vpack.c.b16 %v3068, %v3066
    %v4133 = vpack.c.b16 %v3069, %v3067
    %v4134 = vpack.c.b16 %v3072, %v3070
    %v4135 = vpack.c.b16 %v3073, %v3071
    %v4136 = vpack.c.b16 %v3076, %v3074
    %v4137 = vpack.c.b16 %v3077, %v3075
    %v4138 = vpack.c.b16 %v3080, %v3078
    %v4139 = vpack.c.b16 %v3081, %v3079
    %v4140 = vpack.c.b16 %v3084, %v3082
    %v4141 = vpack.c.b16 %v3085, %v3083
    %v4142 = vpack.c.b16 %v3088, %v3086
    %v4143 = vpack.c.b16 %v3089, %v3087
    %v4144 = vpack.c.b16 %v3092, %v3090
    %v4145 = vpack.c.b16 %v3093, %v3091
    %v4146 = vpack.c.b16 %v3096, %v3094
    %v4147 = vpack.c.b16 %v3097, %v3095
    %v4148 = vpack.c.b16 %v3100, %v3098
    %v4149 = vpack.c.b16 %v3101, %v3099
    %v4150 = vpack.c.b16 %v3104, %v3102
    %v4151 = vpack.c.b16 %v3105, %v3103
    %v4152 = vpack.c.b16 %v3108, %v3106
    %v4153 = vpack.c.b16 %v3109, %v3107
    %v4154 = vpack.c.b16 %v3112, %v3110
    %v4155 = vpack.c.b16 %v3113, %v3111
    %v4156 = vpack.c.b16 %v3116, %v3114
    %v4157 = vpack.c.b16 %v3117, %v3115
    %v4158 = vpack.c.b16 %v3120, %v3118
    %v4159 = vpack.c.b16 %v3121, %v3119
    %v4160 = vpack.c.b16 %v3124, %v3122
    %v4161 = vpack.c.b16 %v3125, %v3123
    %v4162 = vpack.c.b16 %v3128, %v3126
    %v4163 = vpack.c.b16 %v3129, %v3127
    %v4164 = vpack.c.b16 %v3132, %v3130
    %v4165 = vpack.c.b16 %v3133, %v3131
    %v4166 = vpack.c.b16 %v3136, %v3134
    %v4167 = vpack.c.b16 %v3137, %v3135
    %v4168 = vpack.c.b16 %v3140, %v3138
    %v4169 = vpack.c.b16 %v3141, %v3139
    %v4170 = vpack.c.b16 %v3144, %v3142
    %v4171 = vpack.c.b16 %v3145, %v3143
    %v4172 = vpack.c.b16 %v3148, %v3146
    %v4173 = vpack.c.b16 %v3149, %v3147
    %v4174 = vpack.c.b16 %v3152, %v3150
    %v4175 = vpack.c.b16 %v3153, %v3151
    %v4176 = vpack.c.b16 %v3156, %v3154
    %v4177 = vpack.c.b16 %v3157, %v3155
    %v4178 = vpack.c.b16 %v3160, %v3158
    %v4179 = vpack.c.b16 %v3161, %v3159
    %v4180 = vpack.c.b16 %v3164, %v3162
    %v4181 = vpack.c.b16 %v3165, %v3163
    %v4182 = vpack.c.b16 %v3168, %v3166
    %v4183 = vpack.c.b16 %v3169, %v3167
    %v4184 = vpack.c.b16 %v3172, %v3170
    %v4185 = vpack.c.b16 %v3173, %v3171
    %v4186 = vpack.c.b16 %v3176, %v3174
    %v4187 = vpack.c.b16 %v3177, %v3175
    %v4188 = vpack.c.b16 %v3180, %v3178
    %v4189 = vpack.c.b16 %v3181, %v3179
    %v4190 = vpack.c.b16 %v3184, %v3182
    %v4191 = vpack.c.b16 %v3185, %v3183
    %v4192 = vpack.c.b16 %v3188, %v3186
    %v4193 = vpack.c.b16 %v3189, %v3187
    %v4194 = vpack.c.b16 %v3192, %v3190
    %v4195 = vpack.c.b16 %v3193, %v3191
    %v4196 = vpack.c.b16 %v3196, %v3194
    %v4197 = vpack.c.b16 %v3197, %v3195
    %v4198 = vpack.c.b16 %v3200, %v3198
    %v4199 = vpack.c.b16 %v3201, %v3199
    %v4200 = vpack.c.b16 %v3204, %v3202
    %v4201 = vpack.c.b16 %v3205, %v3203
    %v4202 = vpack.c.b16 %v3208, %v3206
    %v4203 = vpack.c.b16 %v3209, %v3207
    %v4204 = vpack.c.b16 %v3212, %v3210
    %v4205 = vpack.c.b16 %v3213, %v3211
    %v4206 = vpack.c.b16 %v3216, %v3214
    %v4207 = vpack.c.b16 %v3217, %v3215
    %v4208 = vpack.c.b16 %v3220, %v3218
    %v4209 = vpack.c.b16 %v3221, %v3219
    %v4210 = vpack.c.b16 %v3224, %v3222
    %v4211 = vpack.c.b16 %v3225, %v3223
    %v4212 = vpack.c.b16 %v3228, %v3226
    %v4213 = vpack.c.b16 %v3229, %v3227
    %v4214 = vpack.c.b16 %v3232, %v3230
    %v4215 = vpack.c.b16 %v3233, %v3231
    %v4216 = vpack.c.b16 %v3236, %v3234
    %v4217 = vpack.c.b16 %v3237, %v3235
    %v4218 = vpack.c.b16 %v3240, %v3238
    %v4219 = vpack.c.b16 %v3241, %v3239
    %v4220 = vpack.c.b16 %v3244, %v3242
    %v4221 = vpack.c.b16 %v3245, %v3243
    %v4222 = vpack.c.b16 %v3248, %v3246
    %v4223 = vpack.c.b16 %v3249, %v3247
    %v4224 = vpack.c.b16 %v3252, %v3250
    %v4225 = vpack.c.b16 %v3253, %v3251
    %v4226 = vpack.c.b16 %v3256, %v3254
    %v4227 = vpack.c.b16 %v3257, %v3255
    %v4228 = vpack.c.b16 %v3260, %v3258
    %v4229 = vpack.c.b16 %v3261, %v3259
    %v4230 = vpack.c.b16 %v3264, %v3262
    %v4231 = vpack.c.b16 %v3265, %v3263
    %v4232 = vpack.c.b16 %v3268, %v3266
    %v4233 = vpack.c.b16 %v3269, %v3267
    %v4234 = vpack.c.b16 %v3272, %v3270
    %v4235 = vpack.c.b16 %v3273, %v3271
    %v4236 = vpack.c.b16 %v3276, %v3274
    %v4237 = vpack.c.b16 %v3277, %v3275
    %v4238 = vpack.c.b16 %v3280, %v3278
    %v4239 = vpack.c.b16 %v3281, %v3279
    %v4240 = vpack.c.b16 %v3284, %v3282
    %v4241 = vpack.c.b16 %v3285, %v3283
    %v4242 = vpack.c.b16 %v3288, %v3286
    %v4243 = vpack.c.b16 %v3289, %v3287
    %v4244 = vpack.c.b16 %v3292, %v3290
    %v4245 = vpack.c.b16 %v3293, %v3291
    %v4246 = vpack.c.b16 %v3296, %v3294
    %v4247 = vpack.c.b16 %v3297, %v3295
    %v4248 = vpack.c.b16 %v3300, %v3298
    %v4249 = vpack.c.b16 %v3301, %v3299
    %v4250 = vpack.c.b16 %v3304, %v3302
    %v4251 = vpack.c.b16 %v3305, %v3303
    %v4252 = vpack.c.b16 %v3308, %v3306
    %v4253 = vpack.c.b16 %v3309, %v3307
    %v4254 = vpack.c.b16 %v3312, %v3310
    %v4255 = vpack.c.b16 %v3313, %v3311
    %v4256 = vpack.c.b16 %v3316, %v3314
    %v4257 = vpack.c.b16 %v3317, %v3315
    %v4258 = vpack.c.b16 %v3320, %v3318
    %v4259 = vpack.c.b16 %v3321, %v3319
    %v4260 = vpack.c.b16 %v3324, %v3322
    %v4261 = vpack.c.b16 %v3325, %v3323
    %v4262 = vpack.c.b16 %v3328, %v3326
    %v4263 = vpack.c.b16 %v3329, %v3327
    %v4264 = vpack.c.b16 %v3332, %v3330
    %v4265 = vpack.c.b16 %v3333, %v3331
    %v4266 = vpack.c.b16 %v3336, %v3334
    %v4267 = vpack.c.b16 %v3337, %v3335
    %v4268 = vpack.c.b16 %v3340, %v3338
    %v4269 = vpack.c.b16 %v3341, %v3339
    %v4270 = vpack.c.b16 %v3344, %v3342
    %v4271 = vpack.c.b16 %v3345, %v3343
    %v4272 = vpack.c.b16 %v3348, %v3346
    %v4273 = vpack.c.b16 %v3349, %v3347
    %v4274 = vpack.c.b16 %v3352, %v3350
    %v4275 = vpack.c.b16 %v3353, %v3351
    %v4276 = vpack.c.b16 %v3356, %v3354
    %v4277 = vpack.c.b16 %v3357, %v3355
    %v4278 = vpack.c.b16 %v3360, %v3358
    %v4279 = vpack.c.b16 %v3361, %v3359
    %v4280 = vpack.c.b16 %v3364, %v3362
    %v4281 = vpack.c.b16 %v3365, %v3363
    %v4282 = vpack.c.b16 %v3368, %v3366
    %v4283 = vpack.c.b16 %v3369, %v3367
    %v4284 = vpack.c.b16 %v3372, %v3370
    %v4285 = vpack.c.b16 %v3373, %v3371
    %v4286 = vpack.c.b16 %v3376, %v3374
    %v4287 = vpack.c.b16 %v3377, %v3375
    %v4288 = vpack.c.b16 %v3380, %v3378
    %v4289 = vpack.c.b16 %v3381, %v3379
    %v4290 = vpack.c.b16 %v3384, %v3382
    %v4291 = vpack.c.b16 %v3385, %v3383
    %v4292 = vpack.c.b16 %v3388, %v3386
    %v4293 = vpack.c.b16 %v3389, %v3387
    %v4294 = vpack.c.b16 %v3392, %v3390
    %v4295 = vpack.c.b16 %v3393, %v3391
    %v4296 = vpack.c.b16 %v3396, %v3394
    %v4297 = vpack.c.b16 %v3397, %v3395
    %v4298 = vpack.c.b16 %v3400, %v3398
    %v4299 = vpack.c.b16 %v3401, %v3399
    %v4300 = vpack.c.b16 %v3404, %v3402
    %v4301 = vpack.c.b16 %v3405, %v3403
    %v4302 = vpack.c.b16 %v3408, %v3406
    %v4303 = vpack.c.b16 %v3409, %v3407
    %v4304 = vpack.c.b16 %v3412, %v3410
    %v4305 = vpack.c.b16 %v3413, %v3411
    %v4306 = vpack.c.b16 %v3416, %v3414
    %v4307 = vpack.c.b16 %v3417, %v3415
    %v4308 = vpack.c.b16 %v3420, %v3418
    %v4309 = vpack.c.b16 %v3421, %v3419
    %v4310 = vpack.c.b16 %v3424, %v3422
    %v4311 = vpack.c.b16 %v3425, %v3423
    %v4312 = vpack.c.b16 %v3428, %v3426
    %v4313 = vpack.c.b16 %v3429, %v3427
    %v4314 = vpack.c.b16 %v3432, %v3430
    %v4315 = vpack.c.b16 %v3433, %v3431
    %v4316 = vpack.c.b16 %v3436, %v3434
    %v4317 = vpack.c.b16 %v3437, %v3435
    %v4318 = vpack.c.b16 %v3440, %v3438
    %v4319 = vpack.c.b16 %v3441, %v3439
    %v4320 = vpack.c.b16 %v3444, %v3442
    %v4321 = vpack.c.b16 %v3445, %v3443
    %v4322 = vpack.c.b16 %v3448, %v3446
    %v4323 = vpack.c.b16 %v3449, %v3447
    %v4324 = vpack.c.b16 %v3452, %v3450
    %v4325 = vpack.c.b16 %v3453, %v3451
    %v4326 = vpack.c.b16 %v3456, %v3454
    %v4327 = vpack.c.b16 %v3457, %v3455
    %v4328 = vpack.c.b16 %v3460, %v3458
    %v4329 = vpack.c.b16 %v3461, %v3459
    %v4330 = vpack.c.b16 %v3464, %v3462
    %v4331 = vpack.c.b16 %v3465, %v3463
    %v4332 = vpack.c.b16 %v3468, %v3466
    %v4333 = vpack.c.b16 %v3469, %v3467
    %v4334 = vpack.c.b16 %v3472, %v3470
    %v4335 = vpack.c.b16 %v3473, %v3471
    %v4336 = vpack.c.b16 %v3476, %v3474
    %v4337 = vpack.c.b16 %v3477, %v3475
    %v4338 = vpack.c.b16 %v3480, %v3478
    %v4339 = vpack.c.b16 %v3481, %v3479
    %v4340 = vpack.c.b16 %v3484, %v3482
    %v4341 = vpack.c.b16 %v3485, %v3483
    %v4342 = vpack.c.b16 %v3488, %v3486
    %v4343 = vpack.c.b16 %v3489, %v3487
    %v4344 = vpack.c.b16 %v3492, %v3490
    %v4345 = vpack.c.b16 %v3493, %v3491
    %v4346 = vpack.c.b16 %v3496, %v3494
    %v4347 = vpack.c.b16 %v3497, %v3495
    %v4348 = vpack.c.b16 %v3500, %v3498
    %v4349 = vpack.c.b16 %v3501, %v3499
    %v4350 = vpack.c.b16 %v3504, %v3502
    %v4351 = vpack.c.b16 %v3505, %v3503
    %v4352 = vpack.c.b16 %v3508, %v3506
    %v4353 = vpack.c.b16 %v3509, %v3507
    %v4354 = vpack.c.b16 %v3512, %v3510
    %v4355 = vpack.c.b16 %v3513, %v3511
    %v4356 = vpack.c.b16 %v3516, %v3514
    %v4357 = vpack.c.b16 %v3517, %v3515
    %v4358 = vpack.c.b16 %v3520, %v3518
    %v4359 = vpack.c.b16 %v3521, %v3519
    %v4360 = vpack.c.b16 %v3524, %v3522
    %v4361 = vpack.c.b16 %v3525, %v3523
    %v4362 = vpack.c.b16 %v3528, %v3526
    %v4363 = vpack.c.b16 %v3529, %v3527
    %v4364 = vpack.c.b16 %v3532, %v3530
    %v4365 = vpack.c.b16 %v3533, %v3531
    %v4366 = vpack.c.b16 %v3536, %v3534
    %v4367 = vpack.c.b16 %v3537, %v3535
    %v4368 = vpack.c.b16 %v3540, %v3538
    %v4369 = vpack.c.b16 %v3541, %v3539
    %v4370 = vpack.c.b16 %v3544, %v3542
    %v4371 = vpack.c.b16 %v3545, %v3543
    %v4372 = vpack.c.b16 %v3548, %v3546
    %v4373 = vpack.c.b16 %v3549, %v3547
    %v4374 = vpack.c.b16 %v3552, %v3550
    %v4375 = vpack.c.b16 %v3553, %v3551
    %v4376 = vpack.c.b16 %v3556, %v3554
    %v4377 = vpack.c.b16 %v3557, %v3555
    %v4378 = vpack.c.b16 %v3560, %v3558
    %v4379 = vpack.c.b16 %v3561, %v3559
    %v4380 = vpack.c.b16 %v3564, %v3562
    %v4381 = vpack.c.b16 %v3565, %v3563
    %v4382 = vpack.c.b16 %v3568, %v3566
    %v4383 = vpack.c.b16 %v3569, %v3567
    %v4384 = vpack.c.b16 %v3572, %v3570
    %v4385 = vpack.c.b16 %v3573, %v3571
    %v4386 = vpack.c.b16 %v3576, %v3574
    %v4387 = vpack.c.b16 %v3577, %v3575
    %v4388 = vpack.c.b16 %v3580, %v3578
    %v4389 = vpack.c.b16 %v3581, %v3579
    %v4390 = vpack.c.b16 %v3584, %v3582
    %v4391 = vpack.c.b16 %v3585, %v3583
    %v4392 = vpack.c.b16 %v3588, %v3586
    %v4393 = vpack.c.b16 %v3589, %v3587
    %v4394 = vpack.c.b16 %v3592, %v3590
    %v4395 = vpack.c.b16 %v3593, %v3591
    %v4396 = vpack.c.b16 %v3596, %v3594
    %v4397 = vpack.c.b16 %v3597, %v3595
    %5198 = vmatprep.subr.bf16.mxu0 %v3613
    %5199 = vmatpush1.bf16.msra.mxu0 %v3612
    %5200 = vmatprep.subr.bf16.mxu0 %v3611
    %5201 = vmatpush1.bf16.msra.mxu0 %v3610
    %5202 = vmatprep.subr.bf16.mxu0 %v3609
    %5203 = vmatpush1.bf16.msra.mxu0 %v3608
    %5204 = vmatprep.subr.bf16.mxu0 %v3607
    %5205 = vmatpush1.bf16.msra.mxu0 %v3606
    %5206 = vmatprep.subr.bf16.mxu0 %v3605
    %5207 = vmatpush1.bf16.msra.mxu0 %v3604
    %5208 = vmatprep.subr.bf16.mxu0 %v3603
    %5209 = vmatpush1.bf16.msra.mxu0 %v3602
    %5210 = vmatprep.subr.bf16.mxu0 %v3601
    %5211 = vmatpush1.bf16.msra.mxu0 %v3600
    %5212 = vmatprep.subr.bf16.mxu0 %v3599
    %5213 = vmatpush1.bf16.msra.mxu0 %v3598
    %5214 = vmatprep.subr.bf16.mxu0 %v3629
    %5215 = vmatpush2.bf16.msra.mxu0 %v3628
    %5216 = vmatprep.subr.bf16.mxu0 %v3627
    %5217 = vmatpush2.bf16.msra.mxu0 %v3626
    %5218 = vmatprep.subr.bf16.mxu0 %v3625
    %5219 = vmatpush2.bf16.msra.mxu0 %v3624
    %5220 = vmatprep.subr.bf16.mxu0 %v3623
    %5221 = vmatpush2.bf16.msra.mxu0 %v3622
    %5222 = vmatprep.subr.bf16.mxu0 %v3621
    %5223 = vmatpush2.bf16.msra.mxu0 %v3620
    %5224 = vmatprep.subr.bf16.mxu0 %v3619
    %5225 = vmatpush2.bf16.msra.mxu0 %v3618
    %5226 = vmatprep.subr.bf16.mxu0 %v3617
    %5227 = vmatpush2.bf16.msra.mxu0 %v3616
    %5228 = vmatprep.subr.bf16.mxu0 %v3615
    %5229 = vmatpush2.bf16.msra.mxu0 %v3614
    %5230 = vmatprep.mubr.bf16.mxu0 %v1099
    %5231 = vmatmul.mubr.bf16.gmra.mxu0 %v1098
    %v5232 = vpop.f32.mrf.mxu0
    %v5233 = vadd.f32 %v941, %v5232
    %v5234 = vpop.f32.mrf.mxu0
    %v5235 = vadd.f32 %v945, %v5234
    %v5236 = vpop.f32.mrf.mxu0
    %v5237 = vadd.f32 %v941, %v5236
    %v5238 = vpop.f32.mrf.mxu0
    %v5239 = vadd.f32 %v945, %v5238
    %5240 = vdwg.mxu0
    %5241 = vmatprep.subr.bf16.mxu0 %v3645
    %5242 = vmatpush1.bf16.msra.mxu0 %v3644
    %5243 = vmatprep.subr.bf16.mxu0 %v3643
    %5244 = vmatpush1.bf16.msra.mxu0 %v3642
    %5245 = vmatprep.subr.bf16.mxu0 %v3641
    %5246 = vmatpush1.bf16.msra.mxu0 %v3640
    %5247 = vmatprep.subr.bf16.mxu0 %v3639
    %5248 = vmatpush1.bf16.msra.mxu0 %v3638
    %5249 = vmatprep.subr.bf16.mxu0 %v3637
    %5250 = vmatpush1.bf16.msra.mxu0 %v3636
    %5251 = vmatprep.subr.bf16.mxu0 %v3635
    %5252 = vmatpush1.bf16.msra.mxu0 %v3634
    %5253 = vmatprep.subr.bf16.mxu0 %v3633
    %5254 = vmatpush1.bf16.msra.mxu0 %v3632
    %5255 = vmatprep.subr.bf16.mxu0 %v3631
    %5256 = vmatpush1.bf16.msra.mxu0 %v3630
    %5257 = vmatprep.subr.bf16.mxu0 %v3661
    %5258 = vmatpush2.bf16.msra.mxu0 %v3660
    %5259 = vmatprep.subr.bf16.mxu0 %v3659
    %5260 = vmatpush2.bf16.msra.mxu0 %v3658
    %5261 = vmatprep.subr.bf16.mxu0 %v3657
    %5262 = vmatpush2.bf16.msra.mxu0 %v3656
    %5263 = vmatprep.subr.bf16.mxu0 %v3655
    %5264 = vmatpush2.bf16.msra.mxu0 %v3654
    %5265 = vmatprep.subr.bf16.mxu0 %v3653
    %5266 = vmatpush2.bf16.msra.mxu0 %v3652
    %5267 = vmatprep.subr.bf16.mxu0 %v3651
    %5268 = vmatpush2.bf16.msra.mxu0 %v3650
    %5269 = vmatprep.subr.bf16.mxu0 %v3649
    %5270 = vmatpush2.bf16.msra.mxu0 %v3648
    %5271 = vmatprep.subr.bf16.mxu0 %v3647
    %5272 = vmatpush2.bf16.msra.mxu0 %v3646
    %5273 = vmatprep.mubr.bf16.mxu0 %v1101
    %5274 = vmatmul.mubr.bf16.gmra.mxu0 %v1100
    %v5275 = vpop.f32.mrf.mxu0
    %v5276 = vadd.f32 %v5233, %v5275
    %v5277 = vpop.f32.mrf.mxu0
    %v5278 = vadd.f32 %v5235, %v5277
    %v5279 = vpop.f32.mrf.mxu0
    %v5280 = vadd.f32 %v5237, %v5279
    %v5281 = vpop.f32.mrf.mxu0
    %v5282 = vadd.f32 %v5239, %v5281
    %5283 = vdwg.mxu0
    %5284 = vmatprep.subr.bf16.mxu0 %v3677
    %5285 = vmatpush1.bf16.msra.mxu0 %v3676
    %5286 = vmatprep.subr.bf16.mxu0 %v3675
    %5287 = vmatpush1.bf16.msra.mxu0 %v3674
    %5288 = vmatprep.subr.bf16.mxu0 %v3673
    %5289 = vmatpush1.bf16.msra.mxu0 %v3672
    %5290 = vmatprep.subr.bf16.mxu0 %v3671
    %5291 = vmatpush1.bf16.msra.mxu0 %v3670
    %5292 = vmatprep.subr.bf16.mxu0 %v3669
    %5293 = vmatpush1.bf16.msra.mxu0 %v3668
    %5294 = vmatprep.subr.bf16.mxu0 %v3667
    %5295 = vmatpush1.bf16.msra.mxu0 %v3666
    %5296 = vmatprep.subr.bf16.mxu0 %v3665
    %5297 = vmatpush1.bf16.msra.mxu0 %v3664
    %5298 = vmatprep.subr.bf16.mxu0 %v3663
    %5299 = vmatpush1.bf16.msra.mxu0 %v3662
    %5300 = vmatprep.subr.bf16.mxu0 %v3693
    %5301 = vmatpush2.bf16.msra.mxu0 %v3692
    %5302 = vmatprep.subr.bf16.mxu0 %v3691
    %5303 = vmatpush2.bf16.msra.mxu0 %v3690
    %5304 = vmatprep.subr.bf16.mxu0 %v3689
    %5305 = vmatpush2.bf16.msra.mxu0 %v3688
    %5306 = vmatprep.subr.bf16.mxu0 %v3687
    %5307 = vmatpush2.bf16.msra.mxu0 %v3686
    %5308 = vmatprep.subr.bf16.mxu0 %v3685
    %5309 = vmatpush2.bf16.msra.mxu0 %v3684
    %5310 = vmatprep.subr.bf16.mxu0 %v3683
    %5311 = vmatpush2.bf16.msra.mxu0 %v3682
    %5312 = vmatprep.subr.bf16.mxu0 %v3681
    %5313 = vmatpush2.bf16.msra.mxu0 %v3680
    %5314 = vmatprep.subr.bf16.mxu0 %v3679
    %5315 = vmatpush2.bf16.msra.mxu0 %v3678
    %5316 = vmatprep.mubr.bf16.mxu0 %v1103
    %5317 = vmatmul.mubr.bf16.gmra.mxu0 %v1102
    %v5318 = vpop.f32.mrf.mxu0
    %v5319 = vadd.f32 %v5276, %v5318
    %v5320 = vpop.f32.mrf.mxu0
    %v5321 = vadd.f32 %v5278, %v5320
    %v5322 = vpop.f32.mrf.mxu0
    %v5323 = vadd.f32 %v5280, %v5322
    %v5324 = vpop.f32.mrf.mxu0
    %v5325 = vadd.f32 %v5282, %v5324
    %5326 = vdwg.mxu0
    %5327 = vmatprep.subr.bf16.mxu0 %v3709
    %5328 = vmatpush1.bf16.msra.mxu0 %v3708
    %5329 = vmatprep.subr.bf16.mxu0 %v3707
    %5330 = vmatpush1.bf16.msra.mxu0 %v3706
    %5331 = vmatprep.subr.bf16.mxu0 %v3705
    %5332 = vmatpush1.bf16.msra.mxu0 %v3704
    %5333 = vmatprep.subr.bf16.mxu0 %v3703
    %5334 = vmatpush1.bf16.msra.mxu0 %v3702
    %5335 = vmatprep.subr.bf16.mxu0 %v3701
    %5336 = vmatpush1.bf16.msra.mxu0 %v3700
    %5337 = vmatprep.subr.bf16.mxu0 %v3699
    %5338 = vmatpush1.bf16.msra.mxu0 %v3698
    %5339 = vmatprep.subr.bf16.mxu0 %v3697
    %5340 = vmatpush1.bf16.msra.mxu0 %v3696
    %5341 = vmatprep.subr.bf16.mxu0 %v3695
    %5342 = vmatpush1.bf16.msra.mxu0 %v3694
    %5343 = vmatprep.subr.bf16.mxu0 %v3725
    %5344 = vmatpush2.bf16.msra.mxu0 %v3724
    %5345 = vmatprep.subr.bf16.mxu0 %v3723
    %5346 = vmatpush2.bf16.msra.mxu0 %v3722
    %5347 = vmatprep.subr.bf16.mxu0 %v3721
    %5348 = vmatpush2.bf16.msra.mxu0 %v3720
    %5349 = vmatprep.subr.bf16.mxu0 %v3719
    %5350 = vmatpush2.bf16.msra.mxu0 %v3718
    %5351 = vmatprep.subr.bf16.mxu0 %v3717
    %5352 = vmatpush2.bf16.msra.mxu0 %v3716
    %5353 = vmatprep.subr.bf16.mxu0 %v3715
    %5354 = vmatpush2.bf16.msra.mxu0 %v3714
    %5355 = vmatprep.subr.bf16.mxu0 %v3713
    %5356 = vmatpush2.bf16.msra.mxu0 %v3712
    %5357 = vmatprep.subr.bf16.mxu0 %v3711
    %5358 = vmatpush2.bf16.msra.mxu0 %v3710
    %5359 = vmatprep.mubr.bf16.mxu0 %v1105
    %5360 = vmatmul.mubr.bf16.gmra.mxu0 %v1104
    %v5361 = vpop.f32.mrf.mxu0
    %v5362 = vadd.f32 %v5319, %v5361
    %v5363 = vpop.f32.mrf.mxu0
    %v5364 = vadd.f32 %v5321, %v5363
    %v5365 = vpop.f32.mrf.mxu0
    %v5366 = vadd.f32 %v5323, %v5365
    %v5367 = vpop.f32.mrf.mxu0
    %v5368 = vadd.f32 %v5325, %v5367
    %5369 = vdwg.mxu0
    %5370 = vmatprep.subr.bf16.mxu0 %v3741
    %5371 = vmatpush1.bf16.msra.mxu0 %v3740
    %5372 = vmatprep.subr.bf16.mxu0 %v3739
    %5373 = vmatpush1.bf16.msra.mxu0 %v3738
    %5374 = vmatprep.subr.bf16.mxu0 %v3737
    %5375 = vmatpush1.bf16.msra.mxu0 %v3736
    %5376 = vmatprep.subr.bf16.mxu0 %v3735
    %5377 = vmatpush1.bf16.msra.mxu0 %v3734
    %5378 = vmatprep.subr.bf16.mxu0 %v3733
    %5379 = vmatpush1.bf16.msra.mxu0 %v3732
    %5380 = vmatprep.subr.bf16.mxu0 %v3731
    %5381 = vmatpush1.bf16.msra.mxu0 %v3730
    %5382 = vmatprep.subr.bf16.mxu0 %v3729
    %5383 = vmatpush1.bf16.msra.mxu0 %v3728
    %5384 = vmatprep.subr.bf16.mxu0 %v3727
    %5385 = vmatpush1.bf16.msra.mxu0 %v3726
    %5386 = vmatprep.subr.bf16.mxu0 %v3757
    %5387 = vmatpush2.bf16.msra.mxu0 %v3756
    %5388 = vmatprep.subr.bf16.mxu0 %v3755
    %5389 = vmatpush2.bf16.msra.mxu0 %v3754
    %5390 = vmatprep.subr.bf16.mxu0 %v3753
    %5391 = vmatpush2.bf16.msra.mxu0 %v3752
    %5392 = vmatprep.subr.bf16.mxu0 %v3751
    %5393 = vmatpush2.bf16.msra.mxu0 %v3750
    %5394 = vmatprep.subr.bf16.mxu0 %v3749
    %5395 = vmatpush2.bf16.msra.mxu0 %v3748
    %5396 = vmatprep.subr.bf16.mxu0 %v3747
    %5397 = vmatpush2.bf16.msra.mxu0 %v3746
    %5398 = vmatprep.subr.bf16.mxu0 %v3745
    %5399 = vmatpush2.bf16.msra.mxu0 %v3744
    %5400 = vmatprep.subr.bf16.mxu0 %v3743
    %5401 = vmatpush2.bf16.msra.mxu0 %v3742
    %5402 = vmatprep.mubr.bf16.mxu0 %v1107
    %5403 = vmatmul.mubr.bf16.gmra.mxu0 %v1106
    %v5404 = vpop.f32.mrf.mxu0
    %v5405 = vadd.f32 %v5362, %v5404
    %v5406 = vpop.f32.mrf.mxu0
    %v5407 = vadd.f32 %v5364, %v5406
    %v5408 = vpop.f32.mrf.mxu0
    %v5409 = vadd.f32 %v5366, %v5408
    %v5410 = vpop.f32.mrf.mxu0
    %v5411 = vadd.f32 %v5368, %v5410
    %5412 = vdwg.mxu0
    %5413 = vmatprep.subr.bf16.mxu0 %v3773
    %5414 = vmatpush1.bf16.msra.mxu0 %v3772
    %5415 = vmatprep.subr.bf16.mxu0 %v3771
    %5416 = vmatpush1.bf16.msra.mxu0 %v3770
    %5417 = vmatprep.subr.bf16.mxu0 %v3769
    %5418 = vmatpush1.bf16.msra.mxu0 %v3768
    %5419 = vmatprep.subr.bf16.mxu0 %v3767
    %5420 = vmatpush1.bf16.msra.mxu0 %v3766
    %5421 = vmatprep.subr.bf16.mxu0 %v3765
    %5422 = vmatpush1.bf16.msra.mxu0 %v3764
    %5423 = vmatprep.subr.bf16.mxu0 %v3763
    %5424 = vmatpush1.bf16.msra.mxu0 %v3762
    %5425 = vmatprep.subr.bf16.mxu0 %v3761
    %5426 = vmatpush1.bf16.msra.mxu0 %v3760
    %5427 = vmatprep.subr.bf16.mxu0 %v3759
    %5428 = vmatpush1.bf16.msra.mxu0 %v3758
    %5429 = vmatprep.subr.bf16.mxu0 %v3789
    %5430 = vmatpush2.bf16.msra.mxu0 %v3788
    %5431 = vmatprep.subr.bf16.mxu0 %v3787
    %5432 = vmatpush2.bf16.msra.mxu0 %v3786
    %5433 = vmatprep.subr.bf16.mxu0 %v3785
    %5434 = vmatpush2.bf16.msra.mxu0 %v3784
    %5435 = vmatprep.subr.bf16.mxu0 %v3783
    %5436 = vmatpush2.bf16.msra.mxu0 %v3782
    %5437 = vmatprep.subr.bf16.mxu0 %v3781
    %5438 = vmatpush2.bf16.msra.mxu0 %v3780
    %5439 = vmatprep.subr.bf16.mxu0 %v3779
    %5440 = vmatpush2.bf16.msra.mxu0 %v3778
    %5441 = vmatprep.subr.bf16.mxu0 %v3777
    %5442 = vmatpush2.bf16.msra.mxu0 %v3776
    %5443 = vmatprep.subr.bf16.mxu0 %v3775
    %5444 = vmatpush2.bf16.msra.mxu0 %v3774
    %5445 = vmatprep.mubr.bf16.mxu0 %v1109
    %5446 = vmatmul.mubr.bf16.gmra.mxu0 %v1108
    %v5447 = vpop.f32.mrf.mxu0
    %v5448 = vadd.f32 %v5405, %v5447
    %v5449 = vpop.f32.mrf.mxu0
    %v5450 = vadd.f32 %v5407, %v5449
    %v5451 = vpop.f32.mrf.mxu0
    %v5452 = vadd.f32 %v5409, %v5451
    %v5453 = vpop.f32.mrf.mxu0
    %v5454 = vadd.f32 %v5411, %v5453
    %5455 = vdwg.mxu0
    %5456 = vmatprep.subr.bf16.mxu0 %v3805
    %5457 = vmatpush1.bf16.msra.mxu0 %v3804
    %5458 = vmatprep.subr.bf16.mxu0 %v3803
    %5459 = vmatpush1.bf16.msra.mxu0 %v3802
    %5460 = vmatprep.subr.bf16.mxu0 %v3801
    %5461 = vmatpush1.bf16.msra.mxu0 %v3800
    %5462 = vmatprep.subr.bf16.mxu0 %v3799
    %5463 = vmatpush1.bf16.msra.mxu0 %v3798
    %5464 = vmatprep.subr.bf16.mxu0 %v3797
    %5465 = vmatpush1.bf16.msra.mxu0 %v3796
    %5466 = vmatprep.subr.bf16.mxu0 %v3795
    %5467 = vmatpush1.bf16.msra.mxu0 %v3794
    %5468 = vmatprep.subr.bf16.mxu0 %v3793
    %5469 = vmatpush1.bf16.msra.mxu0 %v3792
    %5470 = vmatprep.subr.bf16.mxu0 %v3791
    %5471 = vmatpush1.bf16.msra.mxu0 %v3790
    %5472 = vmatprep.subr.bf16.mxu0 %v3821
    %5473 = vmatpush2.bf16.msra.mxu0 %v3820
    %5474 = vmatprep.subr.bf16.mxu0 %v3819
    %5475 = vmatpush2.bf16.msra.mxu0 %v3818
    %5476 = vmatprep.subr.bf16.mxu0 %v3817
    %5477 = vmatpush2.bf16.msra.mxu0 %v3816
    %5478 = vmatprep.subr.bf16.mxu0 %v3815
    %5479 = vmatpush2.bf16.msra.mxu0 %v3814
    %5480 = vmatprep.subr.bf16.mxu0 %v3813
    %5481 = vmatpush2.bf16.msra.mxu0 %v3812
    %5482 = vmatprep.subr.bf16.mxu0 %v3811
    %5483 = vmatpush2.bf16.msra.mxu0 %v3810
    %5484 = vmatprep.subr.bf16.mxu0 %v3809
    %5485 = vmatpush2.bf16.msra.mxu0 %v3808
    %5486 = vmatprep.subr.bf16.mxu0 %v3807
    %5487 = vmatpush2.bf16.msra.mxu0 %v3806
    %5488 = vmatprep.mubr.bf16.mxu0 %v1111
    %5489 = vmatmul.mubr.bf16.gmra.mxu0 %v1110
    %v5490 = vpop.f32.mrf.mxu0
    %v5491 = vadd.f32 %v5448, %v5490
    %v5492 = vpop.f32.mrf.mxu0
    %v5493 = vadd.f32 %v5450, %v5492
    %v5494 = vpop.f32.mrf.mxu0
    %v5495 = vadd.f32 %v5452, %v5494
    %v5496 = vpop.f32.mrf.mxu0
    %v5497 = vadd.f32 %v5454, %v5496
    %5498 = vdwg.mxu0
    %5499 = vmatprep.subr.bf16.mxu0 %v3837
    %5500 = vmatpush1.bf16.msra.mxu0 %v3836
    %5501 = vmatprep.subr.bf16.mxu0 %v3835
    %5502 = vmatpush1.bf16.msra.mxu0 %v3834
    %5503 = vmatprep.subr.bf16.mxu0 %v3833
    %5504 = vmatpush1.bf16.msra.mxu0 %v3832
    %5505 = vmatprep.subr.bf16.mxu0 %v3831
    %5506 = vmatpush1.bf16.msra.mxu0 %v3830
    %5507 = vmatprep.subr.bf16.mxu0 %v3829
    %5508 = vmatpush1.bf16.msra.mxu0 %v3828
    %5509 = vmatprep.subr.bf16.mxu0 %v3827
    %5510 = vmatpush1.bf16.msra.mxu0 %v3826
    %5511 = vmatprep.subr.bf16.mxu0 %v3825
    %5512 = vmatpush1.bf16.msra.mxu0 %v3824
    %5513 = vmatprep.subr.bf16.mxu0 %v3823
    %5514 = vmatpush1.bf16.msra.mxu0 %v3822
    %5515 = vmatprep.subr.bf16.mxu0 %v3853
    %5516 = vmatpush2.bf16.msra.mxu0 %v3852
    %5517 = vmatprep.subr.bf16.mxu0 %v3851
    %5518 = vmatpush2.bf16.msra.mxu0 %v3850
    %5519 = vmatprep.subr.bf16.mxu0 %v3849
    %5520 = vmatpush2.bf16.msra.mxu0 %v3848
    %5521 = vmatprep.subr.bf16.mxu0 %v3847
    %5522 = vmatpush2.bf16.msra.mxu0 %v3846
    %5523 = vmatprep.subr.bf16.mxu0 %v3845
    %5524 = vmatpush2.bf16.msra.mxu0 %v3844
    %5525 = vmatprep.subr.bf16.mxu0 %v3843
    %5526 = vmatpush2.bf16.msra.mxu0 %v3842
    %5527 = vmatprep.subr.bf16.mxu0 %v3841
    %5528 = vmatpush2.bf16.msra.mxu0 %v3840
    %5529 = vmatprep.subr.bf16.mxu0 %v3839
    %5530 = vmatpush2.bf16.msra.mxu0 %v3838
    %5531 = vmatprep.mubr.bf16.mxu0 %v1113
    %5532 = vmatmul.mubr.bf16.gmra.mxu0 %v1112
    %v5533 = vpop.f32.mrf.mxu0
    %v5534 = vadd.f32 %v5491, %v5533
    %v5535 = vpop.f32.mrf.mxu0
    %v5536 = vadd.f32 %v5493, %v5535
    %v5537 = vpop.f32.mrf.mxu0
    %v5538 = vadd.f32 %v5495, %v5537
    %v5539 = vpop.f32.mrf.mxu0
    %v5540 = vadd.f32 %v5497, %v5539
    %5541 = vdwg.mxu0
    %5542 = vmatprep.subr.bf16.mxu0 %v3869
    %5543 = vmatpush1.bf16.msra.mxu0 %v3868
    %5544 = vmatprep.subr.bf16.mxu0 %v3867
    %5545 = vmatpush1.bf16.msra.mxu0 %v3866
    %5546 = vmatprep.subr.bf16.mxu0 %v3865
    %5547 = vmatpush1.bf16.msra.mxu0 %v3864
    %5548 = vmatprep.subr.bf16.mxu0 %v3863
    %5549 = vmatpush1.bf16.msra.mxu0 %v3862
    %5550 = vmatprep.subr.bf16.mxu0 %v3861
    %5551 = vmatpush1.bf16.msra.mxu0 %v3860
    %5552 = vmatprep.subr.bf16.mxu0 %v3859
    %5553 = vmatpush1.bf16.msra.mxu0 %v3858
    %5554 = vmatprep.subr.bf16.mxu0 %v3857
    %5555 = vmatpush1.bf16.msra.mxu0 %v3856
    %5556 = vmatprep.subr.bf16.mxu0 %v3855
    %5557 = vmatpush1.bf16.msra.mxu0 %v3854
    %5558 = vmatprep.subr.bf16.mxu0 %v3885
    %5559 = vmatpush2.bf16.msra.mxu0 %v3884
    %5560 = vmatprep.subr.bf16.mxu0 %v3883
    %5561 = vmatpush2.bf16.msra.mxu0 %v3882
    %5562 = vmatprep.subr.bf16.mxu0 %v3881
    %5563 = vmatpush2.bf16.msra.mxu0 %v3880
    %5564 = vmatprep.subr.bf16.mxu0 %v3879
    %5565 = vmatpush2.bf16.msra.mxu0 %v3878
    %5566 = vmatprep.subr.bf16.mxu0 %v3877
    %5567 = vmatpush2.bf16.msra.mxu0 %v3876
    %5568 = vmatprep.subr.bf16.mxu0 %v3875
    %5569 = vmatpush2.bf16.msra.mxu0 %v3874
    %5570 = vmatprep.subr.bf16.mxu0 %v3873
    %5571 = vmatpush2.bf16.msra.mxu0 %v3872
    %5572 = vmatprep.subr.bf16.mxu0 %v3871
    %5573 = vmatpush2.bf16.msra.mxu0 %v3870
    %5574 = vmatprep.mubr.bf16.mxu0 %v1115
    %5575 = vmatmul.mubr.bf16.gmra.mxu0 %v1114
    %v5576 = vpop.f32.mrf.mxu0
    %v5577 = vadd.f32 %v5534, %v5576
    %v5578 = vpop.f32.mrf.mxu0
    %v5579 = vadd.f32 %v5536, %v5578
    %v5580 = vpop.f32.mrf.mxu0
    %v5581 = vadd.f32 %v5538, %v5580
    %v5582 = vpop.f32.mrf.mxu0
    %v5583 = vadd.f32 %v5540, %v5582
    %5584 = vdwg.mxu0
    %5585 = vmatprep.subr.bf16.mxu0 %v3901
    %5586 = vmatpush1.bf16.msra.mxu0 %v3900
    %5587 = vmatprep.subr.bf16.mxu0 %v3899
    %5588 = vmatpush1.bf16.msra.mxu0 %v3898
    %5589 = vmatprep.subr.bf16.mxu0 %v3897
    %5590 = vmatpush1.bf16.msra.mxu0 %v3896
    %5591 = vmatprep.subr.bf16.mxu0 %v3895
    %5592 = vmatpush1.bf16.msra.mxu0 %v3894
    %5593 = vmatprep.subr.bf16.mxu0 %v3893
    %5594 = vmatpush1.bf16.msra.mxu0 %v3892
    %5595 = vmatprep.subr.bf16.mxu0 %v3891
    %5596 = vmatpush1.bf16.msra.mxu0 %v3890
    %5597 = vmatprep.subr.bf16.mxu0 %v3889
    %5598 = vmatpush1.bf16.msra.mxu0 %v3888
    %5599 = vmatprep.subr.bf16.mxu0 %v3887
    %5600 = vmatpush1.bf16.msra.mxu0 %v3886
    %5601 = vmatprep.subr.bf16.mxu0 %v3917
    %5602 = vmatpush2.bf16.msra.mxu0 %v3916
    %5603 = vmatprep.subr.bf16.mxu0 %v3915
    %5604 = vmatpush2.bf16.msra.mxu0 %v3914
    %5605 = vmatprep.subr.bf16.mxu0 %v3913
    %5606 = vmatpush2.bf16.msra.mxu0 %v3912
    %5607 = vmatprep.subr.bf16.mxu0 %v3911
    %5608 = vmatpush2.bf16.msra.mxu0 %v3910
    %5609 = vmatprep.subr.bf16.mxu0 %v3909
    %5610 = vmatpush2.bf16.msra.mxu0 %v3908
    %5611 = vmatprep.subr.bf16.mxu0 %v3907
    %5612 = vmatpush2.bf16.msra.mxu0 %v3906
    %5613 = vmatprep.subr.bf16.mxu0 %v3905
    %5614 = vmatpush2.bf16.msra.mxu0 %v3904
    %5615 = vmatprep.subr.bf16.mxu0 %v3903
    %5616 = vmatpush2.bf16.msra.mxu0 %v3902
    %5617 = vmatprep.mubr.bf16.mxu0 %v1117
    %5618 = vmatmul.mubr.bf16.gmra.mxu0 %v1116
    %v5619 = vpop.f32.mrf.mxu0
    %v5620 = vadd.f32 %v5577, %v5619
    %v5621 = vpop.f32.mrf.mxu0
    %v5622 = vadd.f32 %v5579, %v5621
    %v5623 = vpop.f32.mrf.mxu0
    %v5624 = vadd.f32 %v5581, %v5623
    %v5625 = vpop.f32.mrf.mxu0
    %v5626 = vadd.f32 %v5583, %v5625
    %5627 = vdwg.mxu0
    %5628 = vmatprep.subr.bf16.mxu0 %v3933
    %5629 = vmatpush1.bf16.msra.mxu0 %v3932
    %5630 = vmatprep.subr.bf16.mxu0 %v3931
    %5631 = vmatpush1.bf16.msra.mxu0 %v3930
    %5632 = vmatprep.subr.bf16.mxu0 %v3929
    %5633 = vmatpush1.bf16.msra.mxu0 %v3928
    %5634 = vmatprep.subr.bf16.mxu0 %v3927
    %5635 = vmatpush1.bf16.msra.mxu0 %v3926
    %5636 = vmatprep.subr.bf16.mxu0 %v3925
    %5637 = vmatpush1.bf16.msra.mxu0 %v3924
    %5638 = vmatprep.subr.bf16.mxu0 %v3923
    %5639 = vmatpush1.bf16.msra.mxu0 %v3922
    %5640 = vmatprep.subr.bf16.mxu0 %v3921
    %5641 = vmatpush1.bf16.msra.mxu0 %v3920
    %5642 = vmatprep.subr.bf16.mxu0 %v3919
    %5643 = vmatpush1.bf16.msra.mxu0 %v3918
    %5644 = vmatprep.subr.bf16.mxu0 %v3949
    %5645 = vmatpush2.bf16.msra.mxu0 %v3948
    %5646 = vmatprep.subr.bf16.mxu0 %v3947
    %5647 = vmatpush2.bf16.msra.mxu0 %v3946
    %5648 = vmatprep.subr.bf16.mxu0 %v3945
    %5649 = vmatpush2.bf16.msra.mxu0 %v3944
    %5650 = vmatprep.subr.bf16.mxu0 %v3943
    %5651 = vmatpush2.bf16.msra.mxu0 %v3942
    %5652 = vmatprep.subr.bf16.mxu0 %v3941
    %5653 = vmatpush2.bf16.msra.mxu0 %v3940
    %5654 = vmatprep.subr.bf16.mxu0 %v3939
    %5655 = vmatpush2.bf16.msra.mxu0 %v3938
    %5656 = vmatprep.subr.bf16.mxu0 %v3937
    %5657 = vmatpush2.bf16.msra.mxu0 %v3936
    %5658 = vmatprep.subr.bf16.mxu0 %v3935
    %5659 = vmatpush2.bf16.msra.mxu0 %v3934
    %5660 = vmatprep.mubr.bf16.mxu0 %v1119
    %5661 = vmatmul.mubr.bf16.gmra.mxu0 %v1118
    %v5662 = vpop.f32.mrf.mxu0
    %v5663 = vadd.f32 %v5620, %v5662
    %v5664 = vpop.f32.mrf.mxu0
    %v5665 = vadd.f32 %v5622, %v5664
    %v5666 = vpop.f32.mrf.mxu0
    %v5667 = vadd.f32 %v5624, %v5666
    %v5668 = vpop.f32.mrf.mxu0
    %v5669 = vadd.f32 %v5626, %v5668
    %5670 = vdwg.mxu0
    %5671 = vmatprep.subr.bf16.mxu0 %v3965
    %5672 = vmatpush1.bf16.msra.mxu0 %v3964
    %5673 = vmatprep.subr.bf16.mxu0 %v3963
    %5674 = vmatpush1.bf16.msra.mxu0 %v3962
    %5675 = vmatprep.subr.bf16.mxu0 %v3961
    %5676 = vmatpush1.bf16.msra.mxu0 %v3960
    %5677 = vmatprep.subr.bf16.mxu0 %v3959
    %5678 = vmatpush1.bf16.msra.mxu0 %v3958
    %5679 = vmatprep.subr.bf16.mxu0 %v3957
    %5680 = vmatpush1.bf16.msra.mxu0 %v3956
    %5681 = vmatprep.subr.bf16.mxu0 %v3955
    %5682 = vmatpush1.bf16.msra.mxu0 %v3954
    %5683 = vmatprep.subr.bf16.mxu0 %v3953
    %5684 = vmatpush1.bf16.msra.mxu0 %v3952
    %5685 = vmatprep.subr.bf16.mxu0 %v3951
    %5686 = vmatpush1.bf16.msra.mxu0 %v3950
    %5687 = vmatprep.subr.bf16.mxu0 %v3981
    %5688 = vmatpush2.bf16.msra.mxu0 %v3980
    %5689 = vmatprep.subr.bf16.mxu0 %v3979
    %5690 = vmatpush2.bf16.msra.mxu0 %v3978
    %5691 = vmatprep.subr.bf16.mxu0 %v3977
    %5692 = vmatpush2.bf16.msra.mxu0 %v3976
    %5693 = vmatprep.subr.bf16.mxu0 %v3975
    %5694 = vmatpush2.bf16.msra.mxu0 %v3974
    %5695 = vmatprep.subr.bf16.mxu0 %v3973
    %5696 = vmatpush2.bf16.msra.mxu0 %v3972
    %5697 = vmatprep.subr.bf16.mxu0 %v3971
    %5698 = vmatpush2.bf16.msra.mxu0 %v3970
    %5699 = vmatprep.subr.bf16.mxu0 %v3969
    %5700 = vmatpush2.bf16.msra.mxu0 %v3968
    %5701 = vmatprep.subr.bf16.mxu0 %v3967
    %5702 = vmatpush2.bf16.msra.mxu0 %v3966
    %5703 = vmatprep.mubr.bf16.mxu0 %v1121
    %5704 = vmatmul.mubr.bf16.gmra.mxu0 %v1120
    %v5705 = vpop.f32.mrf.mxu0
    %v5706 = vadd.f32 %v5663, %v5705
    %v5707 = vpop.f32.mrf.mxu0
    %v5708 = vadd.f32 %v5665, %v5707
    %v5709 = vpop.f32.mrf.mxu0
    %v5710 = vadd.f32 %v5667, %v5709
    %v5711 = vpop.f32.mrf.mxu0
    %v5712 = vadd.f32 %v5669, %v5711
    %5713 = vdwg.mxu0
    %5714 = vmatprep.subr.bf16.mxu0 %v3997
    %5715 = vmatpush1.bf16.msra.mxu0 %v3996
    %5716 = vmatprep.subr.bf16.mxu0 %v3995
    %5717 = vmatpush1.bf16.msra.mxu0 %v3994
    %5718 = vmatprep.subr.bf16.mxu0 %v3993
    %5719 = vmatpush1.bf16.msra.mxu0 %v3992
    %5720 = vmatprep.subr.bf16.mxu0 %v3991
    %5721 = vmatpush1.bf16.msra.mxu0 %v3990
    %5722 = vmatprep.subr.bf16.mxu0 %v3989
    %5723 = vmatpush1.bf16.msra.mxu0 %v3988
    %5724 = vmatprep.subr.bf16.mxu0 %v3987
    %5725 = vmatpush1.bf16.msra.mxu0 %v3986
    %5726 = vmatprep.subr.bf16.mxu0 %v3985
    %5727 = vmatpush1.bf16.msra.mxu0 %v3984
    %5728 = vmatprep.subr.bf16.mxu0 %v3983
    %5729 = vmatpush1.bf16.msra.mxu0 %v3982
    %5730 = vmatprep.subr.bf16.mxu0 %v4013
    %5731 = vmatpush2.bf16.msra.mxu0 %v4012
    %5732 = vmatprep.subr.bf16.mxu0 %v4011
    %5733 = vmatpush2.bf16.msra.mxu0 %v4010
    %5734 = vmatprep.subr.bf16.mxu0 %v4009
    %5735 = vmatpush2.bf16.msra.mxu0 %v4008
    %5736 = vmatprep.subr.bf16.mxu0 %v4007
    %5737 = vmatpush2.bf16.msra.mxu0 %v4006
    %5738 = vmatprep.subr.bf16.mxu0 %v4005
    %5739 = vmatpush2.bf16.msra.mxu0 %v4004
    %5740 = vmatprep.subr.bf16.mxu0 %v4003
    %5741 = vmatpush2.bf16.msra.mxu0 %v4002
    %5742 = vmatprep.subr.bf16.mxu0 %v4001
    %5743 = vmatpush2.bf16.msra.mxu0 %v4000
    %5744 = vmatprep.subr.bf16.mxu0 %v3999
    %5745 = vmatpush2.bf16.msra.mxu0 %v3998
    %5746 = vmatprep.mubr.bf16.mxu0 %v1123
    %5747 = vmatmul.mubr.bf16.gmra.mxu0 %v1122
    %v5748 = vpop.f32.mrf.mxu0
    %v5749 = vadd.f32 %v5706, %v5748
    %v5750 = vpop.f32.mrf.mxu0
    %v5751 = vadd.f32 %v5708, %v5750
    %v5752 = vpop.f32.mrf.mxu0
    %v5753 = vadd.f32 %v5710, %v5752
    %v5754 = vpop.f32.mrf.mxu0
    %v5755 = vadd.f32 %v5712, %v5754
    %5756 = vdwg.mxu0
    %5757 = vmatprep.subr.bf16.mxu0 %v4029
    %5758 = vmatpush1.bf16.msra.mxu0 %v4028
    %5759 = vmatprep.subr.bf16.mxu0 %v4027
    %5760 = vmatpush1.bf16.msra.mxu0 %v4026
    %5761 = vmatprep.subr.bf16.mxu0 %v4025
    %5762 = vmatpush1.bf16.msra.mxu0 %v4024
    %5763 = vmatprep.subr.bf16.mxu0 %v4023
    %5764 = vmatpush1.bf16.msra.mxu0 %v4022
    %5765 = vmatprep.subr.bf16.mxu0 %v4021
    %5766 = vmatpush1.bf16.msra.mxu0 %v4020
    %5767 = vmatprep.subr.bf16.mxu0 %v4019
    %5768 = vmatpush1.bf16.msra.mxu0 %v4018
    %5769 = vmatprep.subr.bf16.mxu0 %v4017
    %5770 = vmatpush1.bf16.msra.mxu0 %v4016
    %5771 = vmatprep.subr.bf16.mxu0 %v4015
    %5772 = vmatpush1.bf16.msra.mxu0 %v4014
    %5773 = vmatprep.subr.bf16.mxu0 %v4045
    %5774 = vmatpush2.bf16.msra.mxu0 %v4044
    %5775 = vmatprep.subr.bf16.mxu0 %v4043
    %5776 = vmatpush2.bf16.msra.mxu0 %v4042
    %5777 = vmatprep.subr.bf16.mxu0 %v4041
    %5778 = vmatpush2.bf16.msra.mxu0 %v4040
    %5779 = vmatprep.subr.bf16.mxu0 %v4039
    %5780 = vmatpush2.bf16.msra.mxu0 %v4038
    %5781 = vmatprep.subr.bf16.mxu0 %v4037
    %5782 = vmatpush2.bf16.msra.mxu0 %v4036
    %5783 = vmatprep.subr.bf16.mxu0 %v4035
    %5784 = vmatpush2.bf16.msra.mxu0 %v4034
    %5785 = vmatprep.subr.bf16.mxu0 %v4033
    %5786 = vmatpush2.bf16.msra.mxu0 %v4032
    %5787 = vmatprep.subr.bf16.mxu0 %v4031
    %5788 = vmatpush2.bf16.msra.mxu0 %v4030
    %5789 = vmatprep.mubr.bf16.mxu0 %v1125
    %5790 = vmatmul.mubr.bf16.gmra.mxu0 %v1124
    %v5791 = vpop.f32.mrf.mxu0
    %v5792 = vadd.f32 %v5749, %v5791
    %v5793 = vpop.f32.mrf.mxu0
    %v5794 = vadd.f32 %v5751, %v5793
    %v5795 = vpop.f32.mrf.mxu0
    %v5796 = vadd.f32 %v5753, %v5795
    %v5797 = vpop.f32.mrf.mxu0
    %v5798 = vadd.f32 %v5755, %v5797
    %5799 = vdwg.mxu0
    %5800 = vmatprep.subr.bf16.mxu0 %v4061
    %5801 = vmatpush1.bf16.msra.mxu0 %v4060
    %5802 = vmatprep.subr.bf16.mxu0 %v4059
    %5803 = vmatpush1.bf16.msra.mxu0 %v4058
    %5804 = vmatprep.subr.bf16.mxu0 %v4057
    %5805 = vmatpush1.bf16.msra.mxu0 %v4056
    %5806 = vmatprep.subr.bf16.mxu0 %v4055
    %5807 = vmatpush1.bf16.msra.mxu0 %v4054
    %5808 = vmatprep.subr.bf16.mxu0 %v4053
    %5809 = vmatpush1.bf16.msra.mxu0 %v4052
    %5810 = vmatprep.subr.bf16.mxu0 %v4051
    %5811 = vmatpush1.bf16.msra.mxu0 %v4050
    %5812 = vmatprep.subr.bf16.mxu0 %v4049
    %5813 = vmatpush1.bf16.msra.mxu0 %v4048
    %5814 = vmatprep.subr.bf16.mxu0 %v4047
    %5815 = vmatpush1.bf16.msra.mxu0 %v4046
    %5816 = vmatprep.subr.bf16.mxu0 %v4077
    %5817 = vmatpush2.bf16.msra.mxu0 %v4076
    %5818 = vmatprep.subr.bf16.mxu0 %v4075
    %5819 = vmatpush2.bf16.msra.mxu0 %v4074
    %5820 = vmatprep.subr.bf16.mxu0 %v4073
    %5821 = vmatpush2.bf16.msra.mxu0 %v4072
    %5822 = vmatprep.subr.bf16.mxu0 %v4071
    %5823 = vmatpush2.bf16.msra.mxu0 %v4070
    %5824 = vmatprep.subr.bf16.mxu0 %v4069
    %5825 = vmatpush2.bf16.msra.mxu0 %v4068
    %5826 = vmatprep.subr.bf16.mxu0 %v4067
    %5827 = vmatpush2.bf16.msra.mxu0 %v4066
    %5828 = vmatprep.subr.bf16.mxu0 %v4065
    %5829 = vmatpush2.bf16.msra.mxu0 %v4064
    %5830 = vmatprep.subr.bf16.mxu0 %v4063
    %5831 = vmatpush2.bf16.msra.mxu0 %v4062
    %5832 = vmatprep.mubr.bf16.mxu0 %v1127
    %5833 = vmatmul.mubr.bf16.gmra.mxu0 %v1126
    %v5834 = vpop.f32.mrf.mxu0
    %v5835 = vadd.f32 %v5792, %v5834
    %v5836 = vpop.f32.mrf.mxu0
    %v5837 = vadd.f32 %v5794, %v5836
    %v5838 = vpop.f32.mrf.mxu0
    %v5839 = vadd.f32 %v5796, %v5838
    %v5840 = vpop.f32.mrf.mxu0
    %v5841 = vadd.f32 %v5798, %v5840
    %5842 = vdwg.mxu0
    %5843 = vmatprep.subr.bf16.mxu0 %v4093
    %5844 = vmatpush1.bf16.msra.mxu0 %v4092
    %5845 = vmatprep.subr.bf16.mxu0 %v4091
    %5846 = vmatpush1.bf16.msra.mxu0 %v4090
    %5847 = vmatprep.subr.bf16.mxu0 %v4089
    %5848 = vmatpush1.bf16.msra.mxu0 %v4088
    %5849 = vmatprep.subr.bf16.mxu0 %v4087
    %5850 = vmatpush1.bf16.msra.mxu0 %v4086
    %5851 = vmatprep.subr.bf16.mxu0 %v4085
    %5852 = vmatpush1.bf16.msra.mxu0 %v4084
    %5853 = vmatprep.subr.bf16.mxu0 %v4083
    %5854 = vmatpush1.bf16.msra.mxu0 %v4082
    %5855 = vmatprep.subr.bf16.mxu0 %v4081
    %5856 = vmatpush1.bf16.msra.mxu0 %v4080
    %5857 = vmatprep.subr.bf16.mxu0 %v4079
    %5858 = vmatpush1.bf16.msra.mxu0 %v4078
    %5859 = vmatprep.subr.bf16.mxu0 %v4109
    %5860 = vmatpush2.bf16.msra.mxu0 %v4108
    %5861 = vmatprep.subr.bf16.mxu0 %v4107
    %5862 = vmatpush2.bf16.msra.mxu0 %v4106
    %5863 = vmatprep.subr.bf16.mxu0 %v4105
    %5864 = vmatpush2.bf16.msra.mxu0 %v4104
    %5865 = vmatprep.subr.bf16.mxu0 %v4103
    %5866 = vmatpush2.bf16.msra.mxu0 %v4102
    %5867 = vmatprep.subr.bf16.mxu0 %v4101
    %5868 = vmatpush2.bf16.msra.mxu0 %v4100
    %5869 = vmatprep.subr.bf16.mxu0 %v4099
    %5870 = vmatpush2.bf16.msra.mxu0 %v4098
    %5871 = vmatprep.subr.bf16.mxu0 %v4097
    %5872 = vmatpush2.bf16.msra.mxu0 %v4096
    %5873 = vmatprep.subr.bf16.mxu0 %v4095
    %5874 = vmatpush2.bf16.msra.mxu0 %v4094
    %5875 = vmatprep.mubr.bf16.mxu0 %v1129
    %5876 = vmatmul.mubr.bf16.gmra.mxu0 %v1128
    %v5877 = vpop.f32.mrf.mxu0
    %v5878 = vadd.f32 %v5835, %v5877
    %v5879 = vpop.f32.mrf.mxu0
    %v5880 = vadd.f32 %v5837, %v5879
    %v5881 = vpop.f32.mrf.mxu0
    %v5882 = vadd.f32 %v5839, %v5881
    %v5883 = vpop.f32.mrf.mxu0
    %v5884 = vadd.f32 %v5841, %v5883
    %5885 = vdwg.mxu0
    %5886 = vmatprep.subr.bf16.mxu0 %v4125
    %5887 = vmatpush1.bf16.msra.mxu0 %v4124
    %5888 = vmatprep.subr.bf16.mxu0 %v4123
    %5889 = vmatpush1.bf16.msra.mxu0 %v4122
    %5890 = vmatprep.subr.bf16.mxu0 %v4121
    %5891 = vmatpush1.bf16.msra.mxu0 %v4120
    %5892 = vmatprep.subr.bf16.mxu0 %v4119
    %5893 = vmatpush1.bf16.msra.mxu0 %v4118
    %5894 = vmatprep.subr.bf16.mxu0 %v4117
    %5895 = vmatpush1.bf16.msra.mxu0 %v4116
    %5896 = vmatprep.subr.bf16.mxu0 %v4115
    %5897 = vmatpush1.bf16.msra.mxu0 %v4114
    %5898 = vmatprep.subr.bf16.mxu0 %v4113
    %5899 = vmatpush1.bf16.msra.mxu0 %v4112
    %5900 = vmatprep.subr.bf16.mxu0 %v4111
    %5901 = vmatpush1.bf16.msra.mxu0 %v4110
    %5902 = vmatprep.subr.bf16.mxu0 %v4141
    %5903 = vmatpush2.bf16.msra.mxu0 %v4140
    %5904 = vmatprep.subr.bf16.mxu0 %v4139
    %5905 = vmatpush2.bf16.msra.mxu0 %v4138
    %5906 = vmatprep.subr.bf16.mxu0 %v4137
    %5907 = vmatpush2.bf16.msra.mxu0 %v4136
    %5908 = vmatprep.subr.bf16.mxu0 %v4135
    %5909 = vmatpush2.bf16.msra.mxu0 %v4134
    %5910 = vmatprep.subr.bf16.mxu0 %v4133
    %5911 = vmatpush2.bf16.msra.mxu0 %v4132
    %5912 = vmatprep.subr.bf16.mxu0 %v4131
    %5913 = vmatpush2.bf16.msra.mxu0 %v4130
    %5914 = vmatprep.subr.bf16.mxu0 %v4129
    %5915 = vmatpush2.bf16.msra.mxu0 %v4128
    %5916 = vmatprep.subr.bf16.mxu0 %v4127
    %5917 = vmatpush2.bf16.msra.mxu0 %v4126
    %5918 = vmatprep.mubr.bf16.mxu0 %v1131
    %5919 = vmatmul.mubr.bf16.gmra.mxu0 %v1130
    %v5920 = vpop.f32.mrf.mxu0
    %v5921 = vadd.f32 %v5878, %v5920
    %v5922 = vpop.f32.mrf.mxu0
    %v5923 = vadd.f32 %v5880, %v5922
    %v5924 = vpop.f32.mrf.mxu0
    %v5925 = vadd.f32 %v5882, %v5924
    %v5926 = vpop.f32.mrf.mxu0
    %v5927 = vadd.f32 %v5884, %v5926
    %5928 = vdwg.mxu0
    %5929 = vmatprep.subr.bf16.mxu0 %v4157
    %5930 = vmatpush1.bf16.msra.mxu0 %v4156
    %5931 = vmatprep.subr.bf16.mxu0 %v4155
    %5932 = vmatpush1.bf16.msra.mxu0 %v4154
    %5933 = vmatprep.subr.bf16.mxu0 %v4153
    %5934 = vmatpush1.bf16.msra.mxu0 %v4152
    %5935 = vmatprep.subr.bf16.mxu0 %v4151
    %5936 = vmatpush1.bf16.msra.mxu0 %v4150
    %5937 = vmatprep.subr.bf16.mxu0 %v4149
    %5938 = vmatpush1.bf16.msra.mxu0 %v4148
    %5939 = vmatprep.subr.bf16.mxu0 %v4147
    %5940 = vmatpush1.bf16.msra.mxu0 %v4146
    %5941 = vmatprep.subr.bf16.mxu0 %v4145
    %5942 = vmatpush1.bf16.msra.mxu0 %v4144
    %5943 = vmatprep.subr.bf16.mxu0 %v4143
    %5944 = vmatpush1.bf16.msra.mxu0 %v4142
    %5945 = vmatprep.subr.bf16.mxu0 %v4173
    %5946 = vmatpush2.bf16.msra.mxu0 %v4172
    %5947 = vmatprep.subr.bf16.mxu0 %v4171
    %5948 = vmatpush2.bf16.msra.mxu0 %v4170
    %5949 = vmatprep.subr.bf16.mxu0 %v4169
    %5950 = vmatpush2.bf16.msra.mxu0 %v4168
    %5951 = vmatprep.subr.bf16.mxu0 %v4167
    %5952 = vmatpush2.bf16.msra.mxu0 %v4166
    %5953 = vmatprep.subr.bf16.mxu0 %v4165
    %5954 = vmatpush2.bf16.msra.mxu0 %v4164
    %5955 = vmatprep.subr.bf16.mxu0 %v4163
    %5956 = vmatpush2.bf16.msra.mxu0 %v4162
    %5957 = vmatprep.subr.bf16.mxu0 %v4161
    %5958 = vmatpush2.bf16.msra.mxu0 %v4160
    %5959 = vmatprep.subr.bf16.mxu0 %v4159
    %5960 = vmatpush2.bf16.msra.mxu0 %v4158
    %5961 = vmatprep.mubr.bf16.mxu0 %v1133
    %5962 = vmatmul.mubr.bf16.gmra.mxu0 %v1132
    %v5963 = vpop.f32.mrf.mxu0
    %v5964 = vadd.f32 %v5921, %v5963
    %v5965 = vpop.f32.mrf.mxu0
    %v5966 = vadd.f32 %v5923, %v5965
    %v5967 = vpop.f32.mrf.mxu0
    %v5968 = vadd.f32 %v5925, %v5967
    %v5969 = vpop.f32.mrf.mxu0
    %v5970 = vadd.f32 %v5927, %v5969
    %5971 = vdwg.mxu0
    %5972 = vmatprep.subr.bf16.mxu0 %v4189
    %5973 = vmatpush1.bf16.msra.mxu0 %v4188
    %5974 = vmatprep.subr.bf16.mxu0 %v4187
    %5975 = vmatpush1.bf16.msra.mxu0 %v4186
    %5976 = vmatprep.subr.bf16.mxu0 %v4185
    %5977 = vmatpush1.bf16.msra.mxu0 %v4184
    %5978 = vmatprep.subr.bf16.mxu0 %v4183
    %5979 = vmatpush1.bf16.msra.mxu0 %v4182
    %5980 = vmatprep.subr.bf16.mxu0 %v4181
    %5981 = vmatpush1.bf16.msra.mxu0 %v4180
    %5982 = vmatprep.subr.bf16.mxu0 %v4179
    %5983 = vmatpush1.bf16.msra.mxu0 %v4178
    %5984 = vmatprep.subr.bf16.mxu0 %v4177
    %5985 = vmatpush1.bf16.msra.mxu0 %v4176
    %5986 = vmatprep.subr.bf16.mxu0 %v4175
    %5987 = vmatpush1.bf16.msra.mxu0 %v4174
    %5988 = vmatprep.subr.bf16.mxu0 %v4205
    %5989 = vmatpush2.bf16.msra.mxu0 %v4204
    %5990 = vmatprep.subr.bf16.mxu0 %v4203
    %5991 = vmatpush2.bf16.msra.mxu0 %v4202
    %5992 = vmatprep.subr.bf16.mxu0 %v4201
    %5993 = vmatpush2.bf16.msra.mxu0 %v4200
    %5994 = vmatprep.subr.bf16.mxu0 %v4199
    %5995 = vmatpush2.bf16.msra.mxu0 %v4198
    %5996 = vmatprep.subr.bf16.mxu0 %v4197
    %5997 = vmatpush2.bf16.msra.mxu0 %v4196
    %5998 = vmatprep.subr.bf16.mxu0 %v4195
    %5999 = vmatpush2.bf16.msra.mxu0 %v4194
    %6000 = vmatprep.subr.bf16.mxu0 %v4193
    %6001 = vmatpush2.bf16.msra.mxu0 %v4192
    %6002 = vmatprep.subr.bf16.mxu0 %v4191
    %6003 = vmatpush2.bf16.msra.mxu0 %v4190
    %6004 = vmatprep.mubr.bf16.mxu0 %v1135
    %6005 = vmatmul.mubr.bf16.gmra.mxu0 %v1134
    %v6006 = vpop.f32.mrf.mxu0
    %v6007 = vadd.f32 %v5964, %v6006
    %v6008 = vpop.f32.mrf.mxu0
    %v6009 = vadd.f32 %v5966, %v6008
    %v6010 = vpop.f32.mrf.mxu0
    %v6011 = vadd.f32 %v5968, %v6010
    %v6012 = vpop.f32.mrf.mxu0
    %v6013 = vadd.f32 %v5970, %v6012
    %6014 = vdwg.mxu0
    %6015 = vmatprep.subr.bf16.mxu0 %v4221
    %6016 = vmatpush1.bf16.msra.mxu0 %v4220
    %6017 = vmatprep.subr.bf16.mxu0 %v4219
    %6018 = vmatpush1.bf16.msra.mxu0 %v4218
    %6019 = vmatprep.subr.bf16.mxu0 %v4217
    %6020 = vmatpush1.bf16.msra.mxu0 %v4216
    %6021 = vmatprep.subr.bf16.mxu0 %v4215
    %6022 = vmatpush1.bf16.msra.mxu0 %v4214
    %6023 = vmatprep.subr.bf16.mxu0 %v4213
    %6024 = vmatpush1.bf16.msra.mxu0 %v4212
    %6025 = vmatprep.subr.bf16.mxu0 %v4211
    %6026 = vmatpush1.bf16.msra.mxu0 %v4210
    %6027 = vmatprep.subr.bf16.mxu0 %v4209
    %6028 = vmatpush1.bf16.msra.mxu0 %v4208
    %6029 = vmatprep.subr.bf16.mxu0 %v4207
    %6030 = vmatpush1.bf16.msra.mxu0 %v4206
    %6031 = vmatprep.subr.bf16.mxu0 %v4237
    %6032 = vmatpush2.bf16.msra.mxu0 %v4236
    %6033 = vmatprep.subr.bf16.mxu0 %v4235
    %6034 = vmatpush2.bf16.msra.mxu0 %v4234
    %6035 = vmatprep.subr.bf16.mxu0 %v4233
    %6036 = vmatpush2.bf16.msra.mxu0 %v4232
    %6037 = vmatprep.subr.bf16.mxu0 %v4231
    %6038 = vmatpush2.bf16.msra.mxu0 %v4230
    %6039 = vmatprep.subr.bf16.mxu0 %v4229
    %6040 = vmatpush2.bf16.msra.mxu0 %v4228
    %6041 = vmatprep.subr.bf16.mxu0 %v4227
    %6042 = vmatpush2.bf16.msra.mxu0 %v4226
    %6043 = vmatprep.subr.bf16.mxu0 %v4225
    %6044 = vmatpush2.bf16.msra.mxu0 %v4224
    %6045 = vmatprep.subr.bf16.mxu0 %v4223
    %6046 = vmatpush2.bf16.msra.mxu0 %v4222
    %6047 = vmatprep.mubr.bf16.mxu0 %v1137
    %6048 = vmatmul.mubr.bf16.gmra.mxu0 %v1136
    %v6049 = vpop.f32.mrf.mxu0
    %v6050 = vadd.f32 %v6007, %v6049
    %v6051 = vpop.f32.mrf.mxu0
    %v6052 = vadd.f32 %v6009, %v6051
    %v6053 = vpop.f32.mrf.mxu0
    %v6054 = vadd.f32 %v6011, %v6053
    %v6055 = vpop.f32.mrf.mxu0
    %v6056 = vadd.f32 %v6013, %v6055
    %6057 = vdwg.mxu0
    %6058 = vmatprep.subr.bf16.mxu0 %v4253
    %6059 = vmatpush1.bf16.msra.mxu0 %v4252
    %6060 = vmatprep.subr.bf16.mxu0 %v4251
    %6061 = vmatpush1.bf16.msra.mxu0 %v4250
    %6062 = vmatprep.subr.bf16.mxu0 %v4249
    %6063 = vmatpush1.bf16.msra.mxu0 %v4248
    %6064 = vmatprep.subr.bf16.mxu0 %v4247
    %6065 = vmatpush1.bf16.msra.mxu0 %v4246
    %6066 = vmatprep.subr.bf16.mxu0 %v4245
    %6067 = vmatpush1.bf16.msra.mxu0 %v4244
    %6068 = vmatprep.subr.bf16.mxu0 %v4243
    %6069 = vmatpush1.bf16.msra.mxu0 %v4242
    %6070 = vmatprep.subr.bf16.mxu0 %v4241
    %6071 = vmatpush1.bf16.msra.mxu0 %v4240
    %6072 = vmatprep.subr.bf16.mxu0 %v4239
    %6073 = vmatpush1.bf16.msra.mxu0 %v4238
    %6074 = vmatprep.subr.bf16.mxu0 %v4269
    %6075 = vmatpush2.bf16.msra.mxu0 %v4268
    %6076 = vmatprep.subr.bf16.mxu0 %v4267
    %6077 = vmatpush2.bf16.msra.mxu0 %v4266
    %6078 = vmatprep.subr.bf16.mxu0 %v4265
    %6079 = vmatpush2.bf16.msra.mxu0 %v4264
    %6080 = vmatprep.subr.bf16.mxu0 %v4263
    %6081 = vmatpush2.bf16.msra.mxu0 %v4262
    %6082 = vmatprep.subr.bf16.mxu0 %v4261
    %6083 = vmatpush2.bf16.msra.mxu0 %v4260
    %6084 = vmatprep.subr.bf16.mxu0 %v4259
    %6085 = vmatpush2.bf16.msra.mxu0 %v4258
    %6086 = vmatprep.subr.bf16.mxu0 %v4257
    %6087 = vmatpush2.bf16.msra.mxu0 %v4256
    %6088 = vmatprep.subr.bf16.mxu0 %v4255
    %6089 = vmatpush2.bf16.msra.mxu0 %v4254
    %6090 = vmatprep.mubr.bf16.mxu0 %v1139
    %6091 = vmatmul.mubr.bf16.gmra.mxu0 %v1138
    %v6092 = vpop.f32.mrf.mxu0
    %v6093 = vadd.f32 %v6050, %v6092
    %v6094 = vpop.f32.mrf.mxu0
    %v6095 = vadd.f32 %v6052, %v6094
    %v6096 = vpop.f32.mrf.mxu0
    %v6097 = vadd.f32 %v6054, %v6096
    %v6098 = vpop.f32.mrf.mxu0
    %v6099 = vadd.f32 %v6056, %v6098
    %6100 = vdwg.mxu0
    %6101 = vmatprep.subr.bf16.mxu0 %v4285
    %6102 = vmatpush1.bf16.msra.mxu0 %v4284
    %6103 = vmatprep.subr.bf16.mxu0 %v4283
    %6104 = vmatpush1.bf16.msra.mxu0 %v4282
    %6105 = vmatprep.subr.bf16.mxu0 %v4281
    %6106 = vmatpush1.bf16.msra.mxu0 %v4280
    %6107 = vmatprep.subr.bf16.mxu0 %v4279
    %6108 = vmatpush1.bf16.msra.mxu0 %v4278
    %6109 = vmatprep.subr.bf16.mxu0 %v4277
    %6110 = vmatpush1.bf16.msra.mxu0 %v4276
    %6111 = vmatprep.subr.bf16.mxu0 %v4275
    %6112 = vmatpush1.bf16.msra.mxu0 %v4274
    %6113 = vmatprep.subr.bf16.mxu0 %v4273
    %6114 = vmatpush1.bf16.msra.mxu0 %v4272
    %6115 = vmatprep.subr.bf16.mxu0 %v4271
    %6116 = vmatpush1.bf16.msra.mxu0 %v4270
    %6117 = vmatprep.subr.bf16.mxu0 %v4301
    %6118 = vmatpush2.bf16.msra.mxu0 %v4300
    %6119 = vmatprep.subr.bf16.mxu0 %v4299
    %6120 = vmatpush2.bf16.msra.mxu0 %v4298
    %6121 = vmatprep.subr.bf16.mxu0 %v4297
    %6122 = vmatpush2.bf16.msra.mxu0 %v4296
    %6123 = vmatprep.subr.bf16.mxu0 %v4295
    %6124 = vmatpush2.bf16.msra.mxu0 %v4294
    %6125 = vmatprep.subr.bf16.mxu0 %v4293
    %6126 = vmatpush2.bf16.msra.mxu0 %v4292
    %6127 = vmatprep.subr.bf16.mxu0 %v4291
    %6128 = vmatpush2.bf16.msra.mxu0 %v4290
    %6129 = vmatprep.subr.bf16.mxu0 %v4289
    %6130 = vmatpush2.bf16.msra.mxu0 %v4288
    %6131 = vmatprep.subr.bf16.mxu0 %v4287
    %6132 = vmatpush2.bf16.msra.mxu0 %v4286
    %6133 = vmatprep.mubr.bf16.mxu0 %v1141
    %6134 = vmatmul.mubr.bf16.gmra.mxu0 %v1140
    %v6135 = vpop.f32.mrf.mxu0
    %v6136 = vadd.f32 %v6093, %v6135
    %v6137 = vpop.f32.mrf.mxu0
    %v6138 = vadd.f32 %v6095, %v6137
    %v6139 = vpop.f32.mrf.mxu0
    %v6140 = vadd.f32 %v6097, %v6139
    %v6141 = vpop.f32.mrf.mxu0
    %v6142 = vadd.f32 %v6099, %v6141
    %6143 = vdwg.mxu0
    %6144 = vmatprep.subr.bf16.mxu0 %v4317
    %6145 = vmatpush1.bf16.msra.mxu0 %v4316
    %6146 = vmatprep.subr.bf16.mxu0 %v4315
    %6147 = vmatpush1.bf16.msra.mxu0 %v4314
    %6148 = vmatprep.subr.bf16.mxu0 %v4313
    %6149 = vmatpush1.bf16.msra.mxu0 %v4312
    %6150 = vmatprep.subr.bf16.mxu0 %v4311
    %6151 = vmatpush1.bf16.msra.mxu0 %v4310
    %6152 = vmatprep.subr.bf16.mxu0 %v4309
    %6153 = vmatpush1.bf16.msra.mxu0 %v4308
    %6154 = vmatprep.subr.bf16.mxu0 %v4307
    %6155 = vmatpush1.bf16.msra.mxu0 %v4306
    %6156 = vmatprep.subr.bf16.mxu0 %v4305
    %6157 = vmatpush1.bf16.msra.mxu0 %v4304
    %6158 = vmatprep.subr.bf16.mxu0 %v4303
    %6159 = vmatpush1.bf16.msra.mxu0 %v4302
    %6160 = vmatprep.subr.bf16.mxu0 %v4333
    %6161 = vmatpush2.bf16.msra.mxu0 %v4332
    %6162 = vmatprep.subr.bf16.mxu0 %v4331
    %6163 = vmatpush2.bf16.msra.mxu0 %v4330
    %6164 = vmatprep.subr.bf16.mxu0 %v4329
    %6165 = vmatpush2.bf16.msra.mxu0 %v4328
    %6166 = vmatprep.subr.bf16.mxu0 %v4327
    %6167 = vmatpush2.bf16.msra.mxu0 %v4326
    %6168 = vmatprep.subr.bf16.mxu0 %v4325
    %6169 = vmatpush2.bf16.msra.mxu0 %v4324
    %6170 = vmatprep.subr.bf16.mxu0 %v4323
    %6171 = vmatpush2.bf16.msra.mxu0 %v4322
    %6172 = vmatprep.subr.bf16.mxu0 %v4321
    %6173 = vmatpush2.bf16.msra.mxu0 %v4320
    %6174 = vmatprep.subr.bf16.mxu0 %v4319
    %6175 = vmatpush2.bf16.msra.mxu0 %v4318
    %6176 = vmatprep.mubr.bf16.mxu0 %v1143
    %6177 = vmatmul.mubr.bf16.gmra.mxu0 %v1142
    %v6178 = vpop.f32.mrf.mxu0
    %v6179 = vadd.f32 %v6136, %v6178
    %v6180 = vpop.f32.mrf.mxu0
    %v6181 = vadd.f32 %v6138, %v6180
    %v6182 = vpop.f32.mrf.mxu0
    %v6183 = vadd.f32 %v6140, %v6182
    %v6184 = vpop.f32.mrf.mxu0
    %v6185 = vadd.f32 %v6142, %v6184
    %6186 = vdwg.mxu0
    %6187 = vmatprep.subr.bf16.mxu0 %v4349
    %6188 = vmatpush1.bf16.msra.mxu0 %v4348
    %6189 = vmatprep.subr.bf16.mxu0 %v4347
    %6190 = vmatpush1.bf16.msra.mxu0 %v4346
    %6191 = vmatprep.subr.bf16.mxu0 %v4345
    %6192 = vmatpush1.bf16.msra.mxu0 %v4344
    %6193 = vmatprep.subr.bf16.mxu0 %v4343
    %6194 = vmatpush1.bf16.msra.mxu0 %v4342
    %6195 = vmatprep.subr.bf16.mxu0 %v4341
    %6196 = vmatpush1.bf16.msra.mxu0 %v4340
    %6197 = vmatprep.subr.bf16.mxu0 %v4339
    %6198 = vmatpush1.bf16.msra.mxu0 %v4338
    %6199 = vmatprep.subr.bf16.mxu0 %v4337
    %6200 = vmatpush1.bf16.msra.mxu0 %v4336
    %6201 = vmatprep.subr.bf16.mxu0 %v4335
    %6202 = vmatpush1.bf16.msra.mxu0 %v4334
    %6203 = vmatprep.subr.bf16.mxu0 %v4365
    %6204 = vmatpush2.bf16.msra.mxu0 %v4364
    %6205 = vmatprep.subr.bf16.mxu0 %v4363
    %6206 = vmatpush2.bf16.msra.mxu0 %v4362
    %6207 = vmatprep.subr.bf16.mxu0 %v4361
    %6208 = vmatpush2.bf16.msra.mxu0 %v4360
    %6209 = vmatprep.subr.bf16.mxu0 %v4359
    %6210 = vmatpush2.bf16.msra.mxu0 %v4358
    %6211 = vmatprep.subr.bf16.mxu0 %v4357
    %6212 = vmatpush2.bf16.msra.mxu0 %v4356
    %6213 = vmatprep.subr.bf16.mxu0 %v4355
    %6214 = vmatpush2.bf16.msra.mxu0 %v4354
    %6215 = vmatprep.subr.bf16.mxu0 %v4353
    %6216 = vmatpush2.bf16.msra.mxu0 %v4352
    %6217 = vmatprep.subr.bf16.mxu0 %v4351
    %6218 = vmatpush2.bf16.msra.mxu0 %v4350
    %6219 = vmatprep.mubr.bf16.mxu0 %v1145
    %6220 = vmatmul.mubr.bf16.gmra.mxu0 %v1144
    %v6221 = vpop.f32.mrf.mxu0
    %v6222 = vadd.f32 %v6179, %v6221
    %v6223 = vpop.f32.mrf.mxu0
    %v6224 = vadd.f32 %v6181, %v6223
    %v6225 = vpop.f32.mrf.mxu0
    %v6226 = vadd.f32 %v6183, %v6225
    %v6227 = vpop.f32.mrf.mxu0
    %v6228 = vadd.f32 %v6185, %v6227
    %6229 = vdwg.mxu0
    %6230 = vmatprep.subr.bf16.mxu0 %v4381
    %6231 = vmatpush1.bf16.msra.mxu0 %v4380
    %6232 = vmatprep.subr.bf16.mxu0 %v4379
    %6233 = vmatpush1.bf16.msra.mxu0 %v4378
    %6234 = vmatprep.subr.bf16.mxu0 %v4377
    %6235 = vmatpush1.bf16.msra.mxu0 %v4376
    %6236 = vmatprep.subr.bf16.mxu0 %v4375
    %6237 = vmatpush1.bf16.msra.mxu0 %v4374
    %6238 = vmatprep.subr.bf16.mxu0 %v4373
    %6239 = vmatpush1.bf16.msra.mxu0 %v4372
    %6240 = vmatprep.subr.bf16.mxu0 %v4371
    %6241 = vmatpush1.bf16.msra.mxu0 %v4370
    %6242 = vmatprep.subr.bf16.mxu0 %v4369
    %6243 = vmatpush1.bf16.msra.mxu0 %v4368
    %6244 = vmatprep.subr.bf16.mxu0 %v4367
    %6245 = vmatpush1.bf16.msra.mxu0 %v4366
    %6246 = vmatprep.subr.bf16.mxu0 %v4397
    %6247 = vmatpush2.bf16.msra.mxu0 %v4396
    %6248 = vmatprep.subr.bf16.mxu0 %v4395
    %6249 = vmatpush2.bf16.msra.mxu0 %v4394
    %6250 = vmatprep.subr.bf16.mxu0 %v4393
    %6251 = vmatpush2.bf16.msra.mxu0 %v4392
    %6252 = vmatprep.subr.bf16.mxu0 %v4391
    %6253 = vmatpush2.bf16.msra.mxu0 %v4390
    %6254 = vmatprep.subr.bf16.mxu0 %v4389
    %6255 = vmatpush2.bf16.msra.mxu0 %v4388
    %6256 = vmatprep.subr.bf16.mxu0 %v4387
    %6257 = vmatpush2.bf16.msra.mxu0 %v4386
    %6258 = vmatprep.subr.bf16.mxu0 %v4385
    %6259 = vmatpush2.bf16.msra.mxu0 %v4384
    %6260 = vmatprep.subr.bf16.mxu0 %v4383
    %6261 = vmatpush2.bf16.msra.mxu0 %v4382
    %6262 = vmatprep.mubr.bf16.mxu0 %v1147
    %6263 = vmatmul.mubr.bf16.gmra.mxu0 %v1146
    %v6264 = vpop.f32.mrf.mxu0
    %v6265 = vadd.f32 %v6222, %v6264
    %v6266 = vpop.f32.mrf.mxu0
    %v6267 = vadd.f32 %v6224, %v6266
    %v6268 = vpop.f32.mrf.mxu0
    %v6269 = vadd.f32 %v6226, %v6268
    %v6270 = vpop.f32.mrf.mxu0
    %v6271 = vadd.f32 %v6228, %v6270
    %6272 = vdwg.mxu0
    %v6273 = vpack.c.bf16 %v6269, %v6265
    %v6274 = vpack.c.bf16 %v6271, %v6267
    %v6275 = vld [vmem:[#allocation8] sm:$0xf]
    %v6276 = vld [vmem:[#allocation8 + $0x4] sm:$0xf]
    %v6277 = vld [vmem:[#allocation8 + $0x8] sm:$0xf]
    %v6278 = vld [vmem:[#allocation8 + $0xc] sm:$0xf]
    %v6279 = vld [vmem:[#allocation8 + $0x10] sm:$0xf]
    %v6280 = vld [vmem:[#allocation8 + $0x14] sm:$0xf]
    %v6281 = vld [vmem:[#allocation8 + $0x18] sm:$0xf]
    %v6282 = vld [vmem:[#allocation8 + $0x1c] sm:$0xf]
    %v6283 = vld [vmem:[#allocation8 + $0x20] sm:$0xf]
    %v6284 = vld [vmem:[#allocation8 + $0x24] sm:$0xf]
    %v6285 = vld [vmem:[#allocation8 + $0x28] sm:$0xf]
    %v6286 = vld [vmem:[#allocation8 + $0x2c] sm:$0xf]
    %v6287 = vld [vmem:[#allocation8 + $0x30] sm:$0xf]
    %v6288 = vld [vmem:[#allocation8 + $0x34] sm:$0xf]
    %v6289 = vld [vmem:[#allocation8 + $0x38] sm:$0xf]
    %v6290 = vld [vmem:[#allocation8 + $0x3c] sm:$0xf]
    %v6291 = vld [vmem:[#allocation8 + $0x40] sm:$0xf]
    %v6292 = vld [vmem:[#allocation8 + $0x44] sm:$0xf]
    %v6293 = vld [vmem:[#allocation8 + $0x48] sm:$0xf]
    %v6294 = vld [vmem:[#allocation8 + $0x4c] sm:$0xf]
    %v6295 = vld [vmem:[#allocation8 + $0x50] sm:$0xf]
    %v6296 = vld [vmem:[#allocation8 + $0x54] sm:$0xf]
    %v6297 = vld [vmem:[#allocation8 + $0x58] sm:$0xf]
    %v6298 = vld [vmem:[#allocation8 + $0x5c] sm:$0xf]
    %v6299 = vld [vmem:[#allocation8 + $0x60] sm:$0xf]
    %v6300 = vld [vmem:[#allocation8 + $0x64] sm:$0xf]
    %v6301 = vld [vmem:[#allocation8 + $0x68] sm:$0xf]
    %v6302 = vld [vmem:[#allocation8 + $0x6c] sm:$0xf]
    %v6303 = vld [vmem:[#allocation8 + $0x70] sm:$0xf]
    %v6304 = vld [vmem:[#allocation8 + $0x74] sm:$0xf]
    %v6305 = vld [vmem:[#allocation8 + $0x78] sm:$0xf]
    %v6306 = vld [vmem:[#allocation8 + $0x7c] sm:$0xf]
    %v6307 = vld [vmem:[#allocation10] sm:$0x1]
    %v6309 = vlaneseq
    %v6310 = vshrl.u32 %v6309, 7
    %v6311 = vsub.s32 0, %v6310
    %v6312 = vrot.slane %v6307, %v6311
    %v6346 = vunpack.c.l.b16 %v6275
    %v6347 = vunpack.c.l.b16 %v6276
    %v6348 = vunpack.c.l.b16 %v6277
    %v6349 = vunpack.c.l.b16 %v6278
    %v6350 = vunpack.c.l.b16 %v6279
    %v6351 = vunpack.c.l.b16 %v6280
    %v6352 = vunpack.c.l.b16 %v6281
    %v6353 = vunpack.c.l.b16 %v6282
    %v6354 = vunpack.c.l.b16 %v6283
    %v6355 = vunpack.c.l.b16 %v6284
    %v6356 = vunpack.c.l.b16 %v6285
    %v6357 = vunpack.c.l.b16 %v6286
    %v6358 = vunpack.c.l.b16 %v6287
    %v6359 = vunpack.c.l.b16 %v6288
    %v6360 = vunpack.c.l.b16 %v6289
    %v6361 = vunpack.c.l.b16 %v6290
    %v6362 = vunpack.c.l.b16 %v6291
    %v6363 = vunpack.c.l.b16 %v6292
    %v6364 = vunpack.c.l.b16 %v6293
    %v6365 = vunpack.c.l.b16 %v6294
    %v6366 = vunpack.c.l.b16 %v6295
    %v6367 = vunpack.c.l.b16 %v6296
    %v6368 = vunpack.c.l.b16 %v6297
    %v6369 = vunpack.c.l.b16 %v6298
    %v6370 = vunpack.c.l.b16 %v6299
    %v6371 = vunpack.c.l.b16 %v6300
    %v6372 = vunpack.c.l.b16 %v6301
    %v6373 = vunpack.c.l.b16 %v6302
    %v6374 = vunpack.c.l.b16 %v6303
    %v6375 = vunpack.c.l.b16 %v6304
    %v6376 = vunpack.c.l.b16 %v6305
    %v6377 = vunpack.c.l.b16 %v6306
    %v6378 = vpack.c.b16 %v6347, %v6346
    %v6379 = vpack.c.b16 %v6349, %v6348
    %v6380 = vpack.c.b16 %v6351, %v6350
    %v6381 = vpack.c.b16 %v6353, %v6352
    %v6382 = vpack.c.b16 %v6355, %v6354
    %v6383 = vpack.c.b16 %v6357, %v6356
    %v6384 = vpack.c.b16 %v6359, %v6358
    %v6385 = vpack.c.b16 %v6361, %v6360
    %v6386 = vpack.c.b16 %v6363, %v6362
    %v6387 = vpack.c.b16 %v6365, %v6364
    %v6388 = vpack.c.b16 %v6367, %v6366
    %v6389 = vpack.c.b16 %v6369, %v6368
    %v6390 = vpack.c.b16 %v6371, %v6370
    %v6391 = vpack.c.b16 %v6373, %v6372
    %v6392 = vpack.c.b16 %v6375, %v6374
    %v6393 = vpack.c.b16 %v6377, %v6376
    %6410 = vmatprep.subr.bf16.mxu0 0
    %6411 = vmatpush1.bf16.msra.mxu0 %v6385
    %6412 = vmatprep.subr.bf16.mxu0 0
    %6413 = vmatpush1.bf16.msra.mxu0 %v6384
    %6414 = vmatprep.subr.bf16.mxu0 0
    %6415 = vmatpush1.bf16.msra.mxu0 %v6383
    %6416 = vmatprep.subr.bf16.mxu0 0
    %6417 = vmatpush1.bf16.msra.mxu0 %v6382
    %6418 = vmatprep.subr.bf16.mxu0 0
    %6419 = vmatpush1.bf16.msra.mxu0 %v6381
    %6420 = vmatprep.subr.bf16.mxu0 0
    %6421 = vmatpush1.bf16.msra.mxu0 %v6380
    %6422 = vmatprep.subr.bf16.mxu0 0
    %6423 = vmatpush1.bf16.msra.mxu0 %v6379
    %6424 = vmatprep.subr.bf16.mxu0 0
    %6425 = vmatpush1.bf16.msra.mxu0 %v6378
    %6426 = vmatprep.subr.bf16.mxu0 0
    %6427 = vmatpush2.bf16.msra.mxu0 %v6393
    %6428 = vmatprep.subr.bf16.mxu0 0
    %6429 = vmatpush2.bf16.msra.mxu0 %v6392
    %6430 = vmatprep.subr.bf16.mxu0 0
    %6431 = vmatpush2.bf16.msra.mxu0 %v6391
    %6432 = vmatprep.subr.bf16.mxu0 0
    %6433 = vmatpush2.bf16.msra.mxu0 %v6390
    %6434 = vmatprep.subr.bf16.mxu0 0
    %6435 = vmatpush2.bf16.msra.mxu0 %v6389
    %6436 = vmatprep.subr.bf16.mxu0 0
    %6437 = vmatpush2.bf16.msra.mxu0 %v6388
    %6438 = vmatprep.subr.bf16.mxu0 0
    %6439 = vmatpush2.bf16.msra.mxu0 %v6387
    %6440 = vmatprep.subr.bf16.mxu0 0
    %6441 = vmatpush2.bf16.msra.mxu0 %v6386
    %6442 = vmatprep.mubr.bf16.mxu0 %v6274
    %6443 = vmatmul.mubr.bf16.gmra.mxu0 %v6273
    %v6444 = vpop.f32.mrf.mxu0
    %v6445 = vadd.f32 %v6312, %v6444
    %v6446 = vpop.f32.mrf.mxu0
    %v6447 = vpop.f32.mrf.mxu0
    %v6448 = vadd.f32 %v6312, %v6447
    %v6449 = vpop.f32.mrf.mxu0
    %6450 = vdwg.mxu0
    %vm6451 = vcmask 48128
    %v6452 = vsel %vm6451, %v6445, -inf
    %6453 = vmax.xlane.f32.xlu0 %v6452
    %v6454 = vpop.xlane.xlu0 %6453
    %v6455 = vsel %vm6451, %v6448, -inf
    %6456 = vmax.xlane.f32.xlu0 %v6455
    %v6457 = vpop.xlane.xlu0 %6456
    %v6458 = vsub.f32 %v6445, %v6454
    %v6459 = vsub.f32 %v6448, %v6457
    %v6460 = vmul.f32 %v6458, 1.442695
    %v6461 = vpow.pop %v6460
    %v6462 = vmul.f32 %v6459, 1.442695
    %v6463 = vpow.pop %v6462
    %v6464 = vsel %vm6451, %v6461, 0.0
    %6465 = vadd.xlane.f32.xlu0 %v6464
    %v6466 = vpop.xlane.xlu0 %6465
    %v6467 = vsel %vm6451, %v6463, 0.0
    %6468 = vadd.xlane.f32.xlu0 %v6467
    %v6469 = vpop.xlane.xlu0 %6468
    %v6470 = vlog2.pop %v6466
    %v6471 = vmul.f32 %v6470, 0.6931472
    %v6472 = vlog2.pop %v6469
    %v6473 = vmul.f32 %v6472, 0.6931472
    %v6474 = vadd.f32 %v6454, %v6471
    %v6475 = vadd.f32 %v6457, %v6473
    %6476 = vst [vmem:[#allocation11] sm:$0xff] %v6445
    %6477 = vst [vmem:[#allocation11 + $0x8] sm:$0xff] %v6448
    %v6478 = vsub.f32 %v6445, %v6474
    %v6479 = vsub.f32 %v6448, %v6475
    %6482 = vrot.lane.b32.xlu0 %v6478, 8
    %v6483 = vpop.permute.xlu0 %6482
    %6484 = vrot.lane.b32.xlu0 %v6479, 8
    %v6485 = vpop.permute.xlu0 %6484
    %vm6488 = vcmask 113728
    %6489 = vst.msk [vmem:[#allocation11] sm:$0xff] %vm6488, %v6483
    %6490 = vst.msk [vmem:[#allocation11 + $0x8] sm:$0xff] %vm6488, %v6485
    // Predicated region
    $region42: #{tpu_custom_call.1} parent=1 // pred_check
      _
    $region43: #{tpu_custom_call.1} parent=1 // pred_check_branch
      %6492 = sbr.rel (0) target = $region45
    $region44: #{tpu_custom_call.1} parent=1 // pred_region
      %s6494 = ssub.s32 256, 256
      %6495 = vsyncadd [#allocation4], %s6494
      %s6496 = sshll.u32 [#allocation11], 4
      %s6497 = int_to_ptr.vmem [resolvable:$true] %s6496
      %6502 = dma.vmem_to_hbm [thread:$0]  %s6497, 256, %s5, [#allocation4], 128, 128, 8
    $region45: #{tpu_custom_call.1} parent=1 // pred_fallthru
      _
    // Predicated region
    $region46: #{tpu_custom_call.1} parent=1 // pred_check
      _
    $region47: #{tpu_custom_call.1} parent=1 // pred_check_branch
      %6504 = sbr.rel (0) target = $region49
    $region48: #{tpu_custom_call.1} parent=1 // pred_region
      %6505 = dma.done [#allocation4], 256
    $region49: #{tpu_custom_call.1} parent=1 // pred_fallthru
      _
    %6506 = vsyncpa [#allocation3], 1
    %6507 = vsyncpa [#allocation6], 1
    %6508 = vsyncpa [#allocation9], 1
    %6509 = vsyncpa [#allocation4], 1

</llo_original>
